<compile_context>
chip_gen: v5e
topology: v5e:2x2
jax: 0.10.0
libtpu: 0.0.40
codegen_flags: <defaults>
</compile_context>

<pallas_src>
import jax
import jax.numpy as jnp
from jax import lax
from jax.experimental import pallas as pl
from jax.experimental.pallas import tpu as pltpu

# ------------------------- config constants -------------------------
D_IN = 300          # passage / query feature width
D_INNER = 512       # attention FFN hidden (hard-coded 512 in the torch module)
D0 = 32             # CNN.denseUnit[0]
D1 = 16             # CNN.denseUnit[1]
QS0, QS1 = 64, 48   # Query_Sequential
CONV_F = 8          # DocCNN conv filters (stand-in)
CONV_K = 3          # DocCNN conv kernel size (stand-in)
LN_EPS = 1e-5
# torch: scores / cnn_dense_unit_[0] ** 0.5  == / sqrt(32)  (intentional parity with
# the module, which scales by denseUnit[0], not by the key dimension).
ATTN_SCALE = 1.0 / (D0 ** 0.5)
NEG_INF = -1e30     # finite additive-mask value; exp() underflows to exactly 0

VMEM_PARAMS = ("attn_w1", "attn_b1", "attn_w2", "attn_b2", "ln_g", "ln_b",
               "doc_wd", "doc_bd",
               "q_w1", "q_b1", "q_w2", "q_b2", "q_w3", "q_b3",
               "f_w1", "f_b1", "f_w2")
SMEM_PARAMS = ("doc_wc", "doc_bc", "f_b2")
BF16_PARAMS = frozenset({"attn_w1", "attn_w2", "q_w1", "q_w2", "q_w3", "f_w1"})


def _layernorm(x, gamma, beta):
    mu = jnp.mean(x, axis=-1, keepdims=True)
    var = jnp.mean((x - mu) ** 2, axis=-1, keepdims=True)
    return (x - mu) * lax.rsqrt(var + LN_EPS) * gamma + beta


def _rep_spec(shape):
    """Full-array block, constant index (weight resident across the whole grid)."""
    nd = len(shape)
    return pl.BlockSpec(shape, lambda g, _n=nd: (0,) * _n)


def _pick_bblk(batch, passages, target_rows=256, max_groups=64):
    """Largest Bblk dividing batch with Bblk*P <= target_rows and grid length >= 2."""
    best = 1
    for cand in range(1, batch + 1):
        if batch % cand:
            continue
        if cand > max_groups:
            continue
        if cand > 1 and cand * passages > target_rows:
            continue
        if batch >= 2 and batch // cand < 2:
            continue   # keep >= 2 grid steps so v7x's two TensorCores both get work
        best = cand
    return best


# ------------------- fused kernel (one grid step == Bblk batch elements) -------------
def fused_kernel(q_ref, p_ref, grow_ref, gcol_ref,
                 aw1, ab1, aw2, ab2, g_ref, be_ref,
                 dwd, dbd,
                 qw1, qb1, qw2, qb2, qw3, qb3,
                 fw1, fb1, fw2,
                 dwc, dbc, fb2,
                 o_ref):
    x = p_ref[0]                       # (N, 300) f32, N = Bblk * P rows
    n = x.shape[0]
    g = g_ref[...]                     # (1, 300)
    be = be_ref[...]                   # (1, 300)

    # ---- self-attention, exact per batch element via block-diagonal masking ----
    s = lax.dot_general(x, x, (((1,), (1,)), ((), ())),
                        preferred_element_type=jnp.float32) * ATTN_SCALE      # (N, N)
    same = gcol_ref[0] == grow_ref[0]            # (N,1) vs (1,N) -> (N,N) group mask
    s = jnp.where(same, s, NEG_INF)
    s = s - jnp.max(s, axis=-1, keepdims=True)
    e = jnp.exp(s)
    # approx reciprocal (EUP slot): ~2^-12 relative error vs the PyTorch reference.
    attn = e * pl.reciprocal(jnp.sum(e, axis=-1, keepdims=True), approx=True)
    # result = attn^T @ x (contract sublane axis; block-diag mask keeps groups apart)
    res = lax.dot_general(attn, x, (((0,), (0,)), ((), ())),
                          preferred_element_type=jnp.float32)                 # (N, 300)
    y = _layernorm(x + res, g, be)

    # ---- position-wise FFN (1x1 convs): bf16 operands, f32 accumulation ----
    h = jnp.maximum(
        jnp.dot(y.astype(jnp.bfloat16), aw1[...],
                preferred_element_type=jnp.float32) + ab1[...], 0.0)          # (N, 512)
    o = jnp.dot(h.astype(jnp.bfloat16), aw2[...],
                preferred_element_type=jnp.float32) + ab2[...]                # (N, 300)
    # TODO(synk): nn.Dropout() is constructed fresh in forward (train mode, stochastic);
    # modelled as identity.
    pz = _layernorm(x + o, g, be)                                             # (N, 300)

    # ---- DocCNN stand-in: Conv1d(1,F,K) -> ReLU -> global max pool -> Linear(F, D0) ----
    # TODO(synk): DocCNN source not provided; shape-correct stand-in.
    L = D_IN - CONV_K + 1
    planes = tuple(pz[:, j:j + L] for j in range(CONV_K))   # 3 shifted views, hoisted
    doc = jnp.zeros((n, D0), jnp.float32) + dbd[...]                          # (N, D0)
    for f in range(CONV_F):            # static unroll over 8 filters
        acc = planes[0] * dwc[f, 0]                       # SMEM scalar * (N, L)
        for j in range(1, CONV_K):
            acc = acc + planes[j] * dwc[f, j]
        acc = jnp.maximum(acc + dbc[0, f], 0.0)
        col = jnp.max(acc, axis=-1, keepdims=True)                            # (N, 1)
        doc = doc + col * dwd[f:f + 1, :]                                     # outer prod

    # ---- query coder (rows pre-broadcast to one row per passage in the wrapper) ----
    q = q_ref[0]                       # (N, 300)
    qh = jnp.maximum(
        jnp.dot(q.astype(jnp.bfloat16), qw1[...],
                preferred_element_type=jnp.float32) + qb1[...], 0.0)
    qh = jnp.maximum(
        jnp.dot(qh.astype(jnp.bfloat16), qw2[...],
                preferred_element_type=jnp.float32) + qb2[...], 0.0)
    qc = jax.nn.sigmoid(
        jnp.dot(qh.astype(jnp.bfloat16), qw3[...],
                preferred_element_type=jnp.float32) + qb3[...])               # (N, D0)

    # ---- cat_qp == 'diff' + final layers (2CNN == False) ----
    diff = qc - doc                                                           # (N, D0)
    fh = jnp.maximum(
        jnp.dot(diff.astype(jnp.bfloat16), fw1[...],
                preferred_element_type=jnp.float32) + fb1[...], 0.0)          # (N, D1)
    # final weight stored as a (1, D1) row -> NT contraction gives a lane-dense (1, N) row
    z = lax.dot_general(fw2[...], fh, (((1,), (1,)), ((), ())),
                        preferred_element_type=jnp.float32)                   # (1, N)
    o_ref[0] = jax.nn.sigmoid(z + fb2[0, 0])


# ------------------------- full forward -------------------------
@jax.jit
def pytorch_cnn_forward(query, passage, params):
    B, P, D = passage.shape
    bblk = _pick_bblk(B, P)
    grid_n = B // bblk
    n = bblk * P

    # Fold (B, P, D) -> (grid_n, N, D): grid axis leading, so the last two block dims
    # always equal the array dims (no in-kernel reshapes, no (8,128) constraints).
    passage_rows = passage.reshape(grid_n, n, D)
    # Query broadcast to one row per passage row: the row-wise coder then runs fully
    # batched on the same (N, 300) tile.
    query_rows = jnp.broadcast_to(query[:, None, :], (B, P, D)).reshape(grid_n, n, D)
    # Per-row batch-group ids (row + column orientation) for the block-diagonal mask.
    gid = jnp.arange(B * P, dtype=jnp.int32) // P
    gid_row = gid.reshape(grid_n, 1, n)
    gid_col = gid.reshape(grid_n, n, 1)

    weights = [params[k].astype(jnp.bfloat16) if k in BF16_PARAMS else params[k]
               for k in VMEM_PARAMS]
    smem_args = [params[k] for k in SMEM_PARAMS]

    row_spec = pl.BlockSpec((1, n, D), lambda g: (g, 0, 0))
    out = pl.pallas_call(
        fused_kernel,
        out_shape=jax.ShapeDtypeStruct((grid_n, 1, n), jnp.float32),
        grid=(grid_n,),
        in_specs=[
            row_spec,                                        # query rows
            row_spec,                                        # passage rows
            pl.BlockSpec((1, 1, n), lambda g: (g, 0, 0)),    # group ids (row)
            pl.BlockSpec((1, n, 1), lambda g: (g, 0, 0)),    # group ids (col)
            *[_rep_spec(params[k].shape) for k in VMEM_PARAMS],
            *[pl.BlockSpec(memory_space=pltpu.MemorySpace.SMEM) for _ in SMEM_PARAMS],
        ],
        out_specs=pl.BlockSpec((1, 1, n), lambda g: (g, 0, 0)),
        compiler_params=pltpu.CompilerParams(
            dimension_semantics=("parallel",),               # shards groups over TCs
            vmem_limit_bytes=32 * 1024 * 1024),
    )(query_rows, passage_rows, gid_row, gid_col, *weights, *smem_args)
    return out.reshape(B, P)


# ------------------------- deterministic parameter init -------------------------
def init_params(key):
    ks = jax.random.split(key, 16)
    n = lambda k, shape, s=0.05: s * jax.random.normal(k, shape, jnp.float32)
    return {
        # attention FFN (w_1: Conv1d(300,512,1), w_2: Conv1d(512,300,1)) + LayerNorm(300)
        "attn_w1": n(ks[0], (D_IN, D_INNER)),
        "attn_b1": n(ks[1], (1, D_INNER)),
        "attn_w2": n(ks[2], (D_INNER, D_IN)),
        "attn_b2": n(ks[3], (1, D_IN)),
        "ln_g": jnp.ones((1, D_IN), jnp.float32),
        "ln_b": jnp.zeros((1, D_IN), jnp.float32),
        # DocCNN stand-in (conv weights/bias read as SMEM scalars in the kernel)
        "doc_wc": n(ks[4], (CONV_F, CONV_K)),
        "doc_bc": n(ks[5], (1, CONV_F)),
        "doc_wd": n(ks[6], (CONV_F, D0)),
        "doc_bd": n(ks[7], (1, D0)),
        # query_coder
        "q_w1": n(ks[8], (D_IN, QS0)),
        "q_b1": n(ks[9], (1, QS0)),
        "q_w2": n(ks[10], (QS0, QS1)),
        "q_b2": n(ks[11], (1, QS1)),
        "q_w3": n(ks[12], (QS1, D0)),
        "q_b3": n(ks[13], (1, D0)),
        # final_layers (f_w2 kept as a (1, D1) row so the last matmul is lane-dense NT)
        "f_w1": n(ks[14], (D0, D1)),
        "f_b1": jnp.zeros((1, D1), jnp.float32),
        "f_w2": n(ks[15], (1, D1)),
        "f_b2": jnp.zeros((1, 1), jnp.float32),
    }


if __name__ == "__main__":
    key = jax.random.PRNGKey(0)
    kp, kq, kw = jax.random.split(key, 3)
    B, P = 8, 4          # small demo shapes; picker gives Bblk=4 -> grid=(2,), N=16
    passage = jax.random.normal(kp, (B, P, D_IN), jnp.float32)
    query = jax.random.normal(kq, (B, D_IN), jnp.float32)
    params = init_params(kw)

    out = pytorch_cnn_forward(query, passage, params)
    out = jax.block_until_ready(out)
    assert out.shape == (B, P), out.shape
    assert bool(jnp.all(jnp.isfinite(out)))
    print("KERNEL_OK")
</pallas_src>

<mosaic_0001>
module attributes {stable_mosaic.version = 11 : i64} {
  func.func @fused_kernel(%arg0: i32, %arg1: memref<1x16x300xf32, #tpu.memory_space<vmem>>, %arg2: memref<1x16x300xf32, #tpu.memory_space<vmem>>, %arg3: memref<1x1x16xi32, #tpu.memory_space<vmem>>, %arg4: memref<1x16x1xi32, #tpu.memory_space<vmem>>, %arg5: memref<300x512xbf16, #tpu.memory_space<vmem>>, %arg6: memref<1x512xf32, #tpu.memory_space<vmem>>, %arg7: memref<512x300xbf16, #tpu.memory_space<vmem>>, %arg8: memref<1x300xf32, #tpu.memory_space<vmem>>, %arg9: memref<1x300xf32, #tpu.memory_space<vmem>>, %arg10: memref<1x300xf32, #tpu.memory_space<vmem>>, %arg11: memref<8x32xf32, #tpu.memory_space<vmem>>, %arg12: memref<1x32xf32, #tpu.memory_space<vmem>>, %arg13: memref<300x64xbf16, #tpu.memory_space<vmem>>, %arg14: memref<1x64xf32, #tpu.memory_space<vmem>>, %arg15: memref<64x48xbf16, #tpu.memory_space<vmem>>, %arg16: memref<1x48xf32, #tpu.memory_space<vmem>>, %arg17: memref<48x32xbf16, #tpu.memory_space<vmem>>, %arg18: memref<1x32xf32, #tpu.memory_space<vmem>>, %arg19: memref<32x16xbf16, #tpu.memory_space<vmem>>, %arg20: memref<1x16xf32, #tpu.memory_space<vmem>>, %arg21: memref<1x16xf32, #tpu.memory_space<vmem>>, %arg22: memref<8x3xf32, #tpu.memory_space<smem>>, %arg23: memref<1x8xf32, #tpu.memory_space<smem>>, %arg24: memref<1x1xf32, #tpu.memory_space<smem>>, %arg25: memref<1x1x16xf32, #tpu.memory_space<vmem>>) attributes {dimension_semantics = [#tpu.dimension_semantics<parallel>], iteration_bounds = array<i64: 2>, scalar_prefetch = 0 : i64, scratch_operands = 0 : i64, tpu.core_type = #tpu.core_type<tc>, window_params = [{transform_indices = @transform_0, window_bounds = array<i64: 1, 16, 300>}, {transform_indices = @transform_1, window_bounds = array<i64: 1, 16, 300>}, {transform_indices = @transform_2, window_bounds = array<i64: 1, 1, 16>}, {transform_indices = @transform_3, window_bounds = array<i64: 1, 16, 1>}, {pipeline_mode = #tpu.pipeline_mode<synchronous>, transform_indices = @transform_4, window_bounds = array<i64: 300, 512>}, {pipeline_mode = #tpu.pipeline_mode<synchronous>, transform_indices = @transform_5, window_bounds = array<i64: 1, 512>}, {pipeline_mode = #tpu.pipeline_mode<synchronous>, transform_indices = @transform_6, window_bounds = array<i64: 512, 300>}, {pipeline_mode = #tpu.pipeline_mode<synchronous>, transform_indices = @transform_7, window_bounds = array<i64: 1, 300>}, {pipeline_mode = #tpu.pipeline_mode<synchronous>, transform_indices = @transform_8, window_bounds = array<i64: 1, 300>}, {pipeline_mode = #tpu.pipeline_mode<synchronous>, transform_indices = @transform_9, window_bounds = array<i64: 1, 300>}, {pipeline_mode = #tpu.pipeline_mode<synchronous>, transform_indices = @transform_10, window_bounds = array<i64: 8, 32>}, {pipeline_mode = #tpu.pipeline_mode<synchronous>, transform_indices = @transform_11, window_bounds = array<i64: 1, 32>}, {pipeline_mode = #tpu.pipeline_mode<synchronous>, transform_indices = @transform_12, window_bounds = array<i64: 300, 64>}, {pipeline_mode = #tpu.pipeline_mode<synchronous>, transform_indices = @transform_13, window_bounds = array<i64: 1, 64>}, {pipeline_mode = #tpu.pipeline_mode<synchronous>, transform_indices = @transform_14, window_bounds = array<i64: 64, 48>}, {pipeline_mode = #tpu.pipeline_mode<synchronous>, transform_indices = @transform_15, window_bounds = array<i64: 1, 48>}, {pipeline_mode = #tpu.pipeline_mode<synchronous>, transform_indices = @transform_16, window_bounds = array<i64: 48, 32>}, {pipeline_mode = #tpu.pipeline_mode<synchronous>, transform_indices = @transform_17, window_bounds = array<i64: 1, 32>}, {pipeline_mode = #tpu.pipeline_mode<synchronous>, transform_indices = @transform_18, window_bounds = array<i64: 32, 16>}, {pipeline_mode = #tpu.pipeline_mode<synchronous>, transform_indices = @transform_19, window_bounds = array<i64: 1, 16>}, {pipeline_mode = #tpu.pipeline_mode<synchronous>, transform_indices = @transform_20, window_bounds = array<i64: 1, 16>}, {transform_indices = @transform_21, window_bounds = array<i64: 8, 3>}, {transform_indices = @transform_22, window_bounds = array<i64: 1, 8>}, {transform_indices = @transform_23, window_bounds = array<i64: 1, 1>}, {transform_indices = @transform_24, window_bounds = array<i64: 1, 1, 16>}]} {
    %c0 = arith.constant 0 : index
    %c0_0 = arith.constant 0 : index
    %c0_1 = arith.constant 0 : index
    %0 = vector.load %arg2[%c0, %c0_0, %c0_1] : memref<1x16x300xf32, #tpu.memory_space<vmem>>, vector<1x16x300xf32>
    %1 = vector.shape_cast %0 : vector<1x16x300xf32> to vector<16x300xf32>
    %c0_2 = arith.constant 0 : index
    %c0_3 = arith.constant 0 : index
    %2 = vector.load %arg9[%c0_2, %c0_3] : memref<1x300xf32, #tpu.memory_space<vmem>>, vector<1x300xf32>
    %c0_4 = arith.constant 0 : index
    %c0_5 = arith.constant 0 : index
    %3 = vector.load %arg10[%c0_4, %c0_5] : memref<1x300xf32, #tpu.memory_space<vmem>>, vector<1x300xf32>
    %cst = arith.constant dense<0.000000e+00> : vector<16x16xf32>
    %4 = tpu.matmul %1, %1, %cst {dimension_numbers = #tpu.dot_dimension_numbers<[1], [1], [0], [0], [0, 0, 1, 0], [], []>} : vector<16x300xf32>, vector<16x300xf32>, vector<16x16xf32> -> vector<16x16xf32>
    %cst_6 = arith.constant 0.176776692 : f32
    %5 = vector.broadcast %cst_6 : f32 to vector<16x16xf32>
    %6 = arith.mulf %4, %5 : vector<16x16xf32>
    %c0_7 = arith.constant 0 : index
    %c0_8 = arith.constant 0 : index
    %c0_9 = arith.constant 0 : index
    %7 = vector.load %arg4[%c0_7, %c0_8, %c0_9] : memref<1x16x1xi32, #tpu.memory_space<vmem>>, vector<1x16x1xi32>
    %8 = vector.shape_cast %7 : vector<1x16x1xi32> to vector<16x1xi32>
    %c0_10 = arith.constant 0 : index
    %c0_11 = arith.constant 0 : index
    %c0_12 = arith.constant 0 : index
    %9 = vector.load %arg3[%c0_10, %c0_11, %c0_12] : memref<1x1x16xi32, #tpu.memory_space<vmem>>, vector<1x1x16xi32>
    %10 = vector.shape_cast %9 : vector<1x1x16xi32> to vector<1x16xi32>
    %11 = vector.broadcast %8 : vector<16x1xi32> to vector<16x16xi32>
    %12 = vector.broadcast %10 : vector<1x16xi32> to vector<16x16xi32>
    %13 = arith.cmpi eq, %11, %12 : vector<16x16xi32>
    %cst_13 = arith.constant -1.000000e+30 : f32
    %14 = vector.broadcast %cst_13 : f32 to vector<16x16xf32>
    %15 = arith.select %13, %6, %14 : vector<16x16xi1>, vector<16x16xf32>
    %cst_14 = arith.constant dense<0xFF800000> : vector<16xf32>
    %16 = vector.multi_reduction <maximumf>, %15, %cst_14 [1] : vector<16x16xf32> to vector<16xf32>
    %17 = vector.shape_cast %16 : vector<16xf32> to vector<16x1xf32>
    %18 = vector.broadcast %17 : vector<16x1xf32> to vector<16x16xf32>
    %19 = arith.subf %15, %18 : vector<16x16xf32>
    %20 = math.exp %19 : vector<16x16xf32>
    %cst_15 = arith.constant dense<0.000000e+00> : vector<16xf32>
    %21 = vector.multi_reduction <add>, %20, %cst_15 [1] : vector<16x16xf32> to vector<16xf32>
    %22 = vector.shape_cast %21 : vector<16xf32> to vector<16x1xf32>
    %23 = tpu.reciprocal %22 {approx = true} : vector<16x1xf32> -> vector<16x1xf32>
    %24 = vector.broadcast %23 : vector<16x1xf32> to vector<16x16xf32>
    %25 = arith.mulf %20, %24 : vector<16x16xf32>
    %cst_16 = arith.constant dense<0.000000e+00> : vector<16x300xf32>
    %26 = tpu.matmul %25, %1, %cst_16 {dimension_numbers = #tpu.dot_dimension_numbers<[0], [0], [1], [1], [0, 1, 1, 1], [], []>} : vector<16x16xf32>, vector<16x300xf32>, vector<16x300xf32> -> vector<16x300xf32>
    %27 = arith.addf %1, %26 : vector<16x300xf32>
    %cst_17 = arith.constant dense<0.000000e+00> : vector<16xf32>
    %28 = vector.multi_reduction <add>, %27, %cst_17 [1] : vector<16x300xf32> to vector<16xf32>
    %29 = vector.shape_cast %28 : vector<16xf32> to vector<16x1xf32>
    %cst_18 = arith.constant 3.000000e+02 : f32
    %30 = vector.broadcast %cst_18 : f32 to vector<16x1xf32>
    %31 = arith.divf %29, %30 : vector<16x1xf32>
    %32 = vector.broadcast %31 : vector<16x1xf32> to vector<16x300xf32>
    %33 = arith.subf %27, %32 : vector<16x300xf32>
    %34 = arith.mulf %33, %33 : vector<16x300xf32>
    %cst_19 = arith.constant dense<0.000000e+00> : vector<16xf32>
    %35 = vector.multi_reduction <add>, %34, %cst_19 [1] : vector<16x300xf32> to vector<16xf32>
    %36 = vector.shape_cast %35 : vector<16xf32> to vector<16x1xf32>
    %cst_20 = arith.constant 3.000000e+02 : f32
    %37 = vector.broadcast %cst_20 : f32 to vector<16x1xf32>
    %38 = arith.divf %36, %37 : vector<16x1xf32>
    %39 = vector.broadcast %31 : vector<16x1xf32> to vector<16x300xf32>
    %40 = arith.subf %27, %39 : vector<16x300xf32>
    %cst_21 = arith.constant 9.99999974E-6 : f32
    %41 = vector.broadcast %cst_21 : f32 to vector<16x1xf32>
    %42 = arith.addf %38, %41 : vector<16x1xf32>
    %43 = math.rsqrt %42 : vector<16x1xf32>
    %44 = vector.broadcast %43 : vector<16x1xf32> to vector<16x300xf32>
    %45 = arith.mulf %40, %44 : vector<16x300xf32>
    %46 = vector.broadcast %2 : vector<1x300xf32> to vector<16x300xf32>
    %47 = arith.mulf %45, %46 : vector<16x300xf32>
    %48 = vector.broadcast %3 : vector<1x300xf32> to vector<16x300xf32>
    %49 = arith.addf %47, %48 : vector<16x300xf32>
    %50 = arith.truncf %49 : vector<16x300xf32> to vector<16x300xbf16>
    %c0_22 = arith.constant 0 : index
    %c0_23 = arith.constant 0 : index
    %51 = vector.load %arg5[%c0_22, %c0_23] : memref<300x512xbf16, #tpu.memory_space<vmem>>, vector<300x512xbf16>
    %cst_24 = arith.constant dense<0.000000e+00> : vector<16x512xf32>
    %52 = tpu.matmul %50, %51, %cst_24 {dimension_numbers = #tpu.dot_dimension_numbers<[1], [0], [0], [1], [0, 0, 1, 1], [], []>} : vector<16x300xbf16>, vector<300x512xbf16>, vector<16x512xf32> -> vector<16x512xf32>
    %c0_25 = arith.constant 0 : index
    %c0_26 = arith.constant 0 : index
    %53 = vector.load %arg6[%c0_25, %c0_26] : memref<1x512xf32, #tpu.memory_space<vmem>>, vector<1x512xf32>
    %54 = vector.broadcast %53 : vector<1x512xf32> to vector<16x512xf32>
    %55 = arith.addf %52, %54 : vector<16x512xf32>
    %cst_27 = arith.constant 0.000000e+00 : f32
    %56 = vector.broadcast %cst_27 : f32 to vector<16x512xf32>
    %57 = arith.maximumf %55, %56 : vector<16x512xf32>
    %58 = arith.truncf %57 : vector<16x512xf32> to vector<16x512xbf16>
    %c0_28 = arith.constant 0 : index
    %c0_29 = arith.constant 0 : index
    %59 = vector.load %arg7[%c0_28, %c0_29] : memref<512x300xbf16, #tpu.memory_space<vmem>>, vector<512x300xbf16>
    %cst_30 = arith.constant dense<0.000000e+00> : vector<16x300xf32>
    %60 = tpu.matmul %58, %59, %cst_30 {dimension_numbers = #tpu.dot_dimension_numbers<[1], [0], [0], [1], [0, 0, 1, 1], [], []>} : vector<16x512xbf16>, vector<512x300xbf16>, vector<16x300xf32> -> vector<16x300xf32>
    %c0_31 = arith.constant 0 : index
    %c0_32 = arith.constant 0 : index
    %61 = vector.load %arg8[%c0_31, %c0_32] : memref<1x300xf32, #tpu.memory_space<vmem>>, vector<1x300xf32>
    %62 = vector.broadcast %61 : vector<1x300xf32> to vector<16x300xf32>
    %63 = arith.addf %60, %62 : vector<16x300xf32>
    %64 = arith.addf %1, %63 : vector<16x300xf32>
    %cst_33 = arith.constant dense<0.000000e+00> : vector<16xf32>
    %65 = vector.multi_reduction <add>, %64, %cst_33 [1] : vector<16x300xf32> to vector<16xf32>
    %66 = vector.shape_cast %65 : vector<16xf32> to vector<16x1xf32>
    %cst_34 = arith.constant 3.000000e+02 : f32
    %67 = vector.broadcast %cst_34 : f32 to vector<16x1xf32>
    %68 = arith.divf %66, %67 : vector<16x1xf32>
    %69 = vector.broadcast %68 : vector<16x1xf32> to vector<16x300xf32>
    %70 = arith.subf %64, %69 : vector<16x300xf32>
    %71 = arith.mulf %70, %70 : vector<16x300xf32>
    %cst_35 = arith.constant dense<0.000000e+00> : vector<16xf32>
    %72 = vector.multi_reduction <add>, %71, %cst_35 [1] : vector<16x300xf32> to vector<16xf32>
    %73 = vector.shape_cast %72 : vector<16xf32> to vector<16x1xf32>
    %cst_36 = arith.constant 3.000000e+02 : f32
    %74 = vector.broadcast %cst_36 : f32 to vector<16x1xf32>
    %75 = arith.divf %73, %74 : vector<16x1xf32>
    %76 = vector.broadcast %68 : vector<16x1xf32> to vector<16x300xf32>
    %77 = arith.subf %64, %76 : vector<16x300xf32>
    %cst_37 = arith.constant 9.99999974E-6 : f32
    %78 = vector.broadcast %cst_37 : f32 to vector<16x1xf32>
    %79 = arith.addf %75, %78 : vector<16x1xf32>
    %80 = math.rsqrt %79 : vector<16x1xf32>
    %81 = vector.broadcast %80 : vector<16x1xf32> to vector<16x300xf32>
    %82 = arith.mulf %77, %81 : vector<16x300xf32>
    %83 = vector.broadcast %2 : vector<1x300xf32> to vector<16x300xf32>
    %84 = arith.mulf %82, %83 : vector<16x300xf32>
    %85 = vector.broadcast %3 : vector<1x300xf32> to vector<16x300xf32>
    %86 = arith.addf %84, %85 : vector<16x300xf32>
    %87 = vector.extract_strided_slice %86 {offsets = [0, 0], sizes = [16, 298], strides = [1, 1]} : vector<16x300xf32> to vector<16x298xf32>
    %88 = vector.extract_strided_slice %86 {offsets = [0, 1], sizes = [16, 298], strides = [1, 1]} : vector<16x300xf32> to vector<16x298xf32>
    %89 = vector.extract_strided_slice %86 {offsets = [0, 2], sizes = [16, 298], strides = [1, 1]} : vector<16x300xf32> to vector<16x298xf32>
    %cst_38 = arith.constant 0.000000e+00 : f32
    %90 = vector.broadcast %cst_38 : f32 to vector<16x32xf32>
    %c0_39 = arith.constant 0 : index
    %c0_40 = arith.constant 0 : index
    %91 = vector.load %arg12[%c0_39, %c0_40] : memref<1x32xf32, #tpu.memory_space<vmem>>, vector<1x32xf32>
    %92 = vector.broadcast %91 : vector<1x32xf32> to vector<16x32xf32>
    %93 = arith.addf %90, %92 : vector<16x32xf32>
    %c0_41 = arith.constant 0 : index
    %c0_42 = arith.constant 0 : index
    %94 = memref.load %arg22[%c0_41, %c0_42] : memref<8x3xf32, #tpu.memory_space<smem>>
    %95 = vector.broadcast %94 : f32 to vector<16x298xf32>
    %96 = arith.mulf %87, %95 : vector<16x298xf32>
    %c0_43 = arith.constant 0 : index
    %c1 = arith.constant 1 : index
    %97 = memref.load %arg22[%c0_43, %c1] : memref<8x3xf32, #tpu.memory_space<smem>>
    %98 = vector.broadcast %97 : f32 to vector<16x298xf32>
    %99 = arith.mulf %88, %98 : vector<16x298xf32>
    %100 = arith.addf %96, %99 : vector<16x298xf32>
    %c0_44 = arith.constant 0 : index
    %c2 = arith.constant 2 : index
    %101 = memref.load %arg22[%c0_44, %c2] : memref<8x3xf32, #tpu.memory_space<smem>>
    %102 = vector.broadcast %101 : f32 to vector<16x298xf32>
    %103 = arith.mulf %89, %102 : vector<16x298xf32>
    %104 = arith.addf %100, %103 : vector<16x298xf32>
    %c0_45 = arith.constant 0 : index
    %c0_46 = arith.constant 0 : index
    %105 = memref.load %arg23[%c0_45, %c0_46] : memref<1x8xf32, #tpu.memory_space<smem>>
    %106 = vector.broadcast %105 : f32 to vector<16x298xf32>
    %107 = arith.addf %104, %106 : vector<16x298xf32>
    %cst_47 = arith.constant 0.000000e+00 : f32
    %108 = vector.broadcast %cst_47 : f32 to vector<16x298xf32>
    %109 = arith.maximumf %107, %108 : vector<16x298xf32>
    %cst_48 = arith.constant dense<0xFF800000> : vector<16xf32>
    %110 = vector.multi_reduction <maximumf>, %109, %cst_48 [1] : vector<16x298xf32> to vector<16xf32>
    %111 = vector.shape_cast %110 : vector<16xf32> to vector<16x1xf32>
    %c0_49 = arith.constant 0 : index
    %c0_50 = arith.constant 0 : index
    %112 = vector.load %arg11[%c0_49, %c0_50] : memref<8x32xf32, #tpu.memory_space<vmem>>, vector<1x32xf32>
    %113 = vector.broadcast %111 : vector<16x1xf32> to vector<16x32xf32>
    %114 = vector.broadcast %112 : vector<1x32xf32> to vector<16x32xf32>
    %115 = arith.mulf %113, %114 : vector<16x32xf32>
    %116 = arith.addf %93, %115 : vector<16x32xf32>
    %c1_51 = arith.constant 1 : index
    %c0_52 = arith.constant 0 : index
    %117 = memref.load %arg22[%c1_51, %c0_52] : memref<8x3xf32, #tpu.memory_space<smem>>
    %118 = vector.broadcast %117 : f32 to vector<16x298xf32>
    %119 = arith.mulf %87, %118 : vector<16x298xf32>
    %c1_53 = arith.constant 1 : index
    %c1_54 = arith.constant 1 : index
    %120 = memref.load %arg22[%c1_53, %c1_54] : memref<8x3xf32, #tpu.memory_space<smem>>
    %121 = vector.broadcast %120 : f32 to vector<16x298xf32>
    %122 = arith.mulf %88, %121 : vector<16x298xf32>
    %123 = arith.addf %119, %122 : vector<16x298xf32>
    %c1_55 = arith.constant 1 : index
    %c2_56 = arith.constant 2 : index
    %124 = memref.load %arg22[%c1_55, %c2_56] : memref<8x3xf32, #tpu.memory_space<smem>>
    %125 = vector.broadcast %124 : f32 to vector<16x298xf32>
    %126 = arith.mulf %89, %125 : vector<16x298xf32>
    %127 = arith.addf %123, %126 : vector<16x298xf32>
    %c0_57 = arith.constant 0 : index
    %c1_58 = arith.constant 1 : index
    %128 = memref.load %arg23[%c0_57, %c1_58] : memref<1x8xf32, #tpu.memory_space<smem>>
    %129 = vector.broadcast %128 : f32 to vector<16x298xf32>
    %130 = arith.addf %127, %129 : vector<16x298xf32>
    %cst_59 = arith.constant 0.000000e+00 : f32
    %131 = vector.broadcast %cst_59 : f32 to vector<16x298xf32>
    %132 = arith.maximumf %130, %131 : vector<16x298xf32>
    %cst_60 = arith.constant dense<0xFF800000> : vector<16xf32>
    %133 = vector.multi_reduction <maximumf>, %132, %cst_60 [1] : vector<16x298xf32> to vector<16xf32>
    %134 = vector.shape_cast %133 : vector<16xf32> to vector<16x1xf32>
    %c1_61 = arith.constant 1 : index
    %c0_62 = arith.constant 0 : index
    %135 = vector.load %arg11[%c1_61, %c0_62] : memref<8x32xf32, #tpu.memory_space<vmem>>, vector<1x32xf32>
    %136 = vector.broadcast %134 : vector<16x1xf32> to vector<16x32xf32>
    %137 = vector.broadcast %135 : vector<1x32xf32> to vector<16x32xf32>
    %138 = arith.mulf %136, %137 : vector<16x32xf32>
    %139 = arith.addf %116, %138 : vector<16x32xf32>
    %c2_63 = arith.constant 2 : index
    %c0_64 = arith.constant 0 : index
    %140 = memref.load %arg22[%c2_63, %c0_64] : memref<8x3xf32, #tpu.memory_space<smem>>
    %141 = vector.broadcast %140 : f32 to vector<16x298xf32>
    %142 = arith.mulf %87, %141 : vector<16x298xf32>
    %c2_65 = arith.constant 2 : index
    %c1_66 = arith.constant 1 : index
    %143 = memref.load %arg22[%c2_65, %c1_66] : memref<8x3xf32, #tpu.memory_space<smem>>
    %144 = vector.broadcast %143 : f32 to vector<16x298xf32>
    %145 = arith.mulf %88, %144 : vector<16x298xf32>
    %146 = arith.addf %142, %145 : vector<16x298xf32>
    %c2_67 = arith.constant 2 : index
    %c2_68 = arith.constant 2 : index
    %147 = memref.load %arg22[%c2_67, %c2_68] : memref<8x3xf32, #tpu.memory_space<smem>>
    %148 = vector.broadcast %147 : f32 to vector<16x298xf32>
    %149 = arith.mulf %89, %148 : vector<16x298xf32>
    %150 = arith.addf %146, %149 : vector<16x298xf32>
    %c0_69 = arith.constant 0 : index
    %c2_70 = arith.constant 2 : index
    %151 = memref.load %arg23[%c0_69, %c2_70] : memref<1x8xf32, #tpu.memory_space<smem>>
    %152 = vector.broadcast %151 : f32 to vector<16x298xf32>
    %153 = arith.addf %150, %152 : vector<16x298xf32>
    %cst_71 = arith.constant 0.000000e+00 : f32
    %154 = vector.broadcast %cst_71 : f32 to vector<16x298xf32>
    %155 = arith.maximumf %153, %154 : vector<16x298xf32>
    %cst_72 = arith.constant dense<0xFF800000> : vector<16xf32>
    %156 = vector.multi_reduction <maximumf>, %155, %cst_72 [1] : vector<16x298xf32> to vector<16xf32>
    %157 = vector.shape_cast %156 : vector<16xf32> to vector<16x1xf32>
    %c2_73 = arith.constant 2 : index
    %c0_74 = arith.constant 0 : index
    %158 = vector.load %arg11[%c2_73, %c0_74] : memref<8x32xf32, #tpu.memory_space<vmem>>, vector<1x32xf32>
    %159 = vector.broadcast %157 : vector<16x1xf32> to vector<16x32xf32>
    %160 = vector.broadcast %158 : vector<1x32xf32> to vector<16x32xf32>
    %161 = arith.mulf %159, %160 : vector<16x32xf32>
    %162 = arith.addf %139, %161 : vector<16x32xf32>
    %c3 = arith.constant 3 : index
    %c0_75 = arith.constant 0 : index
    %163 = memref.load %arg22[%c3, %c0_75] : memref<8x3xf32, #tpu.memory_space<smem>>
    %164 = vector.broadcast %163 : f32 to vector<16x298xf32>
    %165 = arith.mulf %87, %164 : vector<16x298xf32>
    %c3_76 = arith.constant 3 : index
    %c1_77 = arith.constant 1 : index
    %166 = memref.load %arg22[%c3_76, %c1_77] : memref<8x3xf32, #tpu.memory_space<smem>>
    %167 = vector.broadcast %166 : f32 to vector<16x298xf32>
    %168 = arith.mulf %88, %167 : vector<16x298xf32>
    %169 = arith.addf %165, %168 : vector<16x298xf32>
    %c3_78 = arith.constant 3 : index
    %c2_79 = arith.constant 2 : index
    %170 = memref.load %arg22[%c3_78, %c2_79] : memref<8x3xf32, #tpu.memory_space<smem>>
    %171 = vector.broadcast %170 : f32 to vector<16x298xf32>
    %172 = arith.mulf %89, %171 : vector<16x298xf32>
    %173 = arith.addf %169, %172 : vector<16x298xf32>
    %c0_80 = arith.constant 0 : index
    %c3_81 = arith.constant 3 : index
    %174 = memref.load %arg23[%c0_80, %c3_81] : memref<1x8xf32, #tpu.memory_space<smem>>
    %175 = vector.broadcast %174 : f32 to vector<16x298xf32>
    %176 = arith.addf %173, %175 : vector<16x298xf32>
    %cst_82 = arith.constant 0.000000e+00 : f32
    %177 = vector.broadcast %cst_82 : f32 to vector<16x298xf32>
    %178 = arith.maximumf %176, %177 : vector<16x298xf32>
    %cst_83 = arith.constant dense<0xFF800000> : vector<16xf32>
    %179 = vector.multi_reduction <maximumf>, %178, %cst_83 [1] : vector<16x298xf32> to vector<16xf32>
    %180 = vector.shape_cast %179 : vector<16xf32> to vector<16x1xf32>
    %c3_84 = arith.constant 3 : index
    %c0_85 = arith.constant 0 : index
    %181 = vector.load %arg11[%c3_84, %c0_85] : memref<8x32xf32, #tpu.memory_space<vmem>>, vector<1x32xf32>
    %182 = vector.broadcast %180 : vector<16x1xf32> to vector<16x32xf32>
    %183 = vector.broadcast %181 : vector<1x32xf32> to vector<16x32xf32>
    %184 = arith.mulf %182, %183 : vector<16x32xf32>
    %185 = arith.addf %162, %184 : vector<16x32xf32>
    %c4 = arith.constant 4 : index
    %c0_86 = arith.constant 0 : index
    %186 = memref.load %arg22[%c4, %c0_86] : memref<8x3xf32, #tpu.memory_space<smem>>
    %187 = vector.broadcast %186 : f32 to vector<16x298xf32>
    %188 = arith.mulf %87, %187 : vector<16x298xf32>
    %c4_87 = arith.constant 4 : index
    %c1_88 = arith.constant 1 : index
    %189 = memref.load %arg22[%c4_87, %c1_88] : memref<8x3xf32, #tpu.memory_space<smem>>
    %190 = vector.broadcast %189 : f32 to vector<16x298xf32>
    %191 = arith.mulf %88, %190 : vector<16x298xf32>
    %192 = arith.addf %188, %191 : vector<16x298xf32>
    %c4_89 = arith.constant 4 : index
    %c2_90 = arith.constant 2 : index
    %193 = memref.load %arg22[%c4_89, %c2_90] : memref<8x3xf32, #tpu.memory_space<smem>>
    %194 = vector.broadcast %193 : f32 to vector<16x298xf32>
    %195 = arith.mulf %89, %194 : vector<16x298xf32>
    %196 = arith.addf %192, %195 : vector<16x298xf32>
    %c0_91 = arith.constant 0 : index
    %c4_92 = arith.constant 4 : index
    %197 = memref.load %arg23[%c0_91, %c4_92] : memref<1x8xf32, #tpu.memory_space<smem>>
    %198 = vector.broadcast %197 : f32 to vector<16x298xf32>
    %199 = arith.addf %196, %198 : vector<16x298xf32>
    %cst_93 = arith.constant 0.000000e+00 : f32
    %200 = vector.broadcast %cst_93 : f32 to vector<16x298xf32>
    %201 = arith.maximumf %199, %200 : vector<16x298xf32>
    %cst_94 = arith.constant dense<0xFF800000> : vector<16xf32>
    %202 = vector.multi_reduction <maximumf>, %201, %cst_94 [1] : vector<16x298xf32> to vector<16xf32>
    %203 = vector.shape_cast %202 : vector<16xf32> to vector<16x1xf32>
    %c4_95 = arith.constant 4 : index
    %c0_96 = arith.constant 0 : index
    %204 = vector.load %arg11[%c4_95, %c0_96] : memref<8x32xf32, #tpu.memory_space<vmem>>, vector<1x32xf32>
    %205 = vector.broadcast %203 : vector<16x1xf32> to vector<16x32xf32>
    %206 = vector.broadcast %204 : vector<1x32xf32> to vector<16x32xf32>
    %207 = arith.mulf %205, %206 : vector<16x32xf32>
    %208 = arith.addf %185, %207 : vector<16x32xf32>
    %c5 = arith.constant 5 : index
    %c0_97 = arith.constant 0 : index
    %209 = memref.load %arg22[%c5, %c0_97] : memref<8x3xf32, #tpu.memory_space<smem>>
    %210 = vector.broadcast %209 : f32 to vector<16x298xf32>
    %211 = arith.mulf %87, %210 : vector<16x298xf32>
    %c5_98 = arith.constant 5 : index
    %c1_99 = arith.constant 1 : index
    %212 = memref.load %arg22[%c5_98, %c1_99] : memref<8x3xf32, #tpu.memory_space<smem>>
    %213 = vector.broadcast %212 : f32 to vector<16x298xf32>
    %214 = arith.mulf %88, %213 : vector<16x298xf32>
    %215 = arith.addf %211, %214 : vector<16x298xf32>
    %c5_100 = arith.constant 5 : index
    %c2_101 = arith.constant 2 : index
    %216 = memref.load %arg22[%c5_100, %c2_101] : memref<8x3xf32, #tpu.memory_space<smem>>
    %217 = vector.broadcast %216 : f32 to vector<16x298xf32>
    %218 = arith.mulf %89, %217 : vector<16x298xf32>
    %219 = arith.addf %215, %218 : vector<16x298xf32>
    %c0_102 = arith.constant 0 : index
    %c5_103 = arith.constant 5 : index
    %220 = memref.load %arg23[%c0_102, %c5_103] : memref<1x8xf32, #tpu.memory_space<smem>>
    %221 = vector.broadcast %220 : f32 to vector<16x298xf32>
    %222 = arith.addf %219, %221 : vector<16x298xf32>
    %cst_104 = arith.constant 0.000000e+00 : f32
    %223 = vector.broadcast %cst_104 : f32 to vector<16x298xf32>
    %224 = arith.maximumf %222, %223 : vector<16x298xf32>
    %cst_105 = arith.constant dense<0xFF800000> : vector<16xf32>
    %225 = vector.multi_reduction <maximumf>, %224, %cst_105 [1] : vector<16x298xf32> to vector<16xf32>
    %226 = vector.shape_cast %225 : vector<16xf32> to vector<16x1xf32>
    %c5_106 = arith.constant 5 : index
    %c0_107 = arith.constant 0 : index
    %227 = vector.load %arg11[%c5_106, %c0_107] : memref<8x32xf32, #tpu.memory_space<vmem>>, vector<1x32xf32>
    %228 = vector.broadcast %226 : vector<16x1xf32> to vector<16x32xf32>
    %229 = vector.broadcast %227 : vector<1x32xf32> to vector<16x32xf32>
    %230 = arith.mulf %228, %229 : vector<16x32xf32>
    %231 = arith.addf %208, %230 : vector<16x32xf32>
    %c6 = arith.constant 6 : index
    %c0_108 = arith.constant 0 : index
    %232 = memref.load %arg22[%c6, %c0_108] : memref<8x3xf32, #tpu.memory_space<smem>>
    %233 = vector.broadcast %232 : f32 to vector<16x298xf32>
    %234 = arith.mulf %87, %233 : vector<16x298xf32>
    %c6_109 = arith.constant 6 : index
    %c1_110 = arith.constant 1 : index
    %235 = memref.load %arg22[%c6_109, %c1_110] : memref<8x3xf32, #tpu.memory_space<smem>>
    %236 = vector.broadcast %235 : f32 to vector<16x298xf32>
    %237 = arith.mulf %88, %236 : vector<16x298xf32>
    %238 = arith.addf %234, %237 : vector<16x298xf32>
    %c6_111 = arith.constant 6 : index
    %c2_112 = arith.constant 2 : index
    %239 = memref.load %arg22[%c6_111, %c2_112] : memref<8x3xf32, #tpu.memory_space<smem>>
    %240 = vector.broadcast %239 : f32 to vector<16x298xf32>
    %241 = arith.mulf %89, %240 : vector<16x298xf32>
    %242 = arith.addf %238, %241 : vector<16x298xf32>
    %c0_113 = arith.constant 0 : index
    %c6_114 = arith.constant 6 : index
    %243 = memref.load %arg23[%c0_113, %c6_114] : memref<1x8xf32, #tpu.memory_space<smem>>
    %244 = vector.broadcast %243 : f32 to vector<16x298xf32>
    %245 = arith.addf %242, %244 : vector<16x298xf32>
    %cst_115 = arith.constant 0.000000e+00 : f32
    %246 = vector.broadcast %cst_115 : f32 to vector<16x298xf32>
    %247 = arith.maximumf %245, %246 : vector<16x298xf32>
    %cst_116 = arith.constant dense<0xFF800000> : vector<16xf32>
    %248 = vector.multi_reduction <maximumf>, %247, %cst_116 [1] : vector<16x298xf32> to vector<16xf32>
    %249 = vector.shape_cast %248 : vector<16xf32> to vector<16x1xf32>
    %c6_117 = arith.constant 6 : index
    %c0_118 = arith.constant 0 : index
    %250 = vector.load %arg11[%c6_117, %c0_118] : memref<8x32xf32, #tpu.memory_space<vmem>>, vector<1x32xf32>
    %251 = vector.broadcast %249 : vector<16x1xf32> to vector<16x32xf32>
    %252 = vector.broadcast %250 : vector<1x32xf32> to vector<16x32xf32>
    %253 = arith.mulf %251, %252 : vector<16x32xf32>
    %254 = arith.addf %231, %253 : vector<16x32xf32>
    %c7 = arith.constant 7 : index
    %c0_119 = arith.constant 0 : index
    %255 = memref.load %arg22[%c7, %c0_119] : memref<8x3xf32, #tpu.memory_space<smem>>
    %256 = vector.broadcast %255 : f32 to vector<16x298xf32>
    %257 = arith.mulf %87, %256 : vector<16x298xf32>
    %c7_120 = arith.constant 7 : index
    %c1_121 = arith.constant 1 : index
    %258 = memref.load %arg22[%c7_120, %c1_121] : memref<8x3xf32, #tpu.memory_space<smem>>
    %259 = vector.broadcast %258 : f32 to vector<16x298xf32>
    %260 = arith.mulf %88, %259 : vector<16x298xf32>
    %261 = arith.addf %257, %260 : vector<16x298xf32>
    %c7_122 = arith.constant 7 : index
    %c2_123 = arith.constant 2 : index
    %262 = memref.load %arg22[%c7_122, %c2_123] : memref<8x3xf32, #tpu.memory_space<smem>>
    %263 = vector.broadcast %262 : f32 to vector<16x298xf32>
    %264 = arith.mulf %89, %263 : vector<16x298xf32>
    %265 = arith.addf %261, %264 : vector<16x298xf32>
    %c0_124 = arith.constant 0 : index
    %c7_125 = arith.constant 7 : index
    %266 = memref.load %arg23[%c0_124, %c7_125] : memref<1x8xf32, #tpu.memory_space<smem>>
    %267 = vector.broadcast %266 : f32 to vector<16x298xf32>
    %268 = arith.addf %265, %267 : vector<16x298xf32>
    %cst_126 = arith.constant 0.000000e+00 : f32
    %269 = vector.broadcast %cst_126 : f32 to vector<16x298xf32>
    %270 = arith.maximumf %268, %269 : vector<16x298xf32>
    %cst_127 = arith.constant dense<0xFF800000> : vector<16xf32>
    %271 = vector.multi_reduction <maximumf>, %270, %cst_127 [1] : vector<16x298xf32> to vector<16xf32>
    %272 = vector.shape_cast %271 : vector<16xf32> to vector<16x1xf32>
    %c7_128 = arith.constant 7 : index
    %c0_129 = arith.constant 0 : index
    %273 = vector.load %arg11[%c7_128, %c0_129] : memref<8x32xf32, #tpu.memory_space<vmem>>, vector<1x32xf32>
    %274 = vector.broadcast %272 : vector<16x1xf32> to vector<16x32xf32>
    %275 = vector.broadcast %273 : vector<1x32xf32> to vector<16x32xf32>
    %276 = arith.mulf %274, %275 : vector<16x32xf32>
    %277 = arith.addf %254, %276 : vector<16x32xf32>
    %c0_130 = arith.constant 0 : index
    %c0_131 = arith.constant 0 : index
    %c0_132 = arith.constant 0 : index
    %278 = vector.load %arg1[%c0_130, %c0_131, %c0_132] : memref<1x16x300xf32, #tpu.memory_space<vmem>>, vector<1x16x300xf32>
    %279 = vector.shape_cast %278 : vector<1x16x300xf32> to vector<16x300xf32>
    %280 = arith.truncf %279 : vector<16x300xf32> to vector<16x300xbf16>
    %c0_133 = arith.constant 0 : index
    %c0_134 = arith.constant 0 : index
    %281 = vector.load %arg13[%c0_133, %c0_134] : memref<300x64xbf16, #tpu.memory_space<vmem>>, vector<300x64xbf16>
    %cst_135 = arith.constant dense<0.000000e+00> : vector<16x64xf32>
    %282 = tpu.matmul %280, %281, %cst_135 {dimension_numbers = #tpu.dot_dimension_numbers<[1], [0], [0], [1], [0, 0, 1, 1], [], []>} : vector<16x300xbf16>, vector<300x64xbf16>, vector<16x64xf32> -> vector<16x64xf32>
    %c0_136 = arith.constant 0 : index
    %c0_137 = arith.constant 0 : index
    %283 = vector.load %arg14[%c0_136, %c0_137] : memref<1x64xf32, #tpu.memory_space<vmem>>, vector<1x64xf32>
    %284 = vector.broadcast %283 : vector<1x64xf32> to vector<16x64xf32>
    %285 = arith.addf %282, %284 : vector<16x64xf32>
    %cst_138 = arith.constant 0.000000e+00 : f32
    %286 = vector.broadcast %cst_138 : f32 to vector<16x64xf32>
    %287 = arith.maximumf %285, %286 : vector<16x64xf32>
    %288 = arith.truncf %287 : vector<16x64xf32> to vector<16x64xbf16>
    %c0_139 = arith.constant 0 : index
    %c0_140 = arith.constant 0 : index
    %289 = vector.load %arg15[%c0_139, %c0_140] : memref<64x48xbf16, #tpu.memory_space<vmem>>, vector<64x48xbf16>
    %cst_141 = arith.constant dense<0.000000e+00> : vector<16x48xf32>
    %290 = tpu.matmul %288, %289, %cst_141 {dimension_numbers = #tpu.dot_dimension_numbers<[1], [0], [0], [1], [0, 0, 1, 1], [], []>} : vector<16x64xbf16>, vector<64x48xbf16>, vector<16x48xf32> -> vector<16x48xf32>
    %c0_142 = arith.constant 0 : index
    %c0_143 = arith.constant 0 : index
    %291 = vector.load %arg16[%c0_142, %c0_143] : memref<1x48xf32, #tpu.memory_space<vmem>>, vector<1x48xf32>
    %292 = vector.broadcast %291 : vector<1x48xf32> to vector<16x48xf32>
    %293 = arith.addf %290, %292 : vector<16x48xf32>
    %cst_144 = arith.constant 0.000000e+00 : f32
    %294 = vector.broadcast %cst_144 : f32 to vector<16x48xf32>
    %295 = arith.maximumf %293, %294 : vector<16x48xf32>
    %296 = arith.truncf %295 : vector<16x48xf32> to vector<16x48xbf16>
    %c0_145 = arith.constant 0 : index
    %c0_146 = arith.constant 0 : index
    %297 = vector.load %arg17[%c0_145, %c0_146] : memref<48x32xbf16, #tpu.memory_space<vmem>>, vector<48x32xbf16>
    %cst_147 = arith.constant dense<0.000000e+00> : vector<16x32xf32>
    %298 = tpu.matmul %296, %297, %cst_147 {dimension_numbers = #tpu.dot_dimension_numbers<[1], [0], [0], [1], [0, 0, 1, 1], [], []>} : vector<16x48xbf16>, vector<48x32xbf16>, vector<16x32xf32> -> vector<16x32xf32>
    %c0_148 = arith.constant 0 : index
    %c0_149 = arith.constant 0 : index
    %299 = vector.load %arg18[%c0_148, %c0_149] : memref<1x32xf32, #tpu.memory_space<vmem>>, vector<1x32xf32>
    %300 = vector.broadcast %299 : vector<1x32xf32> to vector<16x32xf32>
    %301 = arith.addf %298, %300 : vector<16x32xf32>
    %302 = arith.negf %301 : vector<16x32xf32>
    %303 = math.exp %302 : vector<16x32xf32>
    %cst_150 = arith.constant 1.000000e+00 : f32
    %304 = vector.broadcast %cst_150 : f32 to vector<16x32xf32>
    %305 = arith.addf %304, %303 : vector<16x32xf32>
    %306 = arith.divf %304, %305 : vector<16x32xf32>
    %307 = arith.subf %306, %277 : vector<16x32xf32>
    %308 = arith.truncf %307 : vector<16x32xf32> to vector<16x32xbf16>
    %c0_151 = arith.constant 0 : index
    %c0_152 = arith.constant 0 : index
    %309 = vector.load %arg19[%c0_151, %c0_152] : memref<32x16xbf16, #tpu.memory_space<vmem>>, vector<32x16xbf16>
    %cst_153 = arith.constant dense<0.000000e+00> : vector<16x16xf32>
    %310 = tpu.matmul %308, %309, %cst_153 {dimension_numbers = #tpu.dot_dimension_numbers<[1], [0], [0], [1], [0, 0, 1, 1], [], []>} : vector<16x32xbf16>, vector<32x16xbf16>, vector<16x16xf32> -> vector<16x16xf32>
    %c0_154 = arith.constant 0 : index
    %c0_155 = arith.constant 0 : index
    %311 = vector.load %arg20[%c0_154, %c0_155] : memref<1x16xf32, #tpu.memory_space<vmem>>, vector<1x16xf32>
    %312 = vector.broadcast %311 : vector<1x16xf32> to vector<16x16xf32>
    %313 = arith.addf %310, %312 : vector<16x16xf32>
    %cst_156 = arith.constant 0.000000e+00 : f32
    %314 = vector.broadcast %cst_156 : f32 to vector<16x16xf32>
    %315 = arith.maximumf %313, %314 : vector<16x16xf32>
    %c0_157 = arith.constant 0 : index
    %c0_158 = arith.constant 0 : index
    %316 = vector.load %arg21[%c0_157, %c0_158] : memref<1x16xf32, #tpu.memory_space<vmem>>, vector<1x16xf32>
    %cst_159 = arith.constant dense<0.000000e+00> : vector<1x16xf32>
    %317 = tpu.matmul %316, %315, %cst_159 {dimension_numbers = #tpu.dot_dimension_numbers<[1], [1], [0], [0], [0, 0, 1, 0], [], []>} : vector<1x16xf32>, vector<16x16xf32>, vector<1x16xf32> -> vector<1x16xf32>
    %c0_160 = arith.constant 0 : index
    %c0_161 = arith.constant 0 : index
    %318 = memref.load %arg24[%c0_160, %c0_161] : memref<1x1xf32, #tpu.memory_space<smem>>
    %319 = vector.broadcast %318 : f32 to vector<1x16xf32>
    %320 = arith.addf %317, %319 : vector<1x16xf32>
    %321 = arith.negf %320 : vector<1x16xf32>
    %322 = math.exp %321 : vector<1x16xf32>
    %cst_162 = arith.constant 1.000000e+00 : f32
    %323 = vector.broadcast %cst_162 : f32 to vector<1x16xf32>
    %324 = arith.addf %323, %322 : vector<1x16xf32>
    %325 = arith.divf %323, %324 : vector<1x16xf32>
    %c0_163 = arith.constant 0 : index
    %c0_164 = arith.constant 0 : index
    %c0_165 = arith.constant 0 : index
    %326 = vector.load %arg25[%c0_163, %c0_164, %c0_165] : memref<1x1x16xf32, #tpu.memory_space<vmem>>, vector<1x1x16xf32>
    %327 = vector.shape_cast %326 : vector<1x1x16xf32> to vector<1x16xf32>
    %328 = vector.shape_cast %325 : vector<1x16xf32> to vector<1x1x16xf32>
    tpu.vector_store %arg25[%c0_163, %c0_164, %c0_165], %328 {strides = array<i32>} : memref<1x1x16xf32, #tpu.memory_space<vmem>>, vector<1x1x16xf32>,
    return
  }
  func.func @transform_0(%arg0: i32) -> (i32, i32, i32) {
    %c0_i32 = arith.constant 0 : i32
    %c0_i32_0 = arith.constant 0 : i32
    %c0_i32_1 = arith.constant 0 : i32
    return %arg0, %c0_i32, %c0_i32_0 : i32, i32, i32
  }
  func.func @transform_1(%arg0: i32) -> (i32, i32, i32) {
    %c0_i32 = arith.constant 0 : i32
    %c0_i32_0 = arith.constant 0 : i32
    %c0_i32_1 = arith.constant 0 : i32
    return %arg0, %c0_i32, %c0_i32_0 : i32, i32, i32
  }
  func.func @transform_2(%arg0: i32) -> (i32, i32, i32) {
    %c0_i32 = arith.constant 0 : i32
    %c0_i32_0 = arith.constant 0 : i32
    %c0_i32_1 = arith.constant 0 : i32
    return %arg0, %c0_i32, %c0_i32_0 : i32, i32, i32
  }
  func.func @transform_3(%arg0: i32) -> (i32, i32, i32) {
    %c0_i32 = arith.constant 0 : i32
    %c0_i32_0 = arith.constant 0 : i32
    %c0_i32_1 = arith.constant 0 : i32
    return %arg0, %c0_i32, %c0_i32_0 : i32, i32, i32
  }
  func.func @transform_4(%arg0: i32) -> (i32, i32) {
    %c0_i32 = arith.constant 0 : i32
    %c0_i32_0 = arith.constant 0 : i32
    %c0_i32_1 = arith.constant 0 : i32
    return %c0_i32, %c0_i32_0 : i32, i32
  }
  func.func @transform_5(%arg0: i32) -> (i32, i32) {
    %c0_i32 = arith.constant 0 : i32
    %c0_i32_0 = arith.constant 0 : i32
    %c0_i32_1 = arith.constant 0 : i32
    return %c0_i32, %c0_i32_0 : i32, i32
  }
  func.func @transform_6(%arg0: i32) -> (i32, i32) {
    %c0_i32 = arith.constant 0 : i32
    %c0_i32_0 = arith.constant 0 : i32
    %c0_i32_1 = arith.constant 0 : i32
    return %c0_i32, %c0_i32_0 : i32, i32
  }
  func.func @transform_7(%arg0: i32) -> (i32, i32) {
    %c0_i32 = arith.constant 0 : i32
    %c0_i32_0 = arith.constant 0 : i32
    %c0_i32_1 = arith.constant 0 : i32
    return %c0_i32, %c0_i32_0 : i32, i32
  }
  func.func @transform_8(%arg0: i32) -> (i32, i32) {
    %c0_i32 = arith.constant 0 : i32
    %c0_i32_0 = arith.constant 0 : i32
    %c0_i32_1 = arith.constant 0 : i32
    return %c0_i32, %c0_i32_0 : i32, i32
  }
  func.func @transform_9(%arg0: i32) -> (i32, i32) {
    %c0_i32 = arith.constant 0 : i32
    %c0_i32_0 = arith.constant 0 : i32
    %c0_i32_1 = arith.constant 0 : i32
    return %c0_i32, %c0_i32_0 : i32, i32
  }
  func.func @transform_10(%arg0: i32) -> (i32, i32) {
    %c0_i32 = arith.constant 0 : i32
    %c0_i32_0 = arith.constant 0 : i32
    %c0_i32_1 = arith.constant 0 : i32
    return %c0_i32, %c0_i32_0 : i32, i32
  }
  func.func @transform_11(%arg0: i32) -> (i32, i32) {
    %c0_i32 = arith.constant 0 : i32
    %c0_i32_0 = arith.constant 0 : i32
    %c0_i32_1 = arith.constant 0 : i32
    return %c0_i32, %c0_i32_0 : i32, i32
  }
  func.func @transform_12(%arg0: i32) -> (i32, i32) {
    %c0_i32 = arith.constant 0 : i32
    %c0_i32_0 = arith.constant 0 : i32
    %c0_i32_1 = arith.constant 0 : i32
    return %c0_i32, %c0_i32_0 : i32, i32
  }
  func.func @transform_13(%arg0: i32) -> (i32, i32) {
    %c0_i32 = arith.constant 0 : i32
    %c0_i32_0 = arith.constant 0 : i32
    %c0_i32_1 = arith.constant 0 : i32
    return %c0_i32, %c0_i32_0 : i32, i32
  }
  func.func @transform_14(%arg0: i32) -> (i32, i32) {
    %c0_i32 = arith.constant 0 : i32
    %c0_i32_0 = arith.constant 0 : i32
    %c0_i32_1 = arith.constant 0 : i32
    return %c0_i32, %c0_i32_0 : i32, i32
  }
  func.func @transform_15(%arg0: i32) -> (i32, i32) {
    %c0_i32 = arith.constant 0 : i32
    %c0_i32_0 = arith.constant 0 : i32
    %c0_i32_1 = arith.constant 0 : i32
    return %c0_i32, %c0_i32_0 : i32, i32
  }
  func.func @transform_16(%arg0: i32) -> (i32, i32) {
    %c0_i32 = arith.constant 0 : i32
    %c0_i32_0 = arith.constant 0 : i32
    %c0_i32_1 = arith.constant 0 : i32
    return %c0_i32, %c0_i32_0 : i32, i32
  }
  func.func @transform_17(%arg0: i32) -> (i32, i32) {
    %c0_i32 = arith.constant 0 : i32
    %c0_i32_0 = arith.constant 0 : i32
    %c0_i32_1 = arith.constant 0 : i32
    return %c0_i32, %c0_i32_0 : i32, i32
  }
  func.func @transform_18(%arg0: i32) -> (i32, i32) {
    %c0_i32 = arith.constant 0 : i32
    %c0_i32_0 = arith.constant 0 : i32
    %c0_i32_1 = arith.constant 0 : i32
    return %c0_i32, %c0_i32_0 : i32, i32
  }
  func.func @transform_19(%arg0: i32) -> (i32, i32) {
    %c0_i32 = arith.constant 0 : i32
    %c0_i32_0 = arith.constant 0 : i32
    %c0_i32_1 = arith.constant 0 : i32
    return %c0_i32, %c0_i32_0 : i32, i32
  }
  func.func @transform_20(%arg0: i32) -> (i32, i32) {
    %c0_i32 = arith.constant 0 : i32
    %c0_i32_0 = arith.constant 0 : i32
    %c0_i32_1 = arith.constant 0 : i32
    return %c0_i32, %c0_i32_0 : i32, i32
  }
  func.func @transform_21(%arg0: i32) -> (i32, i32) {
    %c0_i32 = arith.constant 0 : i32
    %c0_i32_0 = arith.constant 0 : i32
    %c0_i32_1 = arith.constant 0 : i32
    return %c0_i32, %c0_i32_0 : i32, i32
  }
  func.func @transform_22(%arg0: i32) -> (i32, i32) {
    %c0_i32 = arith.constant 0 : i32
    %c0_i32_0 = arith.constant 0 : i32
    %c0_i32_1 = arith.constant 0 : i32
    return %c0_i32, %c0_i32_0 : i32, i32
  }
  func.func @transform_23(%arg0: i32) -> (i32, i32) {
    %c0_i32 = arith.constant 0 : i32
    %c0_i32_0 = arith.constant 0 : i32
    %c0_i32_1 = arith.constant 0 : i32
    return %c0_i32, %c0_i32_0 : i32, i32
  }
  func.func @transform_24(%arg0: i32) -> (i32, i32, i32) {
    %c0_i32 = arith.constant 0 : i32
    %c0_i32_0 = arith.constant 0 : i32
    %c0_i32_1 = arith.constant 0 : i32
    return %arg0, %c0_i32, %c0_i32_0 : i32, i32, i32
  }
}

</mosaic_0001>

<llo_original>
// kernel: pytorch_cnn_forward.1
$region0: #{pytorch_cnn_forward.1}
  #allocation0 [shape = 'u32[]', space=smem, size = 0x4, offset = 0x4, fixed_abs, tag = 'smem constant byte address 0x4 - core index']
  #allocation1 [shape = 'u32[72,128]{1,0:T(1,128)}', space=vmem, size = 0x9000, scoped, tag = 'internal scratch']
  #allocation2 [shape = 'f32[1,1]{1,0:T(1,128)S(6)}', space=smem, size = 0x200, scoped, tag = 'scoped memory for pytorch_cnn_forward.1']
  %s0 = inlined_call_operand.vmem [shape: f32[2,16,300], index: 0, kind: input, shape index: {}]
  %s1 = inlined_call_operand.vmem [shape: f32[2,16,300], index: 1, kind: input, shape index: {}]
  %s2 = inlined_call_operand.vmem [shape: s32[2,1,16], index: 2, kind: input, shape index: {}]
  %s3 = inlined_call_operand.vmem [shape: s32[2,16,1], index: 3, kind: input, shape index: {}]
  %s4 = inlined_call_operand.vmem [shape: bf16[300,512], index: 4, kind: input, shape index: {}]
  %s5 = inlined_call_operand.vmem [shape: f32[1,512], index: 5, kind: input, shape index: {}]
  %s6 = inlined_call_operand.vmem [shape: bf16[512,300], index: 6, kind: input, shape index: {}]
  %s7 = inlined_call_operand.vmem [shape: f32[1,300], index: 7, kind: input, shape index: {}]
  %s8 = inlined_call_operand.vmem [shape: f32[1,300], index: 8, kind: input, shape index: {}]
  %s9 = inlined_call_operand.vmem [shape: f32[1,300], index: 9, kind: input, shape index: {}]
  %s10 = inlined_call_operand.vmem [shape: f32[8,32], index: 10, kind: input, shape index: {}]
  %s11 = inlined_call_operand.vmem [shape: f32[1,32], index: 11, kind: input, shape index: {}]
  %s12 = inlined_call_operand.vmem [shape: bf16[300,64], index: 12, kind: input, shape index: {}]
  %s13 = inlined_call_operand.vmem [shape: f32[1,64], index: 13, kind: input, shape index: {}]
  %s14 = inlined_call_operand.vmem [shape: bf16[64,48], index: 14, kind: input, shape index: {}]
  %s15 = inlined_call_operand.vmem [shape: f32[1,48], index: 15, kind: input, shape index: {}]
  %s16 = inlined_call_operand.vmem [shape: bf16[48,32], index: 16, kind: input, shape index: {}]
  %s17 = inlined_call_operand.vmem [shape: f32[1,32], index: 17, kind: input, shape index: {}]
  %s18 = inlined_call_operand.vmem [shape: bf16[32,16], index: 18, kind: input, shape index: {}]
  %s19 = inlined_call_operand.vmem [shape: f32[1,16], index: 19, kind: input, shape index: {}]
  %s20 = inlined_call_operand.vmem [shape: f32[1,16], index: 20, kind: input, shape index: {}]
  %s21 = inlined_call_operand.vmem [shape: f32[8,3], index: 21, kind: input, shape index: {}]
  %s22 = inlined_call_operand.vmem [shape: f32[1,8], index: 22, kind: input, shape index: {}]
  %s23 = inlined_call_operand.<no memory space> [shape: f32[1,1], index: 23, kind: input, shape index: {}]
  %s24 = inlined_call_operand.vmem [shape: f32[2,1,16], index: 24, kind: output, shape index: {}]
  %s25 = sld [smem:[#allocation0]]
  $region137: #{pytorch_cnn_forward.1} parent=0
    _
  %s27 = ssub.s32 1, %s25
  %s28 = scalar_select 0, %s27, %s25
  %29 = sst [smem:[#allocation2]] %s23
  $region1: #{pytorch_cnn_forward.1} parent=0
    #allocation3 [shape = 'u8[4096]{0}', space=smem, size = 0x1000, scoped, tag = 'input window, operand 21, single buffered']
    #allocation4 [shape = 's32[2]{0}', space=sflag, size = 0x8, scoped, tag = 'scoped memory for pytorch_cnn_forward.1']
    #allocation5 [shape = 'u8[512]{0}', space=smem, size = 0x200, scoped, tag = 'input window, operand 22, single buffered']
    #allocation6 [shape = 's32[1]{0}', space=sflag, size = 0x4, scoped, tag = 'scoped memory for pytorch_cnn_forward.1']
    %30 = vsyncpa [#allocation4], 0
    %31 = vsyncpa [#allocation6], 0
    loop: start=0, step=1, limit=4
    $region2: #{pytorch_cnn_forward.1} parent=1 // loop_pre_header
      _
    $region3: #{pytorch_cnn_forward.1} parent=1 // loop_header
      %s33 = sphi 0, %s37
      %p34 = scmp.ge.s32.totalorder %s33, 4
      %s43 = sphi 0, %s45
      %s46 = sphi 0, %s43
      %s47 = sphi 0, %s46
      %s63 = sphi 0, %s47
      %s69 = sphi 0, %s71
      %s72 = sphi 0, %s69
      %s73 = sphi 0, %s72
      %s89 = sphi 0, %s73
      %s95 = sphi 0, %s97
      %s98 = sphi 0, %s95
      %s99 = sphi 0, %s98
      %s115 = sphi 0, %s99
      %s121 = sphi 0, %s123
      %s124 = sphi 0, %s121
      %s125 = sphi 0, %s124
      %s141 = sphi 0, %s125
      %s145 = sphi 0, %s145
      %s147 = sphi 0, %s145
      %s148 = sphi 0, %s147
      %s162 = sphi 0, %s148
      %s166 = sphi 0, %s166
      %s168 = sphi 0, %s166
      %s169 = sphi 0, %s168
      %s183 = sphi 0, %s169
      %s187 = sphi 0, %s187
      %s189 = sphi 0, %s187
      %s190 = sphi 0, %s189
      %s204 = sphi 0, %s190
      %s208 = sphi 0, %s208
      %s210 = sphi 0, %s208
      %s211 = sphi 0, %s210
      %s225 = sphi 0, %s211
      %s229 = sphi 0, %s229
      %s231 = sphi 0, %s229
      %s232 = sphi 0, %s231
      %s246 = sphi 0, %s232
      %s250 = sphi 0, %s250
      %s252 = sphi 0, %s250
      %s253 = sphi 0, %s252
      %s267 = sphi 0, %s253
      %s271 = sphi 0, %s271
      %s273 = sphi 0, %s271
      %s274 = sphi 0, %s273
      %s288 = sphi 0, %s274
      %s292 = sphi 0, %s292
      %s294 = sphi 0, %s292
      %s295 = sphi 0, %s294
      %s309 = sphi 0, %s295
      %s313 = sphi 0, %s313
      %s315 = sphi 0, %s313
      %s316 = sphi 0, %s315
      %s330 = sphi 0, %s316
      %s334 = sphi 0, %s334
      %s336 = sphi 0, %s334
      %s337 = sphi 0, %s336
      %s351 = sphi 0, %s337
      %s355 = sphi 0, %s355
      %s357 = sphi 0, %s355
      %s358 = sphi 0, %s357
      %s372 = sphi 0, %s358
      %s376 = sphi 0, %s376
      %s378 = sphi 0, %s376
      %s379 = sphi 0, %s378
      %s393 = sphi 0, %s379
      %s397 = sphi 0, %s397
      %s399 = sphi 0, %s397
      %s400 = sphi 0, %s399
      %s414 = sphi 0, %s400
      %s418 = sphi 0, %s418
      %s420 = sphi 0, %s418
      %s421 = sphi 0, %s420
      %s435 = sphi 0, %s421
      %s439 = sphi 0, %s439
      %s441 = sphi 0, %s439
      %s442 = sphi 0, %s441
      %s456 = sphi 0, %s442
      %s460 = sphi 0, %s460
      %s462 = sphi 0, %s460
      %s463 = sphi 0, %s462
      %s477 = sphi 0, %s463
      %s481 = sphi 0, %s481
      %s483 = sphi 0, %s481
      %s484 = sphi 0, %s483
      %s498 = sphi 0, %s484
      %s502 = sphi 0, %s502
      %s504 = sphi 0, %s502
      %s505 = sphi 0, %s504
      %s519 = sphi 0, %s505
      %s523 = sphi 0, %s523
      %s525 = sphi 0, %s523
      %s526 = sphi 0, %s525
      %s540 = sphi 0, %s526
      %s544 = sphi 0, %s544
      %s546 = sphi 0, %s544
      %s547 = sphi 0, %s546
      %s561 = sphi 0, %s547
      %s567 = sphi 0, %s569
      %s570 = sphi 0, %s567
      %s571 = sphi 0, %s570
      %s587 = sphi 0, %s571
    $region4: #{pytorch_cnn_forward.1} parent=1 // loop_header_branch
      %36 = sbr.rel (%p34) target = $region8
    $region5: #{pytorch_cnn_forward.1} parent=1 // loop_body
      %s38 = ssub.s32 %s33, 1
      %s39 = ssub.s32 %s33, 2
      %s40 = sadd.s32 %s33, 1
      %s41 = ssub.s32 %s33, %s40
      %p42 = scmp.eq.s32.totalorder %s41, 0
      %s44 = sadd.s32 %s43, 1
      %s45 = scalar_select %p42, %s43, %s44
      %p48 = pneg %p42
      %p49 = scmp.eq.s32.totalorder %s33, 1
      %p50 = por %p48, %p49
      %p51 = scmp.ne.s32.totalorder %s43, %s46
      %p52 = scmp.eq.s32.totalorder %s33, 0
      %p53 = por %p51, %p52
      %p54 = scmp.ne.s32.totalorder %s43, %s46
      %p55 = scmp.eq.s32.totalorder %s38, 1
      %p56 = por %p54, %p55
      %p57 = scmp.ne.s32.totalorder %s46, %s47
      %p58 = scmp.eq.s32.totalorder %s38, 0
      %p59 = por %p57, %p58
      %p60 = scmp.ne.s32.totalorder %s46, %s47
      %p61 = scmp.eq.s32.totalorder %s39, 1
      %p62 = por %p60, %p61
      %p64 = scmp.ne.s32.totalorder %s47, %s63
      %p65 = scmp.eq.s32.totalorder %s39, 0
      %p66 = por %p64, %p65
      %s67 = ssub.s32 %s33, %s40
      %p68 = scmp.eq.s32.totalorder %s67, 0
      %s70 = sadd.s32 %s69, 1
      %s71 = scalar_select %p68, %s69, %s70
      %p74 = pneg %p68
      %p75 = scmp.eq.s32.totalorder %s33, 1
      %p76 = por %p74, %p75
      %p77 = scmp.ne.s32.totalorder %s69, %s72
      %p78 = scmp.eq.s32.totalorder %s33, 0
      %p79 = por %p77, %p78
      %p80 = scmp.ne.s32.totalorder %s69, %s72
      %p81 = scmp.eq.s32.totalorder %s38, 1
      %p82 = por %p80, %p81
      %p83 = scmp.ne.s32.totalorder %s72, %s73
      %p84 = scmp.eq.s32.totalorder %s38, 0
      %p85 = por %p83, %p84
      %p86 = scmp.ne.s32.totalorder %s72, %s73
      %p87 = scmp.eq.s32.totalorder %s39, 1
      %p88 = por %p86, %p87
      %p90 = scmp.ne.s32.totalorder %s73, %s89
      %p91 = scmp.eq.s32.totalorder %s39, 0
      %p92 = por %p90, %p91
      %s93 = ssub.s32 %s33, %s40
      %p94 = scmp.eq.s32.totalorder %s93, 0
      %s96 = sadd.s32 %s95, 1
      %s97 = scalar_select %p94, %s95, %s96
      %p100 = pneg %p94
      %p101 = scmp.eq.s32.totalorder %s33, 1
      %p102 = por %p100, %p101
      %p103 = scmp.ne.s32.totalorder %s95, %s98
      %p104 = scmp.eq.s32.totalorder %s33, 0
      %p105 = por %p103, %p104
      %p106 = scmp.ne.s32.totalorder %s95, %s98
      %p107 = scmp.eq.s32.totalorder %s38, 1
      %p108 = por %p106, %p107
      %p109 = scmp.ne.s32.totalorder %s98, %s99
      %p110 = scmp.eq.s32.totalorder %s38, 0
      %p111 = por %p109, %p110
      %p112 = scmp.ne.s32.totalorder %s98, %s99
      %p113 = scmp.eq.s32.totalorder %s39, 1
      %p114 = por %p112, %p113
      %p116 = scmp.ne.s32.totalorder %s99, %s115
      %p117 = scmp.eq.s32.totalorder %s39, 0
      %p118 = por %p116, %p117
      %s119 = ssub.s32 %s33, %s40
      %p120 = scmp.eq.s32.totalorder %s119, 0
      %s122 = sadd.s32 %s121, 1
      %s123 = scalar_select %p120, %s121, %s122
      %p126 = pneg %p120
      %p127 = scmp.eq.s32.totalorder %s33, 1
      %p128 = por %p126, %p127
      %p129 = scmp.ne.s32.totalorder %s121, %s124
      %p130 = scmp.eq.s32.totalorder %s33, 0
      %p131 = por %p129, %p130
      %p132 = scmp.ne.s32.totalorder %s121, %s124
      %p133 = scmp.eq.s32.totalorder %s38, 1
      %p134 = por %p132, %p133
      %p135 = scmp.ne.s32.totalorder %s124, %s125
      %p136 = scmp.eq.s32.totalorder %s38, 0
      %p137 = por %p135, %p136
      %p138 = scmp.ne.s32.totalorder %s124, %s125
      %p139 = scmp.eq.s32.totalorder %s39, 1
      %p140 = por %p138, %p139
      %p142 = scmp.ne.s32.totalorder %s125, %s141
      %p143 = scmp.eq.s32.totalorder %s39, 0
      %p144 = por %p142, %p143
      %s146 = sadd.s32 %s145, 1
      %p149 = scmp.eq.s32.totalorder %s33, 1
      %p150 = scmp.ne.s32.totalorder %s145, %s147
      %p151 = scmp.eq.s32.totalorder %s33, 0
      %p152 = por %p150, %p151
      %p153 = scmp.ne.s32.totalorder %s145, %s147
      %p154 = scmp.eq.s32.totalorder %s38, 1
      %p155 = por %p153, %p154
      %p156 = scmp.ne.s32.totalorder %s147, %s148
      %p157 = scmp.eq.s32.totalorder %s38, 0
      %p158 = por %p156, %p157
      %p159 = scmp.ne.s32.totalorder %s147, %s148
      %p160 = scmp.eq.s32.totalorder %s39, 1
      %p161 = por %p159, %p160
      %p163 = scmp.ne.s32.totalorder %s148, %s162
      %p164 = scmp.eq.s32.totalorder %s39, 0
      %p165 = por %p163, %p164
      %s167 = sadd.s32 %s166, 1
      %p170 = scmp.eq.s32.totalorder %s33, 1
      %p171 = scmp.ne.s32.totalorder %s166, %s168
      %p172 = scmp.eq.s32.totalorder %s33, 0
      %p173 = por %p171, %p172
      %p174 = scmp.ne.s32.totalorder %s166, %s168
      %p175 = scmp.eq.s32.totalorder %s38, 1
      %p176 = por %p174, %p175
      %p177 = scmp.ne.s32.totalorder %s168, %s169
      %p178 = scmp.eq.s32.totalorder %s38, 0
      %p179 = por %p177, %p178
      %p180 = scmp.ne.s32.totalorder %s168, %s169
      %p181 = scmp.eq.s32.totalorder %s39, 1
      %p182 = por %p180, %p181
      %p184 = scmp.ne.s32.totalorder %s169, %s183
      %p185 = scmp.eq.s32.totalorder %s39, 0
      %p186 = por %p184, %p185
      %s188 = sadd.s32 %s187, 1
      %p191 = scmp.eq.s32.totalorder %s33, 1
      %p192 = scmp.ne.s32.totalorder %s187, %s189
      %p193 = scmp.eq.s32.totalorder %s33, 0
      %p194 = por %p192, %p193
      %p195 = scmp.ne.s32.totalorder %s187, %s189
      %p196 = scmp.eq.s32.totalorder %s38, 1
      %p197 = por %p195, %p196
      %p198 = scmp.ne.s32.totalorder %s189, %s190
      %p199 = scmp.eq.s32.totalorder %s38, 0
      %p200 = por %p198, %p199
      %p201 = scmp.ne.s32.totalorder %s189, %s190
      %p202 = scmp.eq.s32.totalorder %s39, 1
      %p203 = por %p201, %p202
      %p205 = scmp.ne.s32.totalorder %s190, %s204
      %p206 = scmp.eq.s32.totalorder %s39, 0
      %p207 = por %p205, %p206
      %s209 = sadd.s32 %s208, 1
      %p212 = scmp.eq.s32.totalorder %s33, 1
      %p213 = scmp.ne.s32.totalorder %s208, %s210
      %p214 = scmp.eq.s32.totalorder %s33, 0
      %p215 = por %p213, %p214
      %p216 = scmp.ne.s32.totalorder %s208, %s210
      %p217 = scmp.eq.s32.totalorder %s38, 1
      %p218 = por %p216, %p217
      %p219 = scmp.ne.s32.totalorder %s210, %s211
      %p220 = scmp.eq.s32.totalorder %s38, 0
      %p221 = por %p219, %p220
      %p222 = scmp.ne.s32.totalorder %s210, %s211
      %p223 = scmp.eq.s32.totalorder %s39, 1
      %p224 = por %p222, %p223
      %p226 = scmp.ne.s32.totalorder %s211, %s225
      %p227 = scmp.eq.s32.totalorder %s39, 0
      %p228 = por %p226, %p227
      %s230 = sadd.s32 %s229, 1
      %p233 = scmp.eq.s32.totalorder %s33, 1
      %p234 = scmp.ne.s32.totalorder %s229, %s231
      %p235 = scmp.eq.s32.totalorder %s33, 0
      %p236 = por %p234, %p235
      %p237 = scmp.ne.s32.totalorder %s229, %s231
      %p238 = scmp.eq.s32.totalorder %s38, 1
      %p239 = por %p237, %p238
      %p240 = scmp.ne.s32.totalorder %s231, %s232
      %p241 = scmp.eq.s32.totalorder %s38, 0
      %p242 = por %p240, %p241
      %p243 = scmp.ne.s32.totalorder %s231, %s232
      %p244 = scmp.eq.s32.totalorder %s39, 1
      %p245 = por %p243, %p244
      %p247 = scmp.ne.s32.totalorder %s232, %s246
      %p248 = scmp.eq.s32.totalorder %s39, 0
      %p249 = por %p247, %p248
      %s251 = sadd.s32 %s250, 1
      %p254 = scmp.eq.s32.totalorder %s33, 1
      %p255 = scmp.ne.s32.totalorder %s250, %s252
      %p256 = scmp.eq.s32.totalorder %s33, 0
      %p257 = por %p255, %p256
      %p258 = scmp.ne.s32.totalorder %s250, %s252
      %p259 = scmp.eq.s32.totalorder %s38, 1
      %p260 = por %p258, %p259
      %p261 = scmp.ne.s32.totalorder %s252, %s253
      %p262 = scmp.eq.s32.totalorder %s38, 0
      %p263 = por %p261, %p262
      %p264 = scmp.ne.s32.totalorder %s252, %s253
      %p265 = scmp.eq.s32.totalorder %s39, 1
      %p266 = por %p264, %p265
      %p268 = scmp.ne.s32.totalorder %s253, %s267
      %p269 = scmp.eq.s32.totalorder %s39, 0
      %p270 = por %p268, %p269
      %s272 = sadd.s32 %s271, 1
      %p275 = scmp.eq.s32.totalorder %s33, 1
      %p276 = scmp.ne.s32.totalorder %s271, %s273
      %p277 = scmp.eq.s32.totalorder %s33, 0
      %p278 = por %p276, %p277
      %p279 = scmp.ne.s32.totalorder %s271, %s273
      %p280 = scmp.eq.s32.totalorder %s38, 1
      %p281 = por %p279, %p280
      %p282 = scmp.ne.s32.totalorder %s273, %s274
      %p283 = scmp.eq.s32.totalorder %s38, 0
      %p284 = por %p282, %p283
      %p285 = scmp.ne.s32.totalorder %s273, %s274
      %p286 = scmp.eq.s32.totalorder %s39, 1
      %p287 = por %p285, %p286
      %p289 = scmp.ne.s32.totalorder %s274, %s288
      %p290 = scmp.eq.s32.totalorder %s39, 0
      %p291 = por %p289, %p290
      %s293 = sadd.s32 %s292, 1
      %p296 = scmp.eq.s32.totalorder %s33, 1
      %p297 = scmp.ne.s32.totalorder %s292, %s294
      %p298 = scmp.eq.s32.totalorder %s33, 0
      %p299 = por %p297, %p298
      %p300 = scmp.ne.s32.totalorder %s292, %s294
      %p301 = scmp.eq.s32.totalorder %s38, 1
      %p302 = por %p300, %p301
      %p303 = scmp.ne.s32.totalorder %s294, %s295
      %p304 = scmp.eq.s32.totalorder %s38, 0
      %p305 = por %p303, %p304
      %p306 = scmp.ne.s32.totalorder %s294, %s295
      %p307 = scmp.eq.s32.totalorder %s39, 1
      %p308 = por %p306, %p307
      %p310 = scmp.ne.s32.totalorder %s295, %s309
      %p311 = scmp.eq.s32.totalorder %s39, 0
      %p312 = por %p310, %p311
      %s314 = sadd.s32 %s313, 1
      %p317 = scmp.eq.s32.totalorder %s33, 1
      %p318 = scmp.ne.s32.totalorder %s313, %s315
      %p319 = scmp.eq.s32.totalorder %s33, 0
      %p320 = por %p318, %p319
      %p321 = scmp.ne.s32.totalorder %s313, %s315
      %p322 = scmp.eq.s32.totalorder %s38, 1
      %p323 = por %p321, %p322
      %p324 = scmp.ne.s32.totalorder %s315, %s316
      %p325 = scmp.eq.s32.totalorder %s38, 0
      %p326 = por %p324, %p325
      %p327 = scmp.ne.s32.totalorder %s315, %s316
      %p328 = scmp.eq.s32.totalorder %s39, 1
      %p329 = por %p327, %p328
      %p331 = scmp.ne.s32.totalorder %s316, %s330
      %p332 = scmp.eq.s32.totalorder %s39, 0
      %p333 = por %p331, %p332
      %s335 = sadd.s32 %s334, 1
      %p338 = scmp.eq.s32.totalorder %s33, 1
      %p339 = scmp.ne.s32.totalorder %s334, %s336
      %p340 = scmp.eq.s32.totalorder %s33, 0
      %p341 = por %p339, %p340
      %p342 = scmp.ne.s32.totalorder %s334, %s336
      %p343 = scmp.eq.s32.totalorder %s38, 1
      %p344 = por %p342, %p343
      %p345 = scmp.ne.s32.totalorder %s336, %s337
      %p346 = scmp.eq.s32.totalorder %s38, 0
      %p347 = por %p345, %p346
      %p348 = scmp.ne.s32.totalorder %s336, %s337
      %p349 = scmp.eq.s32.totalorder %s39, 1
      %p350 = por %p348, %p349
      %p352 = scmp.ne.s32.totalorder %s337, %s351
      %p353 = scmp.eq.s32.totalorder %s39, 0
      %p354 = por %p352, %p353
      %s356 = sadd.s32 %s355, 1
      %p359 = scmp.eq.s32.totalorder %s33, 1
      %p360 = scmp.ne.s32.totalorder %s355, %s357
      %p361 = scmp.eq.s32.totalorder %s33, 0
      %p362 = por %p360, %p361
      %p363 = scmp.ne.s32.totalorder %s355, %s357
      %p364 = scmp.eq.s32.totalorder %s38, 1
      %p365 = por %p363, %p364
      %p366 = scmp.ne.s32.totalorder %s357, %s358
      %p367 = scmp.eq.s32.totalorder %s38, 0
      %p368 = por %p366, %p367
      %p369 = scmp.ne.s32.totalorder %s357, %s358
      %p370 = scmp.eq.s32.totalorder %s39, 1
      %p371 = por %p369, %p370
      %p373 = scmp.ne.s32.totalorder %s358, %s372
      %p374 = scmp.eq.s32.totalorder %s39, 0
      %p375 = por %p373, %p374
      %s377 = sadd.s32 %s376, 1
      %p380 = scmp.eq.s32.totalorder %s33, 1
      %p381 = scmp.ne.s32.totalorder %s376, %s378
      %p382 = scmp.eq.s32.totalorder %s33, 0
      %p383 = por %p381, %p382
      %p384 = scmp.ne.s32.totalorder %s376, %s378
      %p385 = scmp.eq.s32.totalorder %s38, 1
      %p386 = por %p384, %p385
      %p387 = scmp.ne.s32.totalorder %s378, %s379
      %p388 = scmp.eq.s32.totalorder %s38, 0
      %p389 = por %p387, %p388
      %p390 = scmp.ne.s32.totalorder %s378, %s379
      %p391 = scmp.eq.s32.totalorder %s39, 1
      %p392 = por %p390, %p391
      %p394 = scmp.ne.s32.totalorder %s379, %s393
      %p395 = scmp.eq.s32.totalorder %s39, 0
      %p396 = por %p394, %p395
      %s398 = sadd.s32 %s397, 1
      %p401 = scmp.eq.s32.totalorder %s33, 1
      %p402 = scmp.ne.s32.totalorder %s397, %s399
      %p403 = scmp.eq.s32.totalorder %s33, 0
      %p404 = por %p402, %p403
      %p405 = scmp.ne.s32.totalorder %s397, %s399
      %p406 = scmp.eq.s32.totalorder %s38, 1
      %p407 = por %p405, %p406
      %p408 = scmp.ne.s32.totalorder %s399, %s400
      %p409 = scmp.eq.s32.totalorder %s38, 0
      %p410 = por %p408, %p409
      %p411 = scmp.ne.s32.totalorder %s399, %s400
      %p412 = scmp.eq.s32.totalorder %s39, 1
      %p413 = por %p411, %p412
      %p415 = scmp.ne.s32.totalorder %s400, %s414
      %p416 = scmp.eq.s32.totalorder %s39, 0
      %p417 = por %p415, %p416
      %s419 = sadd.s32 %s418, 1
      %p422 = scmp.eq.s32.totalorder %s33, 1
      %p423 = scmp.ne.s32.totalorder %s418, %s420
      %p424 = scmp.eq.s32.totalorder %s33, 0
      %p425 = por %p423, %p424
      %p426 = scmp.ne.s32.totalorder %s418, %s420
      %p427 = scmp.eq.s32.totalorder %s38, 1
      %p428 = por %p426, %p427
      %p429 = scmp.ne.s32.totalorder %s420, %s421
      %p430 = scmp.eq.s32.totalorder %s38, 0
      %p431 = por %p429, %p430
      %p432 = scmp.ne.s32.totalorder %s420, %s421
      %p433 = scmp.eq.s32.totalorder %s39, 1
      %p434 = por %p432, %p433
      %p436 = scmp.ne.s32.totalorder %s421, %s435
      %p437 = scmp.eq.s32.totalorder %s39, 0
      %p438 = por %p436, %p437
      %s440 = sadd.s32 %s439, 1
      %p443 = scmp.eq.s32.totalorder %s33, 1
      %p444 = scmp.ne.s32.totalorder %s439, %s441
      %p445 = scmp.eq.s32.totalorder %s33, 0
      %p446 = por %p444, %p445
      %p447 = scmp.ne.s32.totalorder %s439, %s441
      %p448 = scmp.eq.s32.totalorder %s38, 1
      %p449 = por %p447, %p448
      %p450 = scmp.ne.s32.totalorder %s441, %s442
      %p451 = scmp.eq.s32.totalorder %s38, 0
      %p452 = por %p450, %p451
      %p453 = scmp.ne.s32.totalorder %s441, %s442
      %p454 = scmp.eq.s32.totalorder %s39, 1
      %p455 = por %p453, %p454
      %p457 = scmp.ne.s32.totalorder %s442, %s456
      %p458 = scmp.eq.s32.totalorder %s39, 0
      %p459 = por %p457, %p458
      %s461 = sadd.s32 %s460, 1
      %p464 = scmp.eq.s32.totalorder %s33, 1
      %p465 = scmp.ne.s32.totalorder %s460, %s462
      %p466 = scmp.eq.s32.totalorder %s33, 0
      %p467 = por %p465, %p466
      %p468 = scmp.ne.s32.totalorder %s460, %s462
      %p469 = scmp.eq.s32.totalorder %s38, 1
      %p470 = por %p468, %p469
      %p471 = scmp.ne.s32.totalorder %s462, %s463
      %p472 = scmp.eq.s32.totalorder %s38, 0
      %p473 = por %p471, %p472
      %p474 = scmp.ne.s32.totalorder %s462, %s463
      %p475 = scmp.eq.s32.totalorder %s39, 1
      %p476 = por %p474, %p475
      %p478 = scmp.ne.s32.totalorder %s463, %s477
      %p479 = scmp.eq.s32.totalorder %s39, 0
      %p480 = por %p478, %p479
      %s482 = sadd.s32 %s481, 1
      %p485 = scmp.eq.s32.totalorder %s33, 1
      %p486 = scmp.ne.s32.totalorder %s481, %s483
      %p487 = scmp.eq.s32.totalorder %s33, 0
      %p488 = por %p486, %p487
      %p489 = scmp.ne.s32.totalorder %s481, %s483
      %p490 = scmp.eq.s32.totalorder %s38, 1
      %p491 = por %p489, %p490
      %p492 = scmp.ne.s32.totalorder %s483, %s484
      %p493 = scmp.eq.s32.totalorder %s38, 0
      %p494 = por %p492, %p493
      %p495 = scmp.ne.s32.totalorder %s483, %s484
      %p496 = scmp.eq.s32.totalorder %s39, 1
      %p497 = por %p495, %p496
      %p499 = scmp.ne.s32.totalorder %s484, %s498
      %p500 = scmp.eq.s32.totalorder %s39, 0
      %p501 = por %p499, %p500
      %s503 = sadd.s32 %s502, 1
      %p506 = scmp.eq.s32.totalorder %s33, 1
      %p507 = scmp.ne.s32.totalorder %s502, %s504
      %p508 = scmp.eq.s32.totalorder %s33, 0
      %p509 = por %p507, %p508
      %p510 = scmp.ne.s32.totalorder %s502, %s504
      %p511 = scmp.eq.s32.totalorder %s38, 1
      %p512 = por %p510, %p511
      %p513 = scmp.ne.s32.totalorder %s504, %s505
      %p514 = scmp.eq.s32.totalorder %s38, 0
      %p515 = por %p513, %p514
      %p516 = scmp.ne.s32.totalorder %s504, %s505
      %p517 = scmp.eq.s32.totalorder %s39, 1
      %p518 = por %p516, %p517
      %p520 = scmp.ne.s32.totalorder %s505, %s519
      %p521 = scmp.eq.s32.totalorder %s39, 0
      %p522 = por %p520, %p521
      %s524 = sadd.s32 %s523, 1
      %p527 = scmp.eq.s32.totalorder %s33, 1
      %p528 = scmp.ne.s32.totalorder %s523, %s525
      %p529 = scmp.eq.s32.totalorder %s33, 0
      %p530 = por %p528, %p529
      %p531 = scmp.ne.s32.totalorder %s523, %s525
      %p532 = scmp.eq.s32.totalorder %s38, 1
      %p533 = por %p531, %p532
      %p534 = scmp.ne.s32.totalorder %s525, %s526
      %p535 = scmp.eq.s32.totalorder %s38, 0
      %p536 = por %p534, %p535
      %p537 = scmp.ne.s32.totalorder %s525, %s526
      %p538 = scmp.eq.s32.totalorder %s39, 1
      %p539 = por %p537, %p538
      %p541 = scmp.ne.s32.totalorder %s526, %s540
      %p542 = scmp.eq.s32.totalorder %s39, 0
      %p543 = por %p541, %p542
      %s545 = sadd.s32 %s544, 1
      %p548 = scmp.eq.s32.totalorder %s33, 1
      %p549 = scmp.ne.s32.totalorder %s544, %s546
      %p550 = scmp.eq.s32.totalorder %s33, 0
      %p551 = por %p549, %p550
      %p552 = scmp.ne.s32.totalorder %s544, %s546
      %p553 = scmp.eq.s32.totalorder %s38, 1
      %p554 = por %p552, %p553
      %p555 = scmp.ne.s32.totalorder %s546, %s547
      %p556 = scmp.eq.s32.totalorder %s38, 0
      %p557 = por %p555, %p556
      %p558 = scmp.ne.s32.totalorder %s546, %s547
      %p559 = scmp.eq.s32.totalorder %s39, 1
      %p560 = por %p558, %p559
      %p562 = scmp.ne.s32.totalorder %s547, %s561
      %p563 = scmp.eq.s32.totalorder %s39, 0
      %p564 = por %p562, %p563
      %s565 = ssub.s32 %s33, %s40
      %p566 = scmp.eq.s32.totalorder %s565, 0
      %s568 = sadd.s32 %s567, 1
      %s569 = scalar_select %p566, %s567, %s568
      %p572 = pneg %p566
      %p573 = scmp.eq.s32.totalorder %s33, 1
      %p574 = por %p572, %p573
      %p575 = scmp.ne.s32.totalorder %s567, %s570
      %p576 = scmp.eq.s32.totalorder %s33, 0
      %p577 = por %p575, %p576
      %p578 = scmp.ne.s32.totalorder %s567, %s570
      %p579 = scmp.eq.s32.totalorder %s38, 1
      %p580 = por %p578, %p579
      %p581 = scmp.ne.s32.totalorder %s570, %s571
      %p582 = scmp.eq.s32.totalorder %s38, 0
      %p583 = por %p581, %p582
      %p584 = scmp.ne.s32.totalorder %s570, %s571
      %p585 = scmp.eq.s32.totalorder %s39, 1
      %p586 = por %p584, %p585
      %p588 = scmp.ne.s32.totalorder %s571, %s587
      %p589 = scmp.eq.s32.totalorder %s39, 0
      %p590 = por %p588, %p589
      %p591 = scmp.le.s32.totalorder 1, %s33
      %p592 = scmp.lt.s32.totalorder %s33, 3
      %p593 = pnand %p591, %p592
      %p594 = pneg %p593
      // Predicated region
      $region9: #{pytorch_cnn_forward.1} parent=5 // pred_check
        _
      $region10: #{pytorch_cnn_forward.1} parent=5 // pred_check_branch
        %596 = sbr.rel (%p593) target = $region12
      $region11: #{pytorch_cnn_forward.1} parent=5 // pred_region
        %s597 = ssub.s32 %s33, 1
        // Predicated region
        $region13: #{pytorch_cnn_forward.1} parent=11 // pred_check
          %p598 = pneg %p158
        $region14: #{pytorch_cnn_forward.1} parent=11 // pred_check_branch
          %600 = sbr.rel (%p598) target = $region16
        $region15: #{pytorch_cnn_forward.1} parent=11 // pred_region
          _
        $region16: #{pytorch_cnn_forward.1} parent=11 // pred_fallthru
          _
        // Predicated region
        $region17: #{pytorch_cnn_forward.1} parent=11 // pred_check
          %p601 = pneg %p179
        $region18: #{pytorch_cnn_forward.1} parent=11 // pred_check_branch
          %603 = sbr.rel (%p601) target = $region20
        $region19: #{pytorch_cnn_forward.1} parent=11 // pred_region
          _
        $region20: #{pytorch_cnn_forward.1} parent=11 // pred_fallthru
          _
        // Predicated region
        $region21: #{pytorch_cnn_forward.1} parent=11 // pred_check
          %p604 = pneg %p200
        $region22: #{pytorch_cnn_forward.1} parent=11 // pred_check_branch
          %606 = sbr.rel (%p604) target = $region24
        $region23: #{pytorch_cnn_forward.1} parent=11 // pred_region
          _
        $region24: #{pytorch_cnn_forward.1} parent=11 // pred_fallthru
          _
        // Predicated region
        $region25: #{pytorch_cnn_forward.1} parent=11 // pred_check
          %p607 = pneg %p221
        $region26: #{pytorch_cnn_forward.1} parent=11 // pred_check_branch
          %609 = sbr.rel (%p607) target = $region28
        $region27: #{pytorch_cnn_forward.1} parent=11 // pred_region
          _
        $region28: #{pytorch_cnn_forward.1} parent=11 // pred_fallthru
          _
        // Predicated region
        $region29: #{pytorch_cnn_forward.1} parent=11 // pred_check
          %p610 = pneg %p242
        $region30: #{pytorch_cnn_forward.1} parent=11 // pred_check_branch
          %612 = sbr.rel (%p610) target = $region32
        $region31: #{pytorch_cnn_forward.1} parent=11 // pred_region
          _
        $region32: #{pytorch_cnn_forward.1} parent=11 // pred_fallthru
          _
        // Predicated region
        $region33: #{pytorch_cnn_forward.1} parent=11 // pred_check
          %p613 = pneg %p263
        $region34: #{pytorch_cnn_forward.1} parent=11 // pred_check_branch
          %615 = sbr.rel (%p613) target = $region36
        $region35: #{pytorch_cnn_forward.1} parent=11 // pred_region
          _
        $region36: #{pytorch_cnn_forward.1} parent=11 // pred_fallthru
          _
        // Predicated region
        $region37: #{pytorch_cnn_forward.1} parent=11 // pred_check
          %p616 = pneg %p284
        $region38: #{pytorch_cnn_forward.1} parent=11 // pred_check_branch
          %618 = sbr.rel (%p616) target = $region40
        $region39: #{pytorch_cnn_forward.1} parent=11 // pred_region
          _
        $region40: #{pytorch_cnn_forward.1} parent=11 // pred_fallthru
          _
        // Predicated region
        $region41: #{pytorch_cnn_forward.1} parent=11 // pred_check
          %p619 = pneg %p305
        $region42: #{pytorch_cnn_forward.1} parent=11 // pred_check_branch
          %621 = sbr.rel (%p619) target = $region44
        $region43: #{pytorch_cnn_forward.1} parent=11 // pred_region
          _
        $region44: #{pytorch_cnn_forward.1} parent=11 // pred_fallthru
          _
        // Predicated region
        $region45: #{pytorch_cnn_forward.1} parent=11 // pred_check
          %p622 = pneg %p326
        $region46: #{pytorch_cnn_forward.1} parent=11 // pred_check_branch
          %624 = sbr.rel (%p622) target = $region48
        $region47: #{pytorch_cnn_forward.1} parent=11 // pred_region
          _
        $region48: #{pytorch_cnn_forward.1} parent=11 // pred_fallthru
          _
        // Predicated region
        $region49: #{pytorch_cnn_forward.1} parent=11 // pred_check
          %p625 = pneg %p347
        $region50: #{pytorch_cnn_forward.1} parent=11 // pred_check_branch
          %627 = sbr.rel (%p625) target = $region52
        $region51: #{pytorch_cnn_forward.1} parent=11 // pred_region
          _
        $region52: #{pytorch_cnn_forward.1} parent=11 // pred_fallthru
          _
        // Predicated region
        $region53: #{pytorch_cnn_forward.1} parent=11 // pred_check
          %p628 = pneg %p368
        $region54: #{pytorch_cnn_forward.1} parent=11 // pred_check_branch
          %630 = sbr.rel (%p628) target = $region56
        $region55: #{pytorch_cnn_forward.1} parent=11 // pred_region
          _
        $region56: #{pytorch_cnn_forward.1} parent=11 // pred_fallthru
          _
        // Predicated region
        $region57: #{pytorch_cnn_forward.1} parent=11 // pred_check
          %p631 = pneg %p389
        $region58: #{pytorch_cnn_forward.1} parent=11 // pred_check_branch
          %633 = sbr.rel (%p631) target = $region60
        $region59: #{pytorch_cnn_forward.1} parent=11 // pred_region
          _
        $region60: #{pytorch_cnn_forward.1} parent=11 // pred_fallthru
          _
        // Predicated region
        $region61: #{pytorch_cnn_forward.1} parent=11 // pred_check
          %p634 = pneg %p410
        $region62: #{pytorch_cnn_forward.1} parent=11 // pred_check_branch
          %636 = sbr.rel (%p634) target = $region64
        $region63: #{pytorch_cnn_forward.1} parent=11 // pred_region
          _
        $region64: #{pytorch_cnn_forward.1} parent=11 // pred_fallthru
          _
        // Predicated region
        $region65: #{pytorch_cnn_forward.1} parent=11 // pred_check
          %p637 = pneg %p431
        $region66: #{pytorch_cnn_forward.1} parent=11 // pred_check_branch
          %639 = sbr.rel (%p637) target = $region68
        $region67: #{pytorch_cnn_forward.1} parent=11 // pred_region
          _
        $region68: #{pytorch_cnn_forward.1} parent=11 // pred_fallthru
          _
        // Predicated region
        $region69: #{pytorch_cnn_forward.1} parent=11 // pred_check
          %p640 = pneg %p452
        $region70: #{pytorch_cnn_forward.1} parent=11 // pred_check_branch
          %642 = sbr.rel (%p640) target = $region72
        $region71: #{pytorch_cnn_forward.1} parent=11 // pred_region
          _
        $region72: #{pytorch_cnn_forward.1} parent=11 // pred_fallthru
          _
        // Predicated region
        $region73: #{pytorch_cnn_forward.1} parent=11 // pred_check
          %p643 = pneg %p473
        $region74: #{pytorch_cnn_forward.1} parent=11 // pred_check_branch
          %645 = sbr.rel (%p643) target = $region76
        $region75: #{pytorch_cnn_forward.1} parent=11 // pred_region
          _
        $region76: #{pytorch_cnn_forward.1} parent=11 // pred_fallthru
          _
        // Predicated region
        $region77: #{pytorch_cnn_forward.1} parent=11 // pred_check
          %p646 = pneg %p494
        $region78: #{pytorch_cnn_forward.1} parent=11 // pred_check_branch
          %648 = sbr.rel (%p646) target = $region80
        $region79: #{pytorch_cnn_forward.1} parent=11 // pred_region
          _
        $region80: #{pytorch_cnn_forward.1} parent=11 // pred_fallthru
          _
        // Predicated region
        $region81: #{pytorch_cnn_forward.1} parent=11 // pred_check
          %p649 = pneg %p515
        $region82: #{pytorch_cnn_forward.1} parent=11 // pred_check_branch
          %651 = sbr.rel (%p649) target = $region84
        $region83: #{pytorch_cnn_forward.1} parent=11 // pred_region
          %653 = vsyncadd [#allocation4], 0
          %s655 = sshll.u32 %s21, 4
          %s656 = int_to_ptr.vmem [resolvable:$true] %s655
          %658 = dma.vmem_to_smem %s656, 128, [#allocation3], [#allocation4]
        $region84: #{pytorch_cnn_forward.1} parent=11 // pred_fallthru
          _
        // Predicated region
        $region85: #{pytorch_cnn_forward.1} parent=11 // pred_check
          %p659 = pneg %p536
        $region86: #{pytorch_cnn_forward.1} parent=11 // pred_check_branch
          %661 = sbr.rel (%p659) target = $region88
        $region87: #{pytorch_cnn_forward.1} parent=11 // pred_region
          %663 = vsyncadd [#allocation6], 0
          %s665 = sshll.u32 %s22, 4
          %s666 = int_to_ptr.vmem [resolvable:$true] %s665
          %668 = dma.vmem_to_smem %s666, 16, [#allocation5], [#allocation6]
        $region88: #{pytorch_cnn_forward.1} parent=11 // pred_fallthru
          _
        // Predicated region
        $region89: #{pytorch_cnn_forward.1} parent=11 // pred_check
          %p669 = pneg %p557
        $region90: #{pytorch_cnn_forward.1} parent=11 // pred_check_branch
          %671 = sbr.rel (%p669) target = $region92
        $region91: #{pytorch_cnn_forward.1} parent=11 // pred_region
          _
        $region92: #{pytorch_cnn_forward.1} parent=11 // pred_fallthru
          _
      $region12: #{pytorch_cnn_forward.1} parent=5 // pred_fallthru
        _
      %p672 = scmp.lt.s32.totalorder %s33, 2
      // Predicated region
      $region93: #{pytorch_cnn_forward.1} parent=5 // pred_check
        %p673 = pneg %p672
      $region94: #{pytorch_cnn_forward.1} parent=5 // pred_check_branch
        %675 = sbr.rel (%p673) target = $region96
      $region95: #{pytorch_cnn_forward.1} parent=5 // pred_region
        // Predicated region
        $region97: #{pytorch_cnn_forward.1} parent=95 // pred_check
          %p676 = pneg %p53
        $region98: #{pytorch_cnn_forward.1} parent=95 // pred_check_branch
          %678 = sbr.rel (%p676) target = $region100
        $region99: #{pytorch_cnn_forward.1} parent=95 // pred_region
          %p679 = scmp.lt.s32.totalorder %s33, 1
          %s680 = scalar_select %p679, %s33, 1
          %s681 = smul.addr %s680, 6
          %s682 = smul.addr %s681, 8
          %s683 = scalar_lea.vmem %s0, %s682
        $region100: #{pytorch_cnn_forward.1} parent=95 // pred_fallthru
          _
        // Predicated region
        $region101: #{pytorch_cnn_forward.1} parent=95 // pred_check
          %p684 = pneg %p79
        $region102: #{pytorch_cnn_forward.1} parent=95 // pred_check_branch
          %686 = sbr.rel (%p684) target = $region104
        $region103: #{pytorch_cnn_forward.1} parent=95 // pred_region
          %p687 = scmp.lt.s32.totalorder %s33, 1
          %s688 = scalar_select %p687, %s33, 1
          %s689 = smul.addr %s688, 6
          %s690 = smul.addr %s689, 8
          %s691 = scalar_lea.vmem %s1, %s690
        $region104: #{pytorch_cnn_forward.1} parent=95 // pred_fallthru
          _
        // Predicated region
        $region105: #{pytorch_cnn_forward.1} parent=95 // pred_check
          %p692 = pneg %p105
        $region106: #{pytorch_cnn_forward.1} parent=95 // pred_check_branch
          %694 = sbr.rel (%p692) target = $region108
        $region107: #{pytorch_cnn_forward.1} parent=95 // pred_region
          %p695 = scmp.lt.s32.totalorder %s33, 1
          %s696 = scalar_select %p695, %s33, 1
          %s697 = scalar_lea.vmem %s2, %s696
        $region108: #{pytorch_cnn_forward.1} parent=95 // pred_fallthru
          _
        // Predicated region
        $region109: #{pytorch_cnn_forward.1} parent=95 // pred_check
          %p698 = pneg %p131
        $region110: #{pytorch_cnn_forward.1} parent=95 // pred_check_branch
          %700 = sbr.rel (%p698) target = $region112
        $region111: #{pytorch_cnn_forward.1} parent=95 // pred_region
          %p701 = scmp.lt.s32.totalorder %s33, 1
          %s702 = scalar_select %p701, %s33, 1
          %s703 = smul.addr %s702, 2
          %s704 = smul.addr %s703, 8
          %s705 = scalar_lea.vmem %s3, %s704
        $region112: #{pytorch_cnn_forward.1} parent=95 // pred_fallthru
          _
      $region96: #{pytorch_cnn_forward.1} parent=5 // pred_fallthru
        _
      %p706 = scmp.le.s32.totalorder 1, %s33
      %p707 = scmp.lt.s32.totalorder %s33, 3
      %p708 = pnand %p706, %p707
      %p709 = pneg %p708
      // Predicated region
      $region113: #{pytorch_cnn_forward.1} parent=5 // pred_check
        _
      $region114: #{pytorch_cnn_forward.1} parent=5 // pred_check_branch
        %711 = sbr.rel (%p708) target = $region116
      $region115: #{pytorch_cnn_forward.1} parent=5 // pred_region
        %s712 = ssub.s32 %s33, 1
        // Predicated region
        $region117: #{pytorch_cnn_forward.1} parent=115 // pred_check
          %p713 = pneg %p515
        $region118: #{pytorch_cnn_forward.1} parent=115 // pred_check_branch
          %715 = sbr.rel (%p713) target = $region120
        $region119: #{pytorch_cnn_forward.1} parent=115 // pred_region
          %717 = dma.done [#allocation4], 128
        $region120: #{pytorch_cnn_forward.1} parent=115 // pred_fallthru
          _
        // Predicated region
        $region121: #{pytorch_cnn_forward.1} parent=115 // pred_check
          %p718 = pneg %p536
        $region122: #{pytorch_cnn_forward.1} parent=115 // pred_check_branch
          %720 = sbr.rel (%p718) target = $region124
        $region123: #{pytorch_cnn_forward.1} parent=115 // pred_region
          %722 = dma.done [#allocation6], 16
        $region124: #{pytorch_cnn_forward.1} parent=115 // pred_fallthru
          _
        %723 = sfence
        %p724 = scmp.lt.s32.totalorder %s38, 1
        %s725 = scalar_select %p724, %s38, 1
        %s726 = smul.addr %s725, 6
        %s727 = smul.addr %s726, 8
        %s728 = scalar_lea.vmem %s0, %s727
        %p729 = pneg %p59
        %p730 = pneg %p56
        %p731 = scmp.lt.s32.totalorder %s38, 1
        %s732 = scalar_select %p731, %s38, 1
        %s733 = smul.addr %s732, 6
        %s734 = smul.addr %s733, 8
        %s735 = scalar_lea.vmem %s1, %s734
        %p736 = pneg %p85
        %p737 = pneg %p82
        %p738 = scmp.lt.s32.totalorder %s38, 1
        %s739 = scalar_select %p738, %s38, 1
        %s740 = scalar_lea.vmem %s2, %s739
        %p741 = pneg %p111
        %p742 = pneg %p108
        %p743 = scmp.lt.s32.totalorder %s38, 1
        %s744 = scalar_select %p743, %s38, 1
        %s745 = smul.addr %s744, 2
        %s746 = smul.addr %s745, 8
        %s747 = scalar_lea.vmem %s3, %s746
        %p748 = pneg %p137
        %p749 = pneg %p134
        %p750 = pneg %p158
        %p751 = pneg %p155
        %p752 = pneg %p179
        %p753 = pneg %p176
        %p754 = pneg %p200
        %p755 = pneg %p197
        %p756 = pneg %p221
        %p757 = pneg %p218
        %p758 = pneg %p242
        %p759 = pneg %p239
        %p760 = pneg %p263
        %p761 = pneg %p260
        %p762 = pneg %p284
        %p763 = pneg %p281
        %p764 = pneg %p305
        %p765 = pneg %p302
        %p766 = pneg %p326
        %p767 = pneg %p323
        %p768 = pneg %p347
        %p769 = pneg %p344
        %p770 = pneg %p368
        %p771 = pneg %p365
        %p772 = pneg %p389
        %p773 = pneg %p386
        %p774 = pneg %p410
        %p775 = pneg %p407
        %p776 = pneg %p431
        %p777 = pneg %p428
        %p778 = pneg %p452
        %p779 = pneg %p449
        %p780 = pneg %p473
        %p781 = pneg %p470
        %p782 = pneg %p494
        %p783 = pneg %p491
        %p784 = pneg %p515
        %p785 = pneg %p512
        %p786 = pneg %p536
        %p787 = pneg %p533
        %p788 = pneg %p557
        %p789 = pneg %p554
        %p790 = pneg %p583
        %p791 = pneg %p580
        %p792 = scmp.lt.s32.totalorder %s38, 1
        %s793 = scalar_select %p792, %s38, 1
        %s794 = scalar_lea.vmem %s24, %s793
        %p795 = scmp.lt.s32.totalorder %s38, 1
        %s796 = scalar_select %p795, %s38, 1
        %s797 = smul.addr %s796, 6
        %s798 = smul.addr %s797, 8
        %s799 = scalar_lea.vmem %s0, %s798
        %p800 = scmp.lt.s32.totalorder %s38, 1
        %s801 = scalar_select %p800, %s38, 1
        %s802 = smul.addr %s801, 6
        %s803 = smul.addr %s802, 8
        %s804 = scalar_lea.vmem %s1, %s803
        %p805 = scmp.lt.s32.totalorder %s38, 1
        %s806 = scalar_select %p805, %s38, 1
        %s807 = scalar_lea.vmem %s2, %s806
        %p808 = scmp.lt.s32.totalorder %s38, 1
        %s809 = scalar_select %p808, %s38, 1
        %s810 = smul.addr %s809, 2
        %s811 = smul.addr %s810, 8
        %s812 = scalar_lea.vmem %s3, %s811
        %p813 = scmp.lt.s32.totalorder %s38, 1
        %s814 = scalar_select %p813, %s38, 1
        %s815 = scalar_lea.vmem %s24, %s814
        %v817 = vld [vmem:[%s804] sm:$0xff]
        %v818 = vld [vmem:[%s804 + $0x8] sm:$0xff]
        %v819 = vld [vmem:[%s804 + $0x10] sm:$0xff]
        %v820 = vld [vmem:[%s804 + $0x18] sm:$0xff]
        %v821 = vld [vmem:[%s804 + $0x20] sm:$0xff]
        %v822 = vld [vmem:[%s804 + $0x28] sm:$0xff]
        %v823 = vld [vmem:[%s8] sm:$0x7]
        %v824 = vld [vmem:[%s9] sm:$0x7]
        %vm825 = vcmask 359424
        %v827 = vsel %vm825, %v819, 0
        %v830 = vsel %vm825, %v822, 0
        %832 = vmatpush.xpose.msra.mxu0 0.0
        %833 = vmatpush.xpose.msra.mxu0 0.0
        %834 = vmatpush.xpose.msra.mxu0 0.0
        %835 = vmatpush.xpose.msra.mxu0 0.0
        %836 = vmatpush.xpose.msra.mxu0 0.0
        %837 = vmatpush.xpose.msra.mxu0 0.0
        %838 = vmatpush.xpose.msra.mxu0 0.0
        %839 = vmatpush.xpose.msra.mxu0 0.0
        %840 = vmatpush.xpose.msra.mxu0 0.0
        %841 = vmatpush.xpose.msra.mxu0 0.0
        %842 = vmatpush.xpose.msra.mxu0 0.0
        %843 = vmatpush.xpose.msra.mxu0 0.0
        %844 = vmatpush.xpose.msra.mxu0 0.0
        %845 = vmatpush.xpose.msra.mxu0 0.0
        %846 = vmatpush.xpose.msra.mxu0 %v820
        %847 = vmatpush.xpose.msra.mxu0 %v817
        %848 = vmatmul.f32.gmra.mxu0 %v817
        %v849 = vpop.f32.mrf.mxu0
        %v850 = vadd.f32 0.0, %v849
        %851 = vmatmul.f32.gmra.mxu0 %v820
        %v852 = vpop.f32.mrf.mxu0
        %v853 = vadd.f32 0.0, %v852
        %854 = vdwg.mxu0
        %855 = vmatpush.xpose.msra.mxu0 0.0
        %856 = vmatpush.xpose.msra.mxu0 0.0
        %857 = vmatpush.xpose.msra.mxu0 0.0
        %858 = vmatpush.xpose.msra.mxu0 0.0
        %859 = vmatpush.xpose.msra.mxu0 0.0
        %860 = vmatpush.xpose.msra.mxu0 0.0
        %861 = vmatpush.xpose.msra.mxu0 0.0
        %862 = vmatpush.xpose.msra.mxu0 0.0
        %863 = vmatpush.xpose.msra.mxu0 0.0
        %864 = vmatpush.xpose.msra.mxu0 0.0
        %865 = vmatpush.xpose.msra.mxu0 0.0
        %866 = vmatpush.xpose.msra.mxu0 0.0
        %867 = vmatpush.xpose.msra.mxu0 0.0
        %868 = vmatpush.xpose.msra.mxu0 0.0
        %869 = vmatpush.xpose.msra.mxu0 %v821
        %870 = vmatpush.xpose.msra.mxu0 %v818
        %871 = vmatmul.f32.gmra.mxu0 %v818
        %v872 = vpop.f32.mrf.mxu0
        %v873 = vadd.f32 %v850, %v872
        %874 = vmatmul.f32.gmra.mxu0 %v821
        %v875 = vpop.f32.mrf.mxu0
        %v876 = vadd.f32 %v853, %v875
        %877 = vdwg.mxu0
        %878 = vmatpush.xpose.msra.mxu0 0.0
        %879 = vmatpush.xpose.msra.mxu0 0.0
        %880 = vmatpush.xpose.msra.mxu0 0.0
        %881 = vmatpush.xpose.msra.mxu0 0.0
        %882 = vmatpush.xpose.msra.mxu0 0.0
        %883 = vmatpush.xpose.msra.mxu0 0.0
        %884 = vmatpush.xpose.msra.mxu0 0.0
        %885 = vmatpush.xpose.msra.mxu0 0.0
        %886 = vmatpush.xpose.msra.mxu0 0.0
        %887 = vmatpush.xpose.msra.mxu0 0.0
        %888 = vmatpush.xpose.msra.mxu0 0.0
        %889 = vmatpush.xpose.msra.mxu0 0.0
        %890 = vmatpush.xpose.msra.mxu0 0.0
        %891 = vmatpush.xpose.msra.mxu0 0.0
        %892 = vmatpush.xpose.msra.mxu0 %v830
        %893 = vmatpush.xpose.msra.mxu0 %v827
        %894 = vmatmul.f32.gmra.mxu0 %v827
        %v895 = vpop.f32.mrf.mxu0
        %v896 = vadd.f32 %v873, %v895
        %897 = vmatmul.f32.gmra.mxu0 %v830
        %v898 = vpop.f32.mrf.mxu0
        %v899 = vadd.f32 %v876, %v898
        %900 = vdwg.mxu0
        %v901 = vmul.f32 %v896, 0.17677669
        %v902 = vmul.f32 %v899, 0.17677669
        %v903 = vld [vmem:[%s812] sm:$0xff]
        %v904 = vld [vmem:[%s812 + $0x8] sm:$0xff]
        %v905 = vld [vmem:[%s807] sm:$0x1]
        %906 = vset.pattern.permute.xlu0 0
        %907 = vperm.xlu0 %906, %v903
        %v908 = vpop.permute.xlu0 %907
        %909 = vset.pattern.permute.xlu0 0
        %910 = vperm.xlu0 %909, %v904
        %v911 = vpop.permute.xlu0 %910
        %v912 = vperm.slane %v905, 0
        %vm913 = vcmp.eq.s32.totalorder %v908, %v912
        %vm914 = vcmp.eq.s32.totalorder %v911, %v912
        %v915 = vsel %vm913, %v901, -1e+30
        %v916 = vsel %vm914, %v902, -1e+30
        %vm917 = vcmask 130048
        %v918 = vsel %vm917, %v915, -inf
        %919 = vmax.xlane.f32.xlu0 %v918
        %v920 = vpop.xlane.xlu0 %919
        %v921 = vsel %vm917, %v916, -inf
        %922 = vmax.xlane.f32.xlu0 %v921
        %v923 = vpop.xlane.xlu0 %922
        %v924 = vsub.f32 %v915, %v920
        %v925 = vsub.f32 %v916, %v923
        %v926 = vmul.f32 %v924, 1.442695
        %v927 = vpow.pop %v926
        %v928 = vmul.f32 %v925, 1.442695
        %v929 = vpow.pop %v928
        %v930 = vsel %vm917, %v927, 0.0
        %931 = vadd.xlane.f32.xlu0 %v930
        %v932 = vpop.xlane.xlu0 %931
        %v933 = vsel %vm917, %v929, 0.0
        %934 = vadd.xlane.f32.xlu0 %v933
        %v935 = vpop.xlane.xlu0 %934
        %v936 = vrcp.pop %v932
        %v937 = vrcp.pop %v935
        %v938 = vmul.f32 %v927, %v936
        %v939 = vmul.f32 %v929, %v937
        %940 = vxpose.xlu0.b32.start [1/16] %v938, 128
        %941 = vxpose.xlu0.b32.cont [2/16] %v939, 128
        %942 = vxpose.xlu0.b32.cont [3/16] 0.0, 128
        %943 = vxpose.xlu0.b32.cont [4/16] 0.0, 128
        %944 = vxpose.xlu0.b32.cont [5/16] 0.0, 128
        %945 = vxpose.xlu0.b32.cont [6/16] 0.0, 128
        %946 = vxpose.xlu0.b32.cont [7/16] 0.0, 128
        %947 = vxpose.xlu0.b32.cont [8/16] 0.0, 128
        %948 = vxpose.xlu0.b32.cont [9/16] 0.0, 128
        %949 = vxpose.xlu0.b32.cont [10/16] 0.0, 128
        %950 = vxpose.xlu0.b32.cont [11/16] 0.0, 128
        %951 = vxpose.xlu0.b32.cont [12/16] 0.0, 128
        %952 = vxpose.xlu0.b32.cont [13/16] 0.0, 128
        %953 = vxpose.xlu0.b32.cont [14/16] 0.0, 128
        %954 = vxpose.xlu0.b32.cont [15/16] 0.0, 128
        %955 = vxpose.xlu0.b32.end [16/16] 0.0, 128
        %v956 = vpop.trf.xlu0
        %v957 = vpop.trf.xlu0
        %v958 = vpop.trf.xlu0
        %v959 = vpop.trf.xlu0
        %v960 = vpop.trf.xlu0
        %v961 = vpop.trf.xlu0
        %v962 = vpop.trf.xlu0
        %v963 = vpop.trf.xlu0
        %v964 = vpop.trf.xlu0
        %v965 = vpop.trf.xlu0
        %v966 = vpop.trf.xlu0
        %v967 = vpop.trf.xlu0
        %v968 = vpop.trf.xlu0
        %v969 = vpop.trf.xlu0
        %v970 = vpop.trf.xlu0
        %v971 = vpop.trf.xlu0
        %v973 = vsel %vm917, %v956, 0
        %v976 = vsel %vm917, %v957, 0
        %978 = vmatpush.msra.mxu0 0.0
        %979 = vmatpush.msra.mxu0 0.0
        %980 = vmatpush.msra.mxu0 0.0
        %981 = vmatpush.msra.mxu0 0.0
        %982 = vmatpush.msra.mxu0 0.0
        %983 = vmatpush.msra.mxu0 0.0
        %984 = vmatpush.msra.mxu0 0.0
        %985 = vmatpush.msra.mxu0 0.0
        %986 = vmatpush.msra.mxu0 0.0
        %987 = vmatpush.msra.mxu0 0.0
        %988 = vmatpush.msra.mxu0 0.0
        %989 = vmatpush.msra.mxu0 0.0
        %990 = vmatpush.msra.mxu0 0.0
        %991 = vmatpush.msra.mxu0 0.0
        %992 = vmatpush.msra.mxu0 %v820
        %993 = vmatpush.msra.mxu0 %v817
        %994 = vmatmul.f32.gmra.mxu0 %v973
        %v995 = vpop.f32.mrf.mxu0
        %v996 = vadd.f32 0.0, %v995
        %997 = vmatmul.f32.gmra.mxu0 %v976
        %v998 = vpop.f32.mrf.mxu0
        %v999 = vadd.f32 0.0, %v998
        %1000 = vdwg.mxu0
        %1001 = vmatpush.msra.mxu0 0.0
        %1002 = vmatpush.msra.mxu0 0.0
        %1003 = vmatpush.msra.mxu0 0.0
        %1004 = vmatpush.msra.mxu0 0.0
        %1005 = vmatpush.msra.mxu0 0.0
        %1006 = vmatpush.msra.mxu0 0.0
        %1007 = vmatpush.msra.mxu0 0.0
        %1008 = vmatpush.msra.mxu0 0.0
        %1009 = vmatpush.msra.mxu0 0.0
        %1010 = vmatpush.msra.mxu0 0.0
        %1011 = vmatpush.msra.mxu0 0.0
        %1012 = vmatpush.msra.mxu0 0.0
        %1013 = vmatpush.msra.mxu0 0.0
        %1014 = vmatpush.msra.mxu0 0.0
        %1015 = vmatpush.msra.mxu0 %v821
        %1016 = vmatpush.msra.mxu0 %v818
        %1017 = vmatmul.f32.gmra.mxu0 %v973
        %v1018 = vpop.f32.mrf.mxu0
        %v1019 = vadd.f32 0.0, %v1018
        %1020 = vmatmul.f32.gmra.mxu0 %v976
        %v1021 = vpop.f32.mrf.mxu0
        %v1022 = vadd.f32 0.0, %v1021
        %1023 = vdwg.mxu0
        %1024 = vmatpush.msra.mxu0 0.0
        %1025 = vmatpush.msra.mxu0 0.0
        %1026 = vmatpush.msra.mxu0 0.0
        %1027 = vmatpush.msra.mxu0 0.0
        %1028 = vmatpush.msra.mxu0 0.0
        %1029 = vmatpush.msra.mxu0 0.0
        %1030 = vmatpush.msra.mxu0 0.0
        %1031 = vmatpush.msra.mxu0 0.0
        %1032 = vmatpush.msra.mxu0 0.0
        %1033 = vmatpush.msra.mxu0 0.0
        %1034 = vmatpush.msra.mxu0 0.0
        %1035 = vmatpush.msra.mxu0 0.0
        %1036 = vmatpush.msra.mxu0 0.0
        %1037 = vmatpush.msra.mxu0 0.0
        %1038 = vmatpush.msra.mxu0 %v822
        %1039 = vmatpush.msra.mxu0 %v819
        %1040 = vmatmul.f32.gmra.mxu0 %v973
        %v1041 = vpop.f32.mrf.mxu0
        %v1042 = vadd.f32 0.0, %v1041
        %1043 = vmatmul.f32.gmra.mxu0 %v976
        %v1044 = vpop.f32.mrf.mxu0
        %v1045 = vadd.f32 0.0, %v1044
        %1046 = vdwg.mxu0
        %v1047 = vadd.f32 %v817, %v996
        %v1048 = vadd.f32 %v818, %v1019
        %v1049 = vadd.f32 %v819, %v1042
        %v1050 = vadd.f32 %v820, %v999
        %v1051 = vadd.f32 %v821, %v1022
        %v1052 = vadd.f32 %v822, %v1045
        %v1053 = vadd.f32 %v1047, %v1048
        %v1054 = vsel %vm825, %v1049, 0.0
        %v1055 = vadd.f32 %v1053, %v1054
        %1056 = vadd.xlane.f32.xlu0 %v1055
        %v1057 = vpop.xlane.xlu0 %1056
        %v1058 = vadd.f32 %v1050, %v1051
        %v1059 = vsel %vm825, %v1052, 0.0
        %v1060 = vadd.f32 %v1058, %v1059
        %1061 = vadd.xlane.f32.xlu0 %v1060
        %v1062 = vpop.xlane.xlu0 %1061
        %v1063 = vrcp.pop 300.0
        %v1064 = vmul.f32 300.0, %v1063
        %v1065 = vsub.f32 1.0, %v1064
        %v1066 = vmul.f32 %v1063, %v1065
        %v1067 = vadd.f32 %v1063, %v1066
        %vm1068 = vweird.f32 %v1063
        %v1069 = vsel %vm1068, %v1063, %v1067
        %v1070 = vmul.f32 %v1057, %v1069
        %v1071 = vmul.f32 %v1062, %v1069
        %v1072 = vsub.f32 %v1047, %v1070
        %v1073 = vsub.f32 %v1048, %v1070
        %v1074 = vsub.f32 %v1049, %v1070
        %v1075 = vsub.f32 %v1050, %v1071
        %v1076 = vsub.f32 %v1051, %v1071
        %v1077 = vsub.f32 %v1052, %v1071
        %v1078 = vmul.f32 %v1072, %v1072
        %v1079 = vmul.f32 %v1073, %v1073
        %v1080 = vmul.f32 %v1074, %v1074
        %v1081 = vmul.f32 %v1075, %v1075
        %v1082 = vmul.f32 %v1076, %v1076
        %v1083 = vmul.f32 %v1077, %v1077
        %v1084 = vadd.f32 %v1078, %v1079
        %v1085 = vsel %vm825, %v1080, 0.0
        %v1086 = vadd.f32 %v1084, %v1085
        %1087 = vadd.xlane.f32.xlu0 %v1086
        %v1088 = vpop.xlane.xlu0 %1087
        %v1089 = vadd.f32 %v1081, %v1082
        %v1090 = vsel %vm825, %v1083, 0.0
        %v1091 = vadd.f32 %v1089, %v1090
        %1092 = vadd.xlane.f32.xlu0 %v1091
        %v1093 = vpop.xlane.xlu0 %1092
        %v1094 = vmul.f32 %v1088, %v1069
        %v1095 = vmul.f32 %v1093, %v1069
        %v1096 = vadd.f32 %v1094, 1e-05
        %v1097 = vadd.f32 %v1095, 1e-05
        %v1098 = vrsqrt.pop %v1096
        %v1099 = vmul.f32 %v1098, %v1096
        %v1100 = vmul.f32 %v1099, %v1098
        %v1101 = vmul.f32 0.5, %v1100
        %v1102 = vsub.f32 1.5, %v1101
        %v1103 = vmul.f32 %v1098, %v1102
        %vm1104 = vweird.f32 %v1096
        %vm1105 = vweird.f32 %v1098
        %vm1106 = vmor %vm1104, %vm1105
        %v1107 = vsel %vm1106, %v1098, %v1103
        %v1108 = vrsqrt.pop %v1097
        %v1109 = vmul.f32 %v1108, %v1097
        %v1110 = vmul.f32 %v1109, %v1108
        %v1111 = vmul.f32 0.5, %v1110
        %v1112 = vsub.f32 1.5, %v1111
        %v1113 = vmul.f32 %v1108, %v1112
        %vm1114 = vweird.f32 %v1097
        %vm1115 = vweird.f32 %v1108
        %vm1116 = vmor %vm1114, %vm1115
        %v1117 = vsel %vm1116, %v1108, %v1113
        %v1118 = vmul.f32 %v1072, %v1107
        %v1119 = vmul.f32 %v1073, %v1107
        %v1120 = vmul.f32 %v1074, %v1107
        %v1121 = vmul.f32 %v1075, %v1117
        %v1122 = vmul.f32 %v1076, %v1117
        %v1123 = vmul.f32 %v1077, %v1117
        %v1125 = vperm.slane %v823, 0
        %v1126 = vperm.slane %v823, 1
        %v1127 = vperm.slane %v823, 2
        %v1131 = vmul.f32 %v1118, %v1125
        %v1132 = vmul.f32 %v1119, %v1126
        %v1133 = vmul.f32 %v1120, %v1127
        %v1134 = vmul.f32 %v1121, %v1125
        %v1135 = vmul.f32 %v1122, %v1126
        %v1136 = vmul.f32 %v1123, %v1127
        %v1138 = vperm.slane %v824, 0
        %v1139 = vperm.slane %v824, 1
        %v1140 = vperm.slane %v824, 2
        %v1144 = vadd.f32 %v1131, %v1138
        %v1145 = vadd.f32 %v1132, %v1139
        %v1146 = vadd.f32 %v1133, %v1140
        %v1147 = vadd.f32 %v1134, %v1138
        %v1148 = vadd.f32 %v1135, %v1139
        %v1149 = vadd.f32 %v1136, %v1140
        %v1150 = vpack.c.bf16 %v1147, %v1144
        %v1151 = vpack.c.bf16 %v1148, %v1145
        %v1152 = vpack.c.bf16 %v1149, %v1146
        %v1153 = vld [vmem:[%s4] sm:$0xff]
        %v1154 = vld [vmem:[%s4 + $0x8] sm:$0xff]
        %v1155 = vld [vmem:[%s4 + $0x10] sm:$0xff]
        %v1156 = vld [vmem:[%s4 + $0x18] sm:$0xff]
        %v1157 = vld [vmem:[%s4 + $0x20] sm:$0xff]
        %v1158 = vld [vmem:[%s4 + $0x28] sm:$0xff]
        %v1159 = vld [vmem:[%s4 + $0x30] sm:$0xff]
        %v1160 = vld [vmem:[%s4 + $0x38] sm:$0xff]
        %v1161 = vld [vmem:[%s4 + $0x40] sm:$0xff]
        %v1162 = vld [vmem:[%s4 + $0x48] sm:$0xff]
        %v1163 = vld [vmem:[%s4 + $0x50] sm:$0xff]
        %v1164 = vld [vmem:[%s4 + $0x58] sm:$0xff]
        %v1165 = vld [vmem:[%s4 + $0x60] sm:$0xff]
        %v1166 = vld [vmem:[%s4 + $0x68] sm:$0xff]
        %v1167 = vld [vmem:[%s4 + $0x70] sm:$0xff]
        %v1168 = vld [vmem:[%s4 + $0x78] sm:$0xff]
        %v1169 = vld [vmem:[%s4 + $0x80] sm:$0xff]
        %v1170 = vld [vmem:[%s4 + $0x88] sm:$0xff]
        %v1171 = vld [vmem:[%s4 + $0x90] sm:$0xff]
        %v1172 = vld [vmem:[%s4 + $0x98] sm:$0xff]
        %v1173 = vld [vmem:[%s4 + $0xa0] sm:$0xff]
        %v1174 = vld [vmem:[%s4 + $0xa8] sm:$0xff]
        %v1175 = vld [vmem:[%s4 + $0xb0] sm:$0xff]
        %v1176 = vld [vmem:[%s4 + $0xb8] sm:$0xff]
        %v1177 = vld [vmem:[%s4 + $0xc0] sm:$0xff]
        %v1178 = vld [vmem:[%s4 + $0xc8] sm:$0xff]
        %v1179 = vld [vmem:[%s4 + $0xd0] sm:$0xff]
        %v1180 = vld [vmem:[%s4 + $0xd8] sm:$0xff]
        %v1181 = vld [vmem:[%s4 + $0xe0] sm:$0xff]
        %v1182 = vld [vmem:[%s4 + $0xe8] sm:$0xff]
        %v1183 = vld [vmem:[%s4 + $0xf0] sm:$0xff]
        %v1184 = vld [vmem:[%s4 + $0xf8] sm:$0xff]
        %v1185 = vld [vmem:[%s4 + $0x100] sm:$0xff]
        %v1186 = vld [vmem:[%s4 + $0x108] sm:$0xff]
        %v1187 = vld [vmem:[%s4 + $0x110] sm:$0xff]
        %v1188 = vld [vmem:[%s4 + $0x118] sm:$0xff]
        %v1189 = vld [vmem:[%s4 + $0x120] sm:$0xff]
        %v1190 = vld [vmem:[%s4 + $0x128] sm:$0xff]
        %v1191 = vld [vmem:[%s4 + $0x130] sm:$0xff]
        %v1192 = vld [vmem:[%s4 + $0x138] sm:$0xff]
        %v1193 = vld [vmem:[%s4 + $0x140] sm:$0xff]
        %v1194 = vld [vmem:[%s4 + $0x148] sm:$0xff]
        %v1195 = vld [vmem:[%s4 + $0x150] sm:$0xff]
        %v1196 = vld [vmem:[%s4 + $0x158] sm:$0xff]
        %v1197 = vld [vmem:[%s4 + $0x160] sm:$0xff]
        %v1198 = vld [vmem:[%s4 + $0x168] sm:$0xff]
        %v1199 = vld [vmem:[%s4 + $0x170] sm:$0xff]
        %v1200 = vld [vmem:[%s4 + $0x178] sm:$0xff]
        %v1201 = vld [vmem:[%s4 + $0x180] sm:$0xff]
        %v1202 = vld [vmem:[%s4 + $0x188] sm:$0xff]
        %v1203 = vld [vmem:[%s4 + $0x190] sm:$0xff]
        %v1204 = vld [vmem:[%s4 + $0x198] sm:$0xff]
        %v1205 = vld [vmem:[%s4 + $0x1a0] sm:$0xff]
        %v1206 = vld [vmem:[%s4 + $0x1a8] sm:$0xff]
        %v1207 = vld [vmem:[%s4 + $0x1b0] sm:$0xff]
        %v1208 = vld [vmem:[%s4 + $0x1b8] sm:$0xff]
        %v1209 = vld [vmem:[%s4 + $0x1c0] sm:$0xff]
        %v1210 = vld [vmem:[%s4 + $0x1c8] sm:$0xff]
        %v1211 = vld [vmem:[%s4 + $0x1d0] sm:$0xff]
        %v1212 = vld [vmem:[%s4 + $0x1d8] sm:$0xff]
        %v1213 = vld [vmem:[%s4 + $0x1e0] sm:$0xff]
        %v1214 = vld [vmem:[%s4 + $0x1e8] sm:$0xff]
        %v1215 = vld [vmem:[%s4 + $0x1f0] sm:$0xff]
        %v1216 = vld [vmem:[%s4 + $0x1f8] sm:$0xff]
        %v1217 = vld [vmem:[%s4 + $0x200] sm:$0xff]
        %v1218 = vld [vmem:[%s4 + $0x208] sm:$0xff]
        %v1219 = vld [vmem:[%s4 + $0x210] sm:$0xff]
        %v1220 = vld [vmem:[%s4 + $0x218] sm:$0xff]
        %v1221 = vld [vmem:[%s4 + $0x220] sm:$0xff]
        %v1222 = vld [vmem:[%s4 + $0x228] sm:$0xff]
        %v1223 = vld [vmem:[%s4 + $0x230] sm:$0xff]
        %v1224 = vld [vmem:[%s4 + $0x238] sm:$0xff]
        %v1225 = vld [vmem:[%s4 + $0x240] sm:$0xff]
        %v1226 = vld [vmem:[%s4 + $0x248] sm:$0xff]
        %v1227 = vld [vmem:[%s4 + $0x250] sm:$0x33]
        %v1228 = vld [vmem:[%s4 + $0x258] sm:$0x33]
        %v1229 = vld [vmem:[%s5] sm:$0xf]
        %v1231 = vperm.slane %v1229, 0
        %v1232 = vperm.slane %v1229, 1
        %v1233 = vperm.slane %v1229, 2
        %v1234 = vperm.slane %v1229, 3
        %v1315 = vunpack.c.l.b16 %v1153
        %v1316 = vunpack.c.h.b16 %v1153
        %v1317 = vunpack.c.l.b16 %v1154
        %v1318 = vunpack.c.h.b16 %v1154
        %v1319 = vunpack.c.l.b16 %v1155
        %v1320 = vunpack.c.h.b16 %v1155
        %v1321 = vunpack.c.l.b16 %v1156
        %v1322 = vunpack.c.h.b16 %v1156
        %v1323 = vunpack.c.l.b16 %v1157
        %v1324 = vunpack.c.h.b16 %v1157
        %v1325 = vunpack.c.l.b16 %v1158
        %v1326 = vunpack.c.h.b16 %v1158
        %v1327 = vunpack.c.l.b16 %v1159
        %v1328 = vunpack.c.h.b16 %v1159
        %v1329 = vunpack.c.l.b16 %v1160
        %v1330 = vunpack.c.h.b16 %v1160
        %v1331 = vunpack.c.l.b16 %v1161
        %v1332 = vunpack.c.h.b16 %v1161
        %v1333 = vunpack.c.l.b16 %v1162
        %v1334 = vunpack.c.h.b16 %v1162
        %v1335 = vunpack.c.l.b16 %v1163
        %v1336 = vunpack.c.h.b16 %v1163
        %v1337 = vunpack.c.l.b16 %v1164
        %v1338 = vunpack.c.h.b16 %v1164
        %v1339 = vunpack.c.l.b16 %v1165
        %v1340 = vunpack.c.h.b16 %v1165
        %v1341 = vunpack.c.l.b16 %v1166
        %v1342 = vunpack.c.h.b16 %v1166
        %v1343 = vunpack.c.l.b16 %v1167
        %v1344 = vunpack.c.h.b16 %v1167
        %v1345 = vunpack.c.l.b16 %v1168
        %v1346 = vunpack.c.h.b16 %v1168
        %v1347 = vunpack.c.l.b16 %v1169
        %v1348 = vunpack.c.h.b16 %v1169
        %v1349 = vunpack.c.l.b16 %v1170
        %v1350 = vunpack.c.h.b16 %v1170
        %v1351 = vunpack.c.l.b16 %v1171
        %v1352 = vunpack.c.h.b16 %v1171
        %v1353 = vunpack.c.l.b16 %v1172
        %v1354 = vunpack.c.h.b16 %v1172
        %v1355 = vunpack.c.l.b16 %v1173
        %v1356 = vunpack.c.h.b16 %v1173
        %v1357 = vunpack.c.l.b16 %v1174
        %v1358 = vunpack.c.h.b16 %v1174
        %v1359 = vunpack.c.l.b16 %v1175
        %v1360 = vunpack.c.h.b16 %v1175
        %v1361 = vunpack.c.l.b16 %v1176
        %v1362 = vunpack.c.h.b16 %v1176
        %v1363 = vunpack.c.l.b16 %v1177
        %v1364 = vunpack.c.h.b16 %v1177
        %v1365 = vunpack.c.l.b16 %v1178
        %v1366 = vunpack.c.h.b16 %v1178
        %v1367 = vunpack.c.l.b16 %v1179
        %v1368 = vunpack.c.h.b16 %v1179
        %v1369 = vunpack.c.l.b16 %v1180
        %v1370 = vunpack.c.h.b16 %v1180
        %v1371 = vunpack.c.l.b16 %v1181
        %v1372 = vunpack.c.h.b16 %v1181
        %v1373 = vunpack.c.l.b16 %v1182
        %v1374 = vunpack.c.h.b16 %v1182
        %v1375 = vunpack.c.l.b16 %v1183
        %v1376 = vunpack.c.h.b16 %v1183
        %v1377 = vunpack.c.l.b16 %v1184
        %v1378 = vunpack.c.h.b16 %v1184
        %v1379 = vunpack.c.l.b16 %v1185
        %v1380 = vunpack.c.h.b16 %v1185
        %v1381 = vunpack.c.l.b16 %v1186
        %v1382 = vunpack.c.h.b16 %v1186
        %v1383 = vunpack.c.l.b16 %v1187
        %v1384 = vunpack.c.h.b16 %v1187
        %v1385 = vunpack.c.l.b16 %v1188
        %v1386 = vunpack.c.h.b16 %v1188
        %v1387 = vunpack.c.l.b16 %v1189
        %v1388 = vunpack.c.h.b16 %v1189
        %v1389 = vunpack.c.l.b16 %v1190
        %v1390 = vunpack.c.h.b16 %v1190
        %v1391 = vunpack.c.l.b16 %v1191
        %v1392 = vunpack.c.h.b16 %v1191
        %v1393 = vunpack.c.l.b16 %v1192
        %v1394 = vunpack.c.h.b16 %v1192
        %v1395 = vunpack.c.l.b16 %v1193
        %v1396 = vunpack.c.h.b16 %v1193
        %v1397 = vunpack.c.l.b16 %v1194
        %v1398 = vunpack.c.h.b16 %v1194
        %v1399 = vunpack.c.l.b16 %v1195
        %v1400 = vunpack.c.h.b16 %v1195
        %v1401 = vunpack.c.l.b16 %v1196
        %v1402 = vunpack.c.h.b16 %v1196
        %v1403 = vunpack.c.l.b16 %v1197
        %v1404 = vunpack.c.h.b16 %v1197
        %v1405 = vunpack.c.l.b16 %v1198
        %v1406 = vunpack.c.h.b16 %v1198
        %v1407 = vunpack.c.l.b16 %v1199
        %v1408 = vunpack.c.h.b16 %v1199
        %v1409 = vunpack.c.l.b16 %v1200
        %v1410 = vunpack.c.h.b16 %v1200
        %v1411 = vunpack.c.l.b16 %v1201
        %v1412 = vunpack.c.h.b16 %v1201
        %v1413 = vunpack.c.l.b16 %v1202
        %v1414 = vunpack.c.h.b16 %v1202
        %v1415 = vunpack.c.l.b16 %v1203
        %v1416 = vunpack.c.h.b16 %v1203
        %v1417 = vunpack.c.l.b16 %v1204
        %v1418 = vunpack.c.h.b16 %v1204
        %v1419 = vunpack.c.l.b16 %v1205
        %v1420 = vunpack.c.h.b16 %v1205
        %v1421 = vunpack.c.l.b16 %v1206
        %v1422 = vunpack.c.h.b16 %v1206
        %v1423 = vunpack.c.l.b16 %v1207
        %v1424 = vunpack.c.h.b16 %v1207
        %v1425 = vunpack.c.l.b16 %v1208
        %v1426 = vunpack.c.h.b16 %v1208
        %v1427 = vunpack.c.l.b16 %v1209
        %v1428 = vunpack.c.h.b16 %v1209
        %v1429 = vunpack.c.l.b16 %v1210
        %v1430 = vunpack.c.h.b16 %v1210
        %v1431 = vunpack.c.l.b16 %v1211
        %v1432 = vunpack.c.h.b16 %v1211
        %v1433 = vunpack.c.l.b16 %v1212
        %v1434 = vunpack.c.h.b16 %v1212
        %v1435 = vunpack.c.l.b16 %v1213
        %v1436 = vunpack.c.h.b16 %v1213
        %v1437 = vunpack.c.l.b16 %v1214
        %v1438 = vunpack.c.h.b16 %v1214
        %v1439 = vunpack.c.l.b16 %v1215
        %v1440 = vunpack.c.h.b16 %v1215
        %v1441 = vunpack.c.l.b16 %v1216
        %v1442 = vunpack.c.h.b16 %v1216
        %v1443 = vunpack.c.l.b16 %v1217
        %v1444 = vunpack.c.h.b16 %v1217
        %v1445 = vunpack.c.l.b16 %v1218
        %v1446 = vunpack.c.h.b16 %v1218
        %v1447 = vunpack.c.l.b16 %v1219
        %v1448 = vunpack.c.h.b16 %v1219
        %v1449 = vunpack.c.l.b16 %v1220
        %v1450 = vunpack.c.h.b16 %v1220
        %v1451 = vunpack.c.l.b16 %v1221
        %v1452 = vunpack.c.h.b16 %v1221
        %v1453 = vunpack.c.l.b16 %v1222
        %v1454 = vunpack.c.h.b16 %v1222
        %v1455 = vunpack.c.l.b16 %v1223
        %v1456 = vunpack.c.h.b16 %v1223
        %v1457 = vunpack.c.l.b16 %v1224
        %v1458 = vunpack.c.h.b16 %v1224
        %v1459 = vunpack.c.l.b16 %v1225
        %v1460 = vunpack.c.h.b16 %v1225
        %v1461 = vunpack.c.l.b16 %v1226
        %v1462 = vunpack.c.h.b16 %v1226
        %v1463 = vunpack.c.l.b16 %v1227
        %v1464 = vunpack.c.h.b16 %v1227
        %v1465 = vunpack.c.l.b16 %v1228
        %v1466 = vunpack.c.h.b16 %v1228
        %v1467 = vpack.c.b16 %v1319, %v1315
        %v1468 = vpack.c.b16 %v1320, %v1316
        %v1469 = vpack.c.b16 %v1321, %v1317
        %v1470 = vpack.c.b16 %v1322, %v1318
        %v1471 = vpack.c.b16 %v1327, %v1323
        %v1472 = vpack.c.b16 %v1328, %v1324
        %v1473 = vpack.c.b16 %v1329, %v1325
        %v1474 = vpack.c.b16 %v1330, %v1326
        %v1475 = vpack.c.b16 %v1335, %v1331
        %v1476 = vpack.c.b16 %v1336, %v1332
        %v1477 = vpack.c.b16 %v1337, %v1333
        %v1478 = vpack.c.b16 %v1338, %v1334
        %v1479 = vpack.c.b16 %v1343, %v1339
        %v1480 = vpack.c.b16 %v1344, %v1340
        %v1481 = vpack.c.b16 %v1345, %v1341
        %v1482 = vpack.c.b16 %v1346, %v1342
        %v1483 = vpack.c.b16 %v1351, %v1347
        %v1484 = vpack.c.b16 %v1352, %v1348
        %v1485 = vpack.c.b16 %v1353, %v1349
        %v1486 = vpack.c.b16 %v1354, %v1350
        %v1487 = vpack.c.b16 %v1359, %v1355
        %v1488 = vpack.c.b16 %v1360, %v1356
        %v1489 = vpack.c.b16 %v1361, %v1357
        %v1490 = vpack.c.b16 %v1362, %v1358
        %v1491 = vpack.c.b16 %v1367, %v1363
        %v1492 = vpack.c.b16 %v1368, %v1364
        %v1493 = vpack.c.b16 %v1369, %v1365
        %v1494 = vpack.c.b16 %v1370, %v1366
        %v1495 = vpack.c.b16 %v1375, %v1371
        %v1496 = vpack.c.b16 %v1376, %v1372
        %v1497 = vpack.c.b16 %v1377, %v1373
        %v1498 = vpack.c.b16 %v1378, %v1374
        %v1499 = vpack.c.b16 %v1383, %v1379
        %v1500 = vpack.c.b16 %v1384, %v1380
        %v1501 = vpack.c.b16 %v1385, %v1381
        %v1502 = vpack.c.b16 %v1386, %v1382
        %v1503 = vpack.c.b16 %v1391, %v1387
        %v1504 = vpack.c.b16 %v1392, %v1388
        %v1505 = vpack.c.b16 %v1393, %v1389
        %v1506 = vpack.c.b16 %v1394, %v1390
        %v1507 = vpack.c.b16 %v1399, %v1395
        %v1508 = vpack.c.b16 %v1400, %v1396
        %v1509 = vpack.c.b16 %v1401, %v1397
        %v1510 = vpack.c.b16 %v1402, %v1398
        %v1511 = vpack.c.b16 %v1407, %v1403
        %v1512 = vpack.c.b16 %v1408, %v1404
        %v1513 = vpack.c.b16 %v1409, %v1405
        %v1514 = vpack.c.b16 %v1410, %v1406
        %v1515 = vpack.c.b16 %v1415, %v1411
        %v1516 = vpack.c.b16 %v1416, %v1412
        %v1517 = vpack.c.b16 %v1417, %v1413
        %v1518 = vpack.c.b16 %v1418, %v1414
        %v1519 = vpack.c.b16 %v1423, %v1419
        %v1520 = vpack.c.b16 %v1424, %v1420
        %v1521 = vpack.c.b16 %v1425, %v1421
        %v1522 = vpack.c.b16 %v1426, %v1422
        %v1523 = vpack.c.b16 %v1431, %v1427
        %v1524 = vpack.c.b16 %v1432, %v1428
        %v1525 = vpack.c.b16 %v1433, %v1429
        %v1526 = vpack.c.b16 %v1434, %v1430
        %v1527 = vpack.c.b16 %v1439, %v1435
        %v1528 = vpack.c.b16 %v1440, %v1436
        %v1529 = vpack.c.b16 %v1441, %v1437
        %v1530 = vpack.c.b16 %v1442, %v1438
        %v1531 = vpack.c.b16 %v1447, %v1443
        %v1532 = vpack.c.b16 %v1448, %v1444
        %v1533 = vpack.c.b16 %v1449, %v1445
        %v1534 = vpack.c.b16 %v1450, %v1446
        %v1535 = vpack.c.b16 %v1455, %v1451
        %v1536 = vpack.c.b16 %v1456, %v1452
        %v1537 = vpack.c.b16 %v1457, %v1453
        %v1538 = vpack.c.b16 %v1458, %v1454
        %v1539 = vpack.c.b16 %v1463, %v1459
        %v1540 = vpack.c.b16 %v1464, %v1460
        %v1541 = vpack.c.b16 %v1465, %v1461
        %v1542 = vpack.c.b16 %v1466, %v1462
        %v1616 = vsel %vm825, %v1152, 0
        %vm1618 = vcmask 1045504
        %v1620 = vsel %vm1618, %v1539, 0
        %v1623 = vsel %vm1618, %v1540, 0
        %v1626 = vsel %vm1618, %v1541, 0
        %v1629 = vsel %vm1618, %v1542, 0
        %1631 = vmatpush.bf16.msra.mxu0 %v1495
        %1632 = vmatpush.bf16.msra.mxu0 %v1491
        %1633 = vmatpush.bf16.msra.mxu0 %v1487
        %1634 = vmatpush.bf16.msra.mxu0 %v1483
        %1635 = vmatpush.bf16.msra.mxu0 %v1479
        %1636 = vmatpush.bf16.msra.mxu0 %v1475
        %1637 = vmatpush.bf16.msra.mxu0 %v1471
        %1638 = vmatpush.bf16.msra.mxu0 %v1467
        %1639 = vmatmul.bf16.gmra.mxu0 %v1150
        %v1640 = vpop.f32.mrf.mxu0
        %v1641 = vadd.f32 %v1231, %v1640
        %v1642 = vpop.f32.mrf.mxu0
        %v1643 = vadd.f32 %v1231, %v1642
        %1644 = vdwg.mxu0
        %1645 = vmatpush.bf16.msra.mxu0 %v1527
        %1646 = vmatpush.bf16.msra.mxu0 %v1523
        %1647 = vmatpush.bf16.msra.mxu0 %v1519
        %1648 = vmatpush.bf16.msra.mxu0 %v1515
        %1649 = vmatpush.bf16.msra.mxu0 %v1511
        %1650 = vmatpush.bf16.msra.mxu0 %v1507
        %1651 = vmatpush.bf16.msra.mxu0 %v1503
        %1652 = vmatpush.bf16.msra.mxu0 %v1499
        %1653 = vmatmul.bf16.gmra.mxu0 %v1151
        %v1654 = vpop.f32.mrf.mxu0
        %v1655 = vadd.f32 %v1641, %v1654
        %v1656 = vpop.f32.mrf.mxu0
        %v1657 = vadd.f32 %v1643, %v1656
        %1658 = vdwg.mxu0
        %1659 = vmatpush.bf16.msra.mxu0 0
        %1660 = vmatpush.bf16.msra.mxu0 0
        %1661 = vmatpush.bf16.msra.mxu0 0
        %1662 = vmatpush.bf16.msra.mxu0 0
        %1663 = vmatpush.bf16.msra.mxu0 0
        %1664 = vmatpush.bf16.msra.mxu0 %v1620
        %1665 = vmatpush.bf16.msra.mxu0 %v1535
        %1666 = vmatpush.bf16.msra.mxu0 %v1531
        %1667 = vmatmul.bf16.gmra.mxu0 %v1616
        %v1668 = vpop.f32.mrf.mxu0
        %v1669 = vadd.f32 %v1655, %v1668
        %v1670 = vpop.f32.mrf.mxu0
        %v1671 = vadd.f32 %v1657, %v1670
        %1672 = vdwg.mxu0
        %1673 = vmatpush.bf16.msra.mxu0 %v1496
        %1674 = vmatpush.bf16.msra.mxu0 %v1492
        %1675 = vmatpush.bf16.msra.mxu0 %v1488
        %1676 = vmatpush.bf16.msra.mxu0 %v1484
        %1677 = vmatpush.bf16.msra.mxu0 %v1480
        %1678 = vmatpush.bf16.msra.mxu0 %v1476
        %1679 = vmatpush.bf16.msra.mxu0 %v1472
        %1680 = vmatpush.bf16.msra.mxu0 %v1468
        %1681 = vmatmul.bf16.gmra.mxu0 %v1150
        %v1682 = vpop.f32.mrf.mxu0
        %v1683 = vadd.f32 %v1232, %v1682
        %v1684 = vpop.f32.mrf.mxu0
        %v1685 = vadd.f32 %v1232, %v1684
        %1686 = vdwg.mxu0
        %1687 = vmatpush.bf16.msra.mxu0 %v1528
        %1688 = vmatpush.bf16.msra.mxu0 %v1524
        %1689 = vmatpush.bf16.msra.mxu0 %v1520
        %1690 = vmatpush.bf16.msra.mxu0 %v1516
        %1691 = vmatpush.bf16.msra.mxu0 %v1512
        %1692 = vmatpush.bf16.msra.mxu0 %v1508
        %1693 = vmatpush.bf16.msra.mxu0 %v1504
        %1694 = vmatpush.bf16.msra.mxu0 %v1500
        %1695 = vmatmul.bf16.gmra.mxu0 %v1151
        %v1696 = vpop.f32.mrf.mxu0
        %v1697 = vadd.f32 %v1683, %v1696
        %v1698 = vpop.f32.mrf.mxu0
        %v1699 = vadd.f32 %v1685, %v1698
        %1700 = vdwg.mxu0
        %1701 = vmatpush.bf16.msra.mxu0 0
        %1702 = vmatpush.bf16.msra.mxu0 0
        %1703 = vmatpush.bf16.msra.mxu0 0
        %1704 = vmatpush.bf16.msra.mxu0 0
        %1705 = vmatpush.bf16.msra.mxu0 0
        %1706 = vmatpush.bf16.msra.mxu0 %v1623
        %1707 = vmatpush.bf16.msra.mxu0 %v1536
        %1708 = vmatpush.bf16.msra.mxu0 %v1532
        %1709 = vmatmul.bf16.gmra.mxu0 %v1616
        %v1710 = vpop.f32.mrf.mxu0
        %v1711 = vadd.f32 %v1697, %v1710
        %v1712 = vpop.f32.mrf.mxu0
        %v1713 = vadd.f32 %v1699, %v1712
        %1714 = vdwg.mxu0
        %1715 = vmatpush.bf16.msra.mxu0 %v1497
        %1716 = vmatpush.bf16.msra.mxu0 %v1493
        %1717 = vmatpush.bf16.msra.mxu0 %v1489
        %1718 = vmatpush.bf16.msra.mxu0 %v1485
        %1719 = vmatpush.bf16.msra.mxu0 %v1481
        %1720 = vmatpush.bf16.msra.mxu0 %v1477
        %1721 = vmatpush.bf16.msra.mxu0 %v1473
        %1722 = vmatpush.bf16.msra.mxu0 %v1469
        %1723 = vmatmul.bf16.gmra.mxu0 %v1150
        %v1724 = vpop.f32.mrf.mxu0
        %v1725 = vadd.f32 %v1233, %v1724
        %v1726 = vpop.f32.mrf.mxu0
        %v1727 = vadd.f32 %v1233, %v1726
        %1728 = vdwg.mxu0
        %1729 = vmatpush.bf16.msra.mxu0 %v1529
        %1730 = vmatpush.bf16.msra.mxu0 %v1525
        %1731 = vmatpush.bf16.msra.mxu0 %v1521
        %1732 = vmatpush.bf16.msra.mxu0 %v1517
        %1733 = vmatpush.bf16.msra.mxu0 %v1513
        %1734 = vmatpush.bf16.msra.mxu0 %v1509
        %1735 = vmatpush.bf16.msra.mxu0 %v1505
        %1736 = vmatpush.bf16.msra.mxu0 %v1501
        %1737 = vmatmul.bf16.gmra.mxu0 %v1151
        %v1738 = vpop.f32.mrf.mxu0
        %v1739 = vadd.f32 %v1725, %v1738
        %v1740 = vpop.f32.mrf.mxu0
        %v1741 = vadd.f32 %v1727, %v1740
        %1742 = vdwg.mxu0
        %1743 = vmatpush.bf16.msra.mxu0 0
        %1744 = vmatpush.bf16.msra.mxu0 0
        %1745 = vmatpush.bf16.msra.mxu0 0
        %1746 = vmatpush.bf16.msra.mxu0 0
        %1747 = vmatpush.bf16.msra.mxu0 0
        %1748 = vmatpush.bf16.msra.mxu0 %v1626
        %1749 = vmatpush.bf16.msra.mxu0 %v1537
        %1750 = vmatpush.bf16.msra.mxu0 %v1533
        %1751 = vmatmul.bf16.gmra.mxu0 %v1616
        %v1752 = vpop.f32.mrf.mxu0
        %v1753 = vadd.f32 %v1739, %v1752
        %v1754 = vpop.f32.mrf.mxu0
        %v1755 = vadd.f32 %v1741, %v1754
        %1756 = vdwg.mxu0
        %1757 = vmatpush.bf16.msra.mxu0 %v1498
        %1758 = vmatpush.bf16.msra.mxu0 %v1494
        %1759 = vmatpush.bf16.msra.mxu0 %v1490
        %1760 = vmatpush.bf16.msra.mxu0 %v1486
        %1761 = vmatpush.bf16.msra.mxu0 %v1482
        %1762 = vmatpush.bf16.msra.mxu0 %v1478
        %1763 = vmatpush.bf16.msra.mxu0 %v1474
        %1764 = vmatpush.bf16.msra.mxu0 %v1470
        %1765 = vmatmul.bf16.gmra.mxu0 %v1150
        %v1766 = vpop.f32.mrf.mxu0
        %v1767 = vadd.f32 %v1234, %v1766
        %v1768 = vpop.f32.mrf.mxu0
        %v1769 = vadd.f32 %v1234, %v1768
        %1770 = vdwg.mxu0
        %1771 = vmatpush.bf16.msra.mxu0 %v1530
        %1772 = vmatpush.bf16.msra.mxu0 %v1526
        %1773 = vmatpush.bf16.msra.mxu0 %v1522
        %1774 = vmatpush.bf16.msra.mxu0 %v1518
        %1775 = vmatpush.bf16.msra.mxu0 %v1514
        %1776 = vmatpush.bf16.msra.mxu0 %v1510
        %1777 = vmatpush.bf16.msra.mxu0 %v1506
        %1778 = vmatpush.bf16.msra.mxu0 %v1502
        %1779 = vmatmul.bf16.gmra.mxu0 %v1151
        %v1780 = vpop.f32.mrf.mxu0
        %v1781 = vadd.f32 %v1767, %v1780
        %v1782 = vpop.f32.mrf.mxu0
        %v1783 = vadd.f32 %v1769, %v1782
        %1784 = vdwg.mxu0
        %1785 = vmatpush.bf16.msra.mxu0 0
        %1786 = vmatpush.bf16.msra.mxu0 0
        %1787 = vmatpush.bf16.msra.mxu0 0
        %1788 = vmatpush.bf16.msra.mxu0 0
        %1789 = vmatpush.bf16.msra.mxu0 0
        %1790 = vmatpush.bf16.msra.mxu0 %v1629
        %1791 = vmatpush.bf16.msra.mxu0 %v1538
        %1792 = vmatpush.bf16.msra.mxu0 %v1534
        %1793 = vmatmul.bf16.gmra.mxu0 %v1616
        %v1794 = vpop.f32.mrf.mxu0
        %v1795 = vadd.f32 %v1781, %v1794
        %v1796 = vpop.f32.mrf.mxu0
        %v1797 = vadd.f32 %v1783, %v1796
        %1798 = vdwg.mxu0
        %v1799 = vmax.f32 %v1669, 0.0
        %v1800 = vmax.f32 %v1711, 0.0
        %v1801 = vmax.f32 %v1753, 0.0
        %v1802 = vmax.f32 %v1795, 0.0
        %v1803 = vmax.f32 %v1671, 0.0
        %v1804 = vmax.f32 %v1713, 0.0
        %v1805 = vmax.f32 %v1755, 0.0
        %v1806 = vmax.f32 %v1797, 0.0
        %v1807 = vpack.c.bf16 %v1803, %v1799
        %v1808 = vpack.c.bf16 %v1804, %v1800
        %v1809 = vpack.c.bf16 %v1805, %v1801
        %v1810 = vpack.c.bf16 %v1806, %v1802
        %v1811 = vld [vmem:[%s6] sm:$0xff]
        %v1812 = vld [vmem:[%s6 + $0x8] sm:$0xf]
        %v1813 = vld [vmem:[%s6 + $0xc] sm:$0xff]
        %v1814 = vld [vmem:[%s6 + $0x14] sm:$0xf]
        %v1815 = vld [vmem:[%s6 + $0x18] sm:$0xff]
        %v1816 = vld [vmem:[%s6 + $0x20] sm:$0xf]
        %v1817 = vld [vmem:[%s6 + $0x24] sm:$0xff]
        %v1818 = vld [vmem:[%s6 + $0x2c] sm:$0xf]
        %v1819 = vld [vmem:[%s6 + $0x30] sm:$0xff]
        %v1820 = vld [vmem:[%s6 + $0x38] sm:$0xf]
        %v1821 = vld [vmem:[%s6 + $0x3c] sm:$0xff]
        %v1822 = vld [vmem:[%s6 + $0x44] sm:$0xf]
        %v1823 = vld [vmem:[%s6 + $0x48] sm:$0xff]
        %v1824 = vld [vmem:[%s6 + $0x50] sm:$0xf]
        %v1825 = vld [vmem:[%s6 + $0x54] sm:$0xff]
        %v1826 = vld [vmem:[%s6 + $0x5c] sm:$0xf]
        %v1827 = vld [vmem:[%s6 + $0x60] sm:$0xff]
        %v1828 = vld [vmem:[%s6 + $0x68] sm:$0xf]
        %v1829 = vld [vmem:[%s6 + $0x6c] sm:$0xff]
        %v1830 = vld [vmem:[%s6 + $0x74] sm:$0xf]
        %v1831 = vld [vmem:[%s6 + $0x78] sm:$0xff]
        %v1832 = vld [vmem:[%s6 + $0x80] sm:$0xf]
        %v1833 = vld [vmem:[%s6 + $0x84] sm:$0xff]
        %v1834 = vld [vmem:[%s6 + $0x8c] sm:$0xf]
        %v1835 = vld [vmem:[%s6 + $0x90] sm:$0xff]
        %v1836 = vld [vmem:[%s6 + $0x98] sm:$0xf]
        %v1837 = vld [vmem:[%s6 + $0x9c] sm:$0xff]
        %v1838 = vld [vmem:[%s6 + $0xa4] sm:$0xf]
        %v1839 = vld [vmem:[%s6 + $0xa8] sm:$0xff]
        %v1840 = vld [vmem:[%s6 + $0xb0] sm:$0xf]
        %v1841 = vld [vmem:[%s6 + $0xb4] sm:$0xff]
        %v1842 = vld [vmem:[%s6 + $0xbc] sm:$0xf]
        %v1843 = vld [vmem:[%s6 + $0xc0] sm:$0xff]
        %v1844 = vld [vmem:[%s6 + $0xc8] sm:$0xf]
        %v1845 = vld [vmem:[%s6 + $0xcc] sm:$0xff]
        %v1846 = vld [vmem:[%s6 + $0xd4] sm:$0xf]
        %v1847 = vld [vmem:[%s6 + $0xd8] sm:$0xff]
        %v1848 = vld [vmem:[%s6 + $0xe0] sm:$0xf]
        %v1849 = vld [vmem:[%s6 + $0xe4] sm:$0xff]
        %v1850 = vld [vmem:[%s6 + $0xec] sm:$0xf]
        %v1851 = vld [vmem:[%s6 + $0xf0] sm:$0xff]
        %v1852 = vld [vmem:[%s6 + $0xf8] sm:$0xf]
        %v1853 = vld [vmem:[%s6 + $0xfc] sm:$0xff]
        %v1854 = vld [vmem:[%s6 + $0x104] sm:$0xf]
        %v1855 = vld [vmem:[%s6 + $0x108] sm:$0xff]
        %v1856 = vld [vmem:[%s6 + $0x110] sm:$0xf]
        %v1857 = vld [vmem:[%s6 + $0x114] sm:$0xff]
        %v1858 = vld [vmem:[%s6 + $0x11c] sm:$0xf]
        %v1859 = vld [vmem:[%s6 + $0x120] sm:$0xff]
        %v1860 = vld [vmem:[%s6 + $0x128] sm:$0xf]
        %v1861 = vld [vmem:[%s6 + $0x12c] sm:$0xff]
        %v1862 = vld [vmem:[%s6 + $0x134] sm:$0xf]
        %v1863 = vld [vmem:[%s6 + $0x138] sm:$0xff]
        %v1864 = vld [vmem:[%s6 + $0x140] sm:$0xf]
        %v1865 = vld [vmem:[%s6 + $0x144] sm:$0xff]
        %v1866 = vld [vmem:[%s6 + $0x14c] sm:$0xf]
        %v1867 = vld [vmem:[%s6 + $0x150] sm:$0xff]
        %v1868 = vld [vmem:[%s6 + $0x158] sm:$0xf]
        %v1869 = vld [vmem:[%s6 + $0x15c] sm:$0xff]
        %v1870 = vld [vmem:[%s6 + $0x164] sm:$0xf]
        %v1871 = vld [vmem:[%s6 + $0x168] sm:$0xff]
        %v1872 = vld [vmem:[%s6 + $0x170] sm:$0xf]
        %v1873 = vld [vmem:[%s6 + $0x174] sm:$0xff]
        %v1874 = vld [vmem:[%s6 + $0x17c] sm:$0xf]
        %v1875 = vld [vmem:[%s6 + $0x180] sm:$0xff]
        %v1876 = vld [vmem:[%s6 + $0x188] sm:$0xf]
        %v1877 = vld [vmem:[%s6 + $0x18c] sm:$0xff]
        %v1878 = vld [vmem:[%s6 + $0x194] sm:$0xf]
        %v1879 = vld [vmem:[%s6 + $0x198] sm:$0xff]
        %v1880 = vld [vmem:[%s6 + $0x1a0] sm:$0xf]
        %v1881 = vld [vmem:[%s6 + $0x1a4] sm:$0xff]
        %v1882 = vld [vmem:[%s6 + $0x1ac] sm:$0xf]
        %v1883 = vld [vmem:[%s6 + $0x1b0] sm:$0xff]
        %v1884 = vld [vmem:[%s6 + $0x1b8] sm:$0xf]
        %v1885 = vld [vmem:[%s6 + $0x1bc] sm:$0xff]
        %v1886 = vld [vmem:[%s6 + $0x1c4] sm:$0xf]
        %v1887 = vld [vmem:[%s6 + $0x1c8] sm:$0xff]
        %v1888 = vld [vmem:[%s6 + $0x1d0] sm:$0xf]
        %v1889 = vld [vmem:[%s6 + $0x1d4] sm:$0xff]
        %v1890 = vld [vmem:[%s6 + $0x1dc] sm:$0xf]
        %v1891 = vld [vmem:[%s6 + $0x1e0] sm:$0xff]
        %v1892 = vld [vmem:[%s6 + $0x1e8] sm:$0xf]
        %v1893 = vld [vmem:[%s6 + $0x1ec] sm:$0xff]
        %v1894 = vld [vmem:[%s6 + $0x1f4] sm:$0xf]
        %v1895 = vld [vmem:[%s6 + $0x1f8] sm:$0xff]
        %v1896 = vld [vmem:[%s6 + $0x200] sm:$0xf]
        %v1897 = vld [vmem:[%s6 + $0x204] sm:$0xff]
        %v1898 = vld [vmem:[%s6 + $0x20c] sm:$0xf]
        %v1899 = vld [vmem:[%s6 + $0x210] sm:$0xff]
        %v1900 = vld [vmem:[%s6 + $0x218] sm:$0xf]
        %v1901 = vld [vmem:[%s6 + $0x21c] sm:$0xff]
        %v1902 = vld [vmem:[%s6 + $0x224] sm:$0xf]
        %v1903 = vld [vmem:[%s6 + $0x228] sm:$0xff]
        %v1904 = vld [vmem:[%s6 + $0x230] sm:$0xf]
        %v1905 = vld [vmem:[%s6 + $0x234] sm:$0xff]
        %v1906 = vld [vmem:[%s6 + $0x23c] sm:$0xf]
        %v1907 = vld [vmem:[%s6 + $0x240] sm:$0xff]
        %v1908 = vld [vmem:[%s6 + $0x248] sm:$0xf]
        %v1909 = vld [vmem:[%s6 + $0x24c] sm:$0xff]
        %v1910 = vld [vmem:[%s6 + $0x254] sm:$0xf]
        %v1911 = vld [vmem:[%s6 + $0x258] sm:$0xff]
        %v1912 = vld [vmem:[%s6 + $0x260] sm:$0xf]
        %v1913 = vld [vmem:[%s6 + $0x264] sm:$0xff]
        %v1914 = vld [vmem:[%s6 + $0x26c] sm:$0xf]
        %v1915 = vld [vmem:[%s6 + $0x270] sm:$0xff]
        %v1916 = vld [vmem:[%s6 + $0x278] sm:$0xf]
        %v1917 = vld [vmem:[%s6 + $0x27c] sm:$0xff]
        %v1918 = vld [vmem:[%s6 + $0x284] sm:$0xf]
        %v1919 = vld [vmem:[%s6 + $0x288] sm:$0xff]
        %v1920 = vld [vmem:[%s6 + $0x290] sm:$0xf]
        %v1921 = vld [vmem:[%s6 + $0x294] sm:$0xff]
        %v1922 = vld [vmem:[%s6 + $0x29c] sm:$0xf]
        %v1923 = vld [vmem:[%s6 + $0x2a0] sm:$0xff]
        %v1924 = vld [vmem:[%s6 + $0x2a8] sm:$0xf]
        %v1925 = vld [vmem:[%s6 + $0x2ac] sm:$0xff]
        %v1926 = vld [vmem:[%s6 + $0x2b4] sm:$0xf]
        %v1927 = vld [vmem:[%s6 + $0x2b8] sm:$0xff]
        %v1928 = vld [vmem:[%s6 + $0x2c0] sm:$0xf]
        %v1929 = vld [vmem:[%s6 + $0x2c4] sm:$0xff]
        %v1930 = vld [vmem:[%s6 + $0x2cc] sm:$0xf]
        %v1931 = vld [vmem:[%s6 + $0x2d0] sm:$0xff]
        %v1932 = vld [vmem:[%s6 + $0x2d8] sm:$0xf]
        %v1933 = vld [vmem:[%s6 + $0x2dc] sm:$0xff]
        %v1934 = vld [vmem:[%s6 + $0x2e4] sm:$0xf]
        %v1935 = vld [vmem:[%s6 + $0x2e8] sm:$0xff]
        %v1936 = vld [vmem:[%s6 + $0x2f0] sm:$0xf]
        %v1937 = vld [vmem:[%s6 + $0x2f4] sm:$0xff]
        %v1938 = vld [vmem:[%s6 + $0x2fc] sm:$0xf]
        %v1939 = vld [vmem:[%s7] sm:$0x7]
        %v1941 = vperm.slane %v1939, 0
        %v1942 = vperm.slane %v1939, 1
        %v1943 = vperm.slane %v1939, 2
        %v2075 = vunpack.c.l.b16 %v1811
        %v2076 = vunpack.c.h.b16 %v1811
        %v2077 = vunpack.c.l.b16 %v1812
        %v2078 = vunpack.c.l.b16 %v1813
        %v2079 = vunpack.c.h.b16 %v1813
        %v2080 = vunpack.c.l.b16 %v1814
        %v2081 = vunpack.c.l.b16 %v1815
        %v2082 = vunpack.c.h.b16 %v1815
        %v2083 = vunpack.c.l.b16 %v1816
        %v2084 = vunpack.c.l.b16 %v1817
        %v2085 = vunpack.c.h.b16 %v1817
        %v2086 = vunpack.c.l.b16 %v1818
        %v2087 = vunpack.c.l.b16 %v1819
        %v2088 = vunpack.c.h.b16 %v1819
        %v2089 = vunpack.c.l.b16 %v1820
        %v2090 = vunpack.c.l.b16 %v1821
        %v2091 = vunpack.c.h.b16 %v1821
        %v2092 = vunpack.c.l.b16 %v1822
        %v2093 = vunpack.c.l.b16 %v1823
        %v2094 = vunpack.c.h.b16 %v1823
        %v2095 = vunpack.c.l.b16 %v1824
        %v2096 = vunpack.c.l.b16 %v1825
        %v2097 = vunpack.c.h.b16 %v1825
        %v2098 = vunpack.c.l.b16 %v1826
        %v2099 = vunpack.c.l.b16 %v1827
        %v2100 = vunpack.c.h.b16 %v1827
        %v2101 = vunpack.c.l.b16 %v1828
        %v2102 = vunpack.c.l.b16 %v1829
        %v2103 = vunpack.c.h.b16 %v1829
        %v2104 = vunpack.c.l.b16 %v1830
        %v2105 = vunpack.c.l.b16 %v1831
        %v2106 = vunpack.c.h.b16 %v1831
        %v2107 = vunpack.c.l.b16 %v1832
        %v2108 = vunpack.c.l.b16 %v1833
        %v2109 = vunpack.c.h.b16 %v1833
        %v2110 = vunpack.c.l.b16 %v1834
        %v2111 = vunpack.c.l.b16 %v1835
        %v2112 = vunpack.c.h.b16 %v1835
        %v2113 = vunpack.c.l.b16 %v1836
        %v2114 = vunpack.c.l.b16 %v1837
        %v2115 = vunpack.c.h.b16 %v1837
        %v2116 = vunpack.c.l.b16 %v1838
        %v2117 = vunpack.c.l.b16 %v1839
        %v2118 = vunpack.c.h.b16 %v1839
        %v2119 = vunpack.c.l.b16 %v1840
        %v2120 = vunpack.c.l.b16 %v1841
        %v2121 = vunpack.c.h.b16 %v1841
        %v2122 = vunpack.c.l.b16 %v1842
        %v2123 = vunpack.c.l.b16 %v1843
        %v2124 = vunpack.c.h.b16 %v1843
        %v2125 = vunpack.c.l.b16 %v1844
        %v2126 = vunpack.c.l.b16 %v1845
        %v2127 = vunpack.c.h.b16 %v1845
        %v2128 = vunpack.c.l.b16 %v1846
        %v2129 = vunpack.c.l.b16 %v1847
        %v2130 = vunpack.c.h.b16 %v1847
        %v2131 = vunpack.c.l.b16 %v1848
        %v2132 = vunpack.c.l.b16 %v1849
        %v2133 = vunpack.c.h.b16 %v1849
        %v2134 = vunpack.c.l.b16 %v1850
        %v2135 = vunpack.c.l.b16 %v1851
        %v2136 = vunpack.c.h.b16 %v1851
        %v2137 = vunpack.c.l.b16 %v1852
        %v2138 = vunpack.c.l.b16 %v1853
        %v2139 = vunpack.c.h.b16 %v1853
        %v2140 = vunpack.c.l.b16 %v1854
        %v2141 = vunpack.c.l.b16 %v1855
        %v2142 = vunpack.c.h.b16 %v1855
        %v2143 = vunpack.c.l.b16 %v1856
        %v2144 = vunpack.c.l.b16 %v1857
        %v2145 = vunpack.c.h.b16 %v1857
        %v2146 = vunpack.c.l.b16 %v1858
        %v2147 = vunpack.c.l.b16 %v1859
        %v2148 = vunpack.c.h.b16 %v1859
        %v2149 = vunpack.c.l.b16 %v1860
        %v2150 = vunpack.c.l.b16 %v1861
        %v2151 = vunpack.c.h.b16 %v1861
        %v2152 = vunpack.c.l.b16 %v1862
        %v2153 = vunpack.c.l.b16 %v1863
        %v2154 = vunpack.c.h.b16 %v1863
        %v2155 = vunpack.c.l.b16 %v1864
        %v2156 = vunpack.c.l.b16 %v1865
        %v2157 = vunpack.c.h.b16 %v1865
        %v2158 = vunpack.c.l.b16 %v1866
        %v2159 = vunpack.c.l.b16 %v1867
        %v2160 = vunpack.c.h.b16 %v1867
        %v2161 = vunpack.c.l.b16 %v1868
        %v2162 = vunpack.c.l.b16 %v1869
        %v2163 = vunpack.c.h.b16 %v1869
        %v2164 = vunpack.c.l.b16 %v1870
        %v2165 = vunpack.c.l.b16 %v1871
        %v2166 = vunpack.c.h.b16 %v1871
        %v2167 = vunpack.c.l.b16 %v1872
        %v2168 = vunpack.c.l.b16 %v1873
        %v2169 = vunpack.c.h.b16 %v1873
        %v2170 = vunpack.c.l.b16 %v1874
        %v2171 = vunpack.c.l.b16 %v1875
        %v2172 = vunpack.c.h.b16 %v1875
        %v2173 = vunpack.c.l.b16 %v1876
        %v2174 = vunpack.c.l.b16 %v1877
        %v2175 = vunpack.c.h.b16 %v1877
        %v2176 = vunpack.c.l.b16 %v1878
        %v2177 = vunpack.c.l.b16 %v1879
        %v2178 = vunpack.c.h.b16 %v1879
        %v2179 = vunpack.c.l.b16 %v1880
        %v2180 = vunpack.c.l.b16 %v1881
        %v2181 = vunpack.c.h.b16 %v1881
        %v2182 = vunpack.c.l.b16 %v1882
        %v2183 = vunpack.c.l.b16 %v1883
        %v2184 = vunpack.c.h.b16 %v1883
        %v2185 = vunpack.c.l.b16 %v1884
        %v2186 = vunpack.c.l.b16 %v1885
        %v2187 = vunpack.c.h.b16 %v1885
        %v2188 = vunpack.c.l.b16 %v1886
        %v2189 = vunpack.c.l.b16 %v1887
        %v2190 = vunpack.c.h.b16 %v1887
        %v2191 = vunpack.c.l.b16 %v1888
        %v2192 = vunpack.c.l.b16 %v1889
        %v2193 = vunpack.c.h.b16 %v1889
        %v2194 = vunpack.c.l.b16 %v1890
        %v2195 = vunpack.c.l.b16 %v1891
        %v2196 = vunpack.c.h.b16 %v1891
        %v2197 = vunpack.c.l.b16 %v1892
        %v2198 = vunpack.c.l.b16 %v1893
        %v2199 = vunpack.c.h.b16 %v1893
        %v2200 = vunpack.c.l.b16 %v1894
        %v2201 = vunpack.c.l.b16 %v1895
        %v2202 = vunpack.c.h.b16 %v1895
        %v2203 = vunpack.c.l.b16 %v1896
        %v2204 = vunpack.c.l.b16 %v1897
        %v2205 = vunpack.c.h.b16 %v1897
        %v2206 = vunpack.c.l.b16 %v1898
        %v2207 = vunpack.c.l.b16 %v1899
        %v2208 = vunpack.c.h.b16 %v1899
        %v2209 = vunpack.c.l.b16 %v1900
        %v2210 = vunpack.c.l.b16 %v1901
        %v2211 = vunpack.c.h.b16 %v1901
        %v2212 = vunpack.c.l.b16 %v1902
        %v2213 = vunpack.c.l.b16 %v1903
        %v2214 = vunpack.c.h.b16 %v1903
        %v2215 = vunpack.c.l.b16 %v1904
        %v2216 = vunpack.c.l.b16 %v1905
        %v2217 = vunpack.c.h.b16 %v1905
        %v2218 = vunpack.c.l.b16 %v1906
        %v2219 = vunpack.c.l.b16 %v1907
        %v2220 = vunpack.c.h.b16 %v1907
        %v2221 = vunpack.c.l.b16 %v1908
        %v2222 = vunpack.c.l.b16 %v1909
        %v2223 = vunpack.c.h.b16 %v1909
        %v2224 = vunpack.c.l.b16 %v1910
        %v2225 = vunpack.c.l.b16 %v1911
        %v2226 = vunpack.c.h.b16 %v1911
        %v2227 = vunpack.c.l.b16 %v1912
        %v2228 = vunpack.c.l.b16 %v1913
        %v2229 = vunpack.c.h.b16 %v1913
        %v2230 = vunpack.c.l.b16 %v1914
        %v2231 = vunpack.c.l.b16 %v1915
        %v2232 = vunpack.c.h.b16 %v1915
        %v2233 = vunpack.c.l.b16 %v1916
        %v2234 = vunpack.c.l.b16 %v1917
        %v2235 = vunpack.c.h.b16 %v1917
        %v2236 = vunpack.c.l.b16 %v1918
        %v2237 = vunpack.c.l.b16 %v1919
        %v2238 = vunpack.c.h.b16 %v1919
        %v2239 = vunpack.c.l.b16 %v1920
        %v2240 = vunpack.c.l.b16 %v1921
        %v2241 = vunpack.c.h.b16 %v1921
        %v2242 = vunpack.c.l.b16 %v1922
        %v2243 = vunpack.c.l.b16 %v1923
        %v2244 = vunpack.c.h.b16 %v1923
        %v2245 = vunpack.c.l.b16 %v1924
        %v2246 = vunpack.c.l.b16 %v1925
        %v2247 = vunpack.c.h.b16 %v1925
        %v2248 = vunpack.c.l.b16 %v1926
        %v2249 = vunpack.c.l.b16 %v1927
        %v2250 = vunpack.c.h.b16 %v1927
        %v2251 = vunpack.c.l.b16 %v1928
        %v2252 = vunpack.c.l.b16 %v1929
        %v2253 = vunpack.c.h.b16 %v1929
        %v2254 = vunpack.c.l.b16 %v1930
        %v2255 = vunpack.c.l.b16 %v1931
        %v2256 = vunpack.c.h.b16 %v1931
        %v2257 = vunpack.c.l.b16 %v1932
        %v2258 = vunpack.c.l.b16 %v1933
        %v2259 = vunpack.c.h.b16 %v1933
        %v2260 = vunpack.c.l.b16 %v1934
        %v2261 = vunpack.c.l.b16 %v1935
        %v2262 = vunpack.c.h.b16 %v1935
        %v2263 = vunpack.c.l.b16 %v1936
        %v2264 = vunpack.c.l.b16 %v1937
        %v2265 = vunpack.c.h.b16 %v1937
        %v2266 = vunpack.c.l.b16 %v1938
        %v2267 = vpack.c.b16 %v2078, %v2075
        %v2268 = vpack.c.b16 %v2079, %v2076
        %v2269 = vpack.c.b16 %v2080, %v2077
        %v2270 = vpack.c.b16 %v2084, %v2081
        %v2271 = vpack.c.b16 %v2085, %v2082
        %v2272 = vpack.c.b16 %v2086, %v2083
        %v2273 = vpack.c.b16 %v2090, %v2087
        %v2274 = vpack.c.b16 %v2091, %v2088
        %v2275 = vpack.c.b16 %v2092, %v2089
        %v2276 = vpack.c.b16 %v2096, %v2093
        %v2277 = vpack.c.b16 %v2097, %v2094
        %v2278 = vpack.c.b16 %v2098, %v2095
        %v2279 = vpack.c.b16 %v2102, %v2099
        %v2280 = vpack.c.b16 %v2103, %v2100
        %v2281 = vpack.c.b16 %v2104, %v2101
        %v2282 = vpack.c.b16 %v2108, %v2105
        %v2283 = vpack.c.b16 %v2109, %v2106
        %v2284 = vpack.c.b16 %v2110, %v2107
        %v2285 = vpack.c.b16 %v2114, %v2111
        %v2286 = vpack.c.b16 %v2115, %v2112
        %v2287 = vpack.c.b16 %v2116, %v2113
        %v2288 = vpack.c.b16 %v2120, %v2117
        %v2289 = vpack.c.b16 %v2121, %v2118
        %v2290 = vpack.c.b16 %v2122, %v2119
        %v2291 = vpack.c.b16 %v2126, %v2123
        %v2292 = vpack.c.b16 %v2127, %v2124
        %v2293 = vpack.c.b16 %v2128, %v2125
        %v2294 = vpack.c.b16 %v2132, %v2129
        %v2295 = vpack.c.b16 %v2133, %v2130
        %v2296 = vpack.c.b16 %v2134, %v2131
        %v2297 = vpack.c.b16 %v2138, %v2135
        %v2298 = vpack.c.b16 %v2139, %v2136
        %v2299 = vpack.c.b16 %v2140, %v2137
        %v2300 = vpack.c.b16 %v2144, %v2141
        %v2301 = vpack.c.b16 %v2145, %v2142
        %v2302 = vpack.c.b16 %v2146, %v2143
        %v2303 = vpack.c.b16 %v2150, %v2147
        %v2304 = vpack.c.b16 %v2151, %v2148
        %v2305 = vpack.c.b16 %v2152, %v2149
        %v2306 = vpack.c.b16 %v2156, %v2153
        %v2307 = vpack.c.b16 %v2157, %v2154
        %v2308 = vpack.c.b16 %v2158, %v2155
        %v2309 = vpack.c.b16 %v2162, %v2159
        %v2310 = vpack.c.b16 %v2163, %v2160
        %v2311 = vpack.c.b16 %v2164, %v2161
        %v2312 = vpack.c.b16 %v2168, %v2165
        %v2313 = vpack.c.b16 %v2169, %v2166
        %v2314 = vpack.c.b16 %v2170, %v2167
        %v2315 = vpack.c.b16 %v2174, %v2171
        %v2316 = vpack.c.b16 %v2175, %v2172
        %v2317 = vpack.c.b16 %v2176, %v2173
        %v2318 = vpack.c.b16 %v2180, %v2177
        %v2319 = vpack.c.b16 %v2181, %v2178
        %v2320 = vpack.c.b16 %v2182, %v2179
        %v2321 = vpack.c.b16 %v2186, %v2183
        %v2322 = vpack.c.b16 %v2187, %v2184
        %v2323 = vpack.c.b16 %v2188, %v2185
        %v2324 = vpack.c.b16 %v2192, %v2189
        %v2325 = vpack.c.b16 %v2193, %v2190
        %v2326 = vpack.c.b16 %v2194, %v2191
        %v2327 = vpack.c.b16 %v2198, %v2195
        %v2328 = vpack.c.b16 %v2199, %v2196
        %v2329 = vpack.c.b16 %v2200, %v2197
        %v2330 = vpack.c.b16 %v2204, %v2201
        %v2331 = vpack.c.b16 %v2205, %v2202
        %v2332 = vpack.c.b16 %v2206, %v2203
        %v2333 = vpack.c.b16 %v2210, %v2207
        %v2334 = vpack.c.b16 %v2211, %v2208
        %v2335 = vpack.c.b16 %v2212, %v2209
        %v2336 = vpack.c.b16 %v2216, %v2213
        %v2337 = vpack.c.b16 %v2217, %v2214
        %v2338 = vpack.c.b16 %v2218, %v2215
        %v2339 = vpack.c.b16 %v2222, %v2219
        %v2340 = vpack.c.b16 %v2223, %v2220
        %v2341 = vpack.c.b16 %v2224, %v2221
        %v2342 = vpack.c.b16 %v2228, %v2225
        %v2343 = vpack.c.b16 %v2229, %v2226
        %v2344 = vpack.c.b16 %v2230, %v2227
        %v2345 = vpack.c.b16 %v2234, %v2231
        %v2346 = vpack.c.b16 %v2235, %v2232
        %v2347 = vpack.c.b16 %v2236, %v2233
        %v2348 = vpack.c.b16 %v2240, %v2237
        %v2349 = vpack.c.b16 %v2241, %v2238
        %v2350 = vpack.c.b16 %v2242, %v2239
        %v2351 = vpack.c.b16 %v2246, %v2243
        %v2352 = vpack.c.b16 %v2247, %v2244
        %v2353 = vpack.c.b16 %v2248, %v2245
        %v2354 = vpack.c.b16 %v2252, %v2249
        %v2355 = vpack.c.b16 %v2253, %v2250
        %v2356 = vpack.c.b16 %v2254, %v2251
        %v2357 = vpack.c.b16 %v2258, %v2255
        %v2358 = vpack.c.b16 %v2259, %v2256
        %v2359 = vpack.c.b16 %v2260, %v2257
        %v2360 = vpack.c.b16 %v2264, %v2261
        %v2361 = vpack.c.b16 %v2265, %v2262
        %v2362 = vpack.c.b16 %v2266, %v2263
        %2459 = vmatpush.bf16.msra.mxu0 %v2288
        %2460 = vmatpush.bf16.msra.mxu0 %v2285
        %2461 = vmatpush.bf16.msra.mxu0 %v2282
        %2462 = vmatpush.bf16.msra.mxu0 %v2279
        %2463 = vmatpush.bf16.msra.mxu0 %v2276
        %2464 = vmatpush.bf16.msra.mxu0 %v2273
        %2465 = vmatpush.bf16.msra.mxu0 %v2270
        %2466 = vmatpush.bf16.msra.mxu0 %v2267
        %2467 = vmatmul.bf16.gmra.mxu0 %v1807
        %v2468 = vpop.f32.mrf.mxu0
        %v2469 = vadd.f32 %v1941, %v2468
        %v2470 = vpop.f32.mrf.mxu0
        %v2471 = vadd.f32 %v1941, %v2470
        %2472 = vdwg.mxu0
        %2473 = vmatpush.bf16.msra.mxu0 %v2312
        %2474 = vmatpush.bf16.msra.mxu0 %v2309
        %2475 = vmatpush.bf16.msra.mxu0 %v2306
        %2476 = vmatpush.bf16.msra.mxu0 %v2303
        %2477 = vmatpush.bf16.msra.mxu0 %v2300
        %2478 = vmatpush.bf16.msra.mxu0 %v2297
        %2479 = vmatpush.bf16.msra.mxu0 %v2294
        %2480 = vmatpush.bf16.msra.mxu0 %v2291
        %2481 = vmatmul.bf16.gmra.mxu0 %v1808
        %v2482 = vpop.f32.mrf.mxu0
        %v2483 = vadd.f32 %v2469, %v2482
        %v2484 = vpop.f32.mrf.mxu0
        %v2485 = vadd.f32 %v2471, %v2484
        %2486 = vdwg.mxu0
        %2487 = vmatpush.bf16.msra.mxu0 %v2336
        %2488 = vmatpush.bf16.msra.mxu0 %v2333
        %2489 = vmatpush.bf16.msra.mxu0 %v2330
        %2490 = vmatpush.bf16.msra.mxu0 %v2327
        %2491 = vmatpush.bf16.msra.mxu0 %v2324
        %2492 = vmatpush.bf16.msra.mxu0 %v2321
        %2493 = vmatpush.bf16.msra.mxu0 %v2318
        %2494 = vmatpush.bf16.msra.mxu0 %v2315
        %2495 = vmatmul.bf16.gmra.mxu0 %v1809
        %v2496 = vpop.f32.mrf.mxu0
        %v2497 = vadd.f32 %v2483, %v2496
        %v2498 = vpop.f32.mrf.mxu0
        %v2499 = vadd.f32 %v2485, %v2498
        %2500 = vdwg.mxu0
        %2501 = vmatpush.bf16.msra.mxu0 %v2360
        %2502 = vmatpush.bf16.msra.mxu0 %v2357
        %2503 = vmatpush.bf16.msra.mxu0 %v2354
        %2504 = vmatpush.bf16.msra.mxu0 %v2351
        %2505 = vmatpush.bf16.msra.mxu0 %v2348
        %2506 = vmatpush.bf16.msra.mxu0 %v2345
        %2507 = vmatpush.bf16.msra.mxu0 %v2342
        %2508 = vmatpush.bf16.msra.mxu0 %v2339
        %2509 = vmatmul.bf16.gmra.mxu0 %v1810
        %v2510 = vpop.f32.mrf.mxu0
        %v2511 = vadd.f32 %v2497, %v2510
        %v2512 = vpop.f32.mrf.mxu0
        %v2513 = vadd.f32 %v2499, %v2512
        %2514 = vdwg.mxu0
        %2515 = vmatpush.bf16.msra.mxu0 %v2289
        %2516 = vmatpush.bf16.msra.mxu0 %v2286
        %2517 = vmatpush.bf16.msra.mxu0 %v2283
        %2518 = vmatpush.bf16.msra.mxu0 %v2280
        %2519 = vmatpush.bf16.msra.mxu0 %v2277
        %2520 = vmatpush.bf16.msra.mxu0 %v2274
        %2521 = vmatpush.bf16.msra.mxu0 %v2271
        %2522 = vmatpush.bf16.msra.mxu0 %v2268
        %2523 = vmatmul.bf16.gmra.mxu0 %v1807
        %v2524 = vpop.f32.mrf.mxu0
        %v2525 = vadd.f32 %v1942, %v2524
        %v2526 = vpop.f32.mrf.mxu0
        %v2527 = vadd.f32 %v1942, %v2526
        %2528 = vdwg.mxu0
        %2529 = vmatpush.bf16.msra.mxu0 %v2313
        %2530 = vmatpush.bf16.msra.mxu0 %v2310
        %2531 = vmatpush.bf16.msra.mxu0 %v2307
        %2532 = vmatpush.bf16.msra.mxu0 %v2304
        %2533 = vmatpush.bf16.msra.mxu0 %v2301
        %2534 = vmatpush.bf16.msra.mxu0 %v2298
        %2535 = vmatpush.bf16.msra.mxu0 %v2295
        %2536 = vmatpush.bf16.msra.mxu0 %v2292
        %2537 = vmatmul.bf16.gmra.mxu0 %v1808
        %v2538 = vpop.f32.mrf.mxu0
        %v2539 = vadd.f32 %v2525, %v2538
        %v2540 = vpop.f32.mrf.mxu0
        %v2541 = vadd.f32 %v2527, %v2540
        %2542 = vdwg.mxu0
        %2543 = vmatpush.bf16.msra.mxu0 %v2337
        %2544 = vmatpush.bf16.msra.mxu0 %v2334
        %2545 = vmatpush.bf16.msra.mxu0 %v2331
        %2546 = vmatpush.bf16.msra.mxu0 %v2328
        %2547 = vmatpush.bf16.msra.mxu0 %v2325
        %2548 = vmatpush.bf16.msra.mxu0 %v2322
        %2549 = vmatpush.bf16.msra.mxu0 %v2319
        %2550 = vmatpush.bf16.msra.mxu0 %v2316
        %2551 = vmatmul.bf16.gmra.mxu0 %v1809
        %v2552 = vpop.f32.mrf.mxu0
        %v2553 = vadd.f32 %v2539, %v2552
        %v2554 = vpop.f32.mrf.mxu0
        %v2555 = vadd.f32 %v2541, %v2554
        %2556 = vdwg.mxu0
        %2557 = vmatpush.bf16.msra.mxu0 %v2361
        %2558 = vmatpush.bf16.msra.mxu0 %v2358
        %2559 = vmatpush.bf16.msra.mxu0 %v2355
        %2560 = vmatpush.bf16.msra.mxu0 %v2352
        %2561 = vmatpush.bf16.msra.mxu0 %v2349
        %2562 = vmatpush.bf16.msra.mxu0 %v2346
        %2563 = vmatpush.bf16.msra.mxu0 %v2343
        %2564 = vmatpush.bf16.msra.mxu0 %v2340
        %2565 = vmatmul.bf16.gmra.mxu0 %v1810
        %v2566 = vpop.f32.mrf.mxu0
        %v2567 = vadd.f32 %v2553, %v2566
        %v2568 = vpop.f32.mrf.mxu0
        %v2569 = vadd.f32 %v2555, %v2568
        %2570 = vdwg.mxu0
        %2571 = vmatpush.bf16.msra.mxu0 %v2290
        %2572 = vmatpush.bf16.msra.mxu0 %v2287
        %2573 = vmatpush.bf16.msra.mxu0 %v2284
        %2574 = vmatpush.bf16.msra.mxu0 %v2281
        %2575 = vmatpush.bf16.msra.mxu0 %v2278
        %2576 = vmatpush.bf16.msra.mxu0 %v2275
        %2577 = vmatpush.bf16.msra.mxu0 %v2272
        %2578 = vmatpush.bf16.msra.mxu0 %v2269
        %2579 = vmatmul.bf16.gmra.mxu0 %v1807
        %v2580 = vpop.f32.mrf.mxu0
        %v2581 = vadd.f32 %v1943, %v2580
        %v2582 = vpop.f32.mrf.mxu0
        %v2583 = vadd.f32 %v1943, %v2582
        %2584 = vdwg.mxu0
        %2585 = vmatpush.bf16.msra.mxu0 %v2314
        %2586 = vmatpush.bf16.msra.mxu0 %v2311
        %2587 = vmatpush.bf16.msra.mxu0 %v2308
        %2588 = vmatpush.bf16.msra.mxu0 %v2305
        %2589 = vmatpush.bf16.msra.mxu0 %v2302
        %2590 = vmatpush.bf16.msra.mxu0 %v2299
        %2591 = vmatpush.bf16.msra.mxu0 %v2296
        %2592 = vmatpush.bf16.msra.mxu0 %v2293
        %2593 = vmatmul.bf16.gmra.mxu0 %v1808
        %v2594 = vpop.f32.mrf.mxu0
        %v2595 = vadd.f32 %v2581, %v2594
        %v2596 = vpop.f32.mrf.mxu0
        %v2597 = vadd.f32 %v2583, %v2596
        %2598 = vdwg.mxu0
        %2599 = vmatpush.bf16.msra.mxu0 %v2338
        %2600 = vmatpush.bf16.msra.mxu0 %v2335
        %2601 = vmatpush.bf16.msra.mxu0 %v2332
        %2602 = vmatpush.bf16.msra.mxu0 %v2329
        %2603 = vmatpush.bf16.msra.mxu0 %v2326
        %2604 = vmatpush.bf16.msra.mxu0 %v2323
        %2605 = vmatpush.bf16.msra.mxu0 %v2320
        %2606 = vmatpush.bf16.msra.mxu0 %v2317
        %2607 = vmatmul.bf16.gmra.mxu0 %v1809
        %v2608 = vpop.f32.mrf.mxu0
        %v2609 = vadd.f32 %v2595, %v2608
        %v2610 = vpop.f32.mrf.mxu0
        %v2611 = vadd.f32 %v2597, %v2610
        %2612 = vdwg.mxu0
        %2613 = vmatpush.bf16.msra.mxu0 %v2362
        %2614 = vmatpush.bf16.msra.mxu0 %v2359
        %2615 = vmatpush.bf16.msra.mxu0 %v2356
        %2616 = vmatpush.bf16.msra.mxu0 %v2353
        %2617 = vmatpush.bf16.msra.mxu0 %v2350
        %2618 = vmatpush.bf16.msra.mxu0 %v2347
        %2619 = vmatpush.bf16.msra.mxu0 %v2344
        %2620 = vmatpush.bf16.msra.mxu0 %v2341
        %2621 = vmatmul.bf16.gmra.mxu0 %v1810
        %v2622 = vpop.f32.mrf.mxu0
        %v2623 = vadd.f32 %v2609, %v2622
        %v2624 = vpop.f32.mrf.mxu0
        %v2625 = vadd.f32 %v2611, %v2624
        %2626 = vdwg.mxu0
        %v2627 = vadd.f32 %v817, %v2511
        %v2628 = vadd.f32 %v818, %v2567
        %v2629 = vadd.f32 %v819, %v2623
        %v2630 = vadd.f32 %v820, %v2513
        %v2631 = vadd.f32 %v821, %v2569
        %v2632 = vadd.f32 %v822, %v2625
        %v2633 = vadd.f32 %v2627, %v2628
        %v2634 = vsel %vm825, %v2629, 0.0
        %v2635 = vadd.f32 %v2633, %v2634
        %2636 = vadd.xlane.f32.xlu0 %v2635
        %v2637 = vpop.xlane.xlu0 %2636
        %v2638 = vadd.f32 %v2630, %v2631
        %v2639 = vsel %vm825, %v2632, 0.0
        %v2640 = vadd.f32 %v2638, %v2639
        %2641 = vadd.xlane.f32.xlu0 %v2640
        %v2642 = vpop.xlane.xlu0 %2641
        %v2643 = vmul.f32 %v2637, %v1069
        %v2644 = vmul.f32 %v2642, %v1069
        %v2645 = vsub.f32 %v2627, %v2643
        %v2646 = vsub.f32 %v2628, %v2643
        %v2647 = vsub.f32 %v2629, %v2643
        %v2648 = vsub.f32 %v2630, %v2644
        %v2649 = vsub.f32 %v2631, %v2644
        %v2650 = vsub.f32 %v2632, %v2644
        %v2651 = vmul.f32 %v2645, %v2645
        %v2652 = vmul.f32 %v2646, %v2646
        %v2653 = vmul.f32 %v2647, %v2647
        %v2654 = vmul.f32 %v2648, %v2648
        %v2655 = vmul.f32 %v2649, %v2649
        %v2656 = vmul.f32 %v2650, %v2650
        %v2657 = vadd.f32 %v2651, %v2652
        %v2658 = vsel %vm825, %v2653, 0.0
        %v2659 = vadd.f32 %v2657, %v2658
        %2660 = vadd.xlane.f32.xlu0 %v2659
        %v2661 = vpop.xlane.xlu0 %2660
        %v2662 = vadd.f32 %v2654, %v2655
        %v2663 = vsel %vm825, %v2656, 0.0
        %v2664 = vadd.f32 %v2662, %v2663
        %2665 = vadd.xlane.f32.xlu0 %v2664
        %v2666 = vpop.xlane.xlu0 %2665
        %v2667 = vmul.f32 %v2661, %v1069
        %v2668 = vmul.f32 %v2666, %v1069
        %v2669 = vadd.f32 %v2667, 1e-05
        %v2670 = vadd.f32 %v2668, 1e-05
        %v2671 = vrsqrt.pop %v2669
        %v2672 = vmul.f32 %v2671, %v2669
        %v2673 = vmul.f32 %v2672, %v2671
        %v2674 = vmul.f32 0.5, %v2673
        %v2675 = vsub.f32 1.5, %v2674
        %v2676 = vmul.f32 %v2671, %v2675
        %vm2677 = vweird.f32 %v2669
        %vm2678 = vweird.f32 %v2671
        %vm2679 = vmor %vm2677, %vm2678
        %v2680 = vsel %vm2679, %v2671, %v2676
        %v2681 = vrsqrt.pop %v2670
        %v2682 = vmul.f32 %v2681, %v2670
        %v2683 = vmul.f32 %v2682, %v2681
        %v2684 = vmul.f32 0.5, %v2683
        %v2685 = vsub.f32 1.5, %v2684
        %v2686 = vmul.f32 %v2681, %v2685
        %vm2687 = vweird.f32 %v2670
        %vm2688 = vweird.f32 %v2681
        %vm2689 = vmor %vm2687, %vm2688
        %v2690 = vsel %vm2689, %v2681, %v2686
        %v2691 = vmul.f32 %v2645, %v2680
        %v2692 = vmul.f32 %v2646, %v2680
        %v2693 = vmul.f32 %v2647, %v2680
        %v2694 = vmul.f32 %v2648, %v2690
        %v2695 = vmul.f32 %v2649, %v2690
        %v2696 = vmul.f32 %v2650, %v2690
        %v2697 = vmul.f32 %v2691, %v1125
        %v2698 = vmul.f32 %v2692, %v1126
        %v2699 = vmul.f32 %v2693, %v1127
        %v2700 = vmul.f32 %v2694, %v1125
        %v2701 = vmul.f32 %v2695, %v1126
        %v2702 = vmul.f32 %v2696, %v1127
        %v2703 = vadd.f32 %v2697, %v1138
        %v2704 = vadd.f32 %v2698, %v1139
        %v2705 = vadd.f32 %v2699, %v1140
        %v2706 = vadd.f32 %v2700, %v1138
        %v2707 = vadd.f32 %v2701, %v1139
        %v2708 = vadd.f32 %v2702, %v1140
        %v2709 = vld [vmem:[%s11] sm:$0x1]
        %v2711 = vperm.slane %v2709, 0
        %v2713 = vadd.f32 %v2711, 0.0
        %s2714 = sld [smem:[#allocation3]]
        %v2715 = vstv %s2714
        %v2716 = vmul.f32 %v2703, %v2715
        %v2717 = vmul.f32 %v2704, %v2715
        %v2718 = vmul.f32 %v2705, %v2715
        %v2719 = vmul.f32 %v2706, %v2715
        %v2720 = vmul.f32 %v2707, %v2715
        %v2721 = vmul.f32 %v2708, %v2715
        %s2722 = sld [smem:[#allocation3 + $0x1]]
        %v2723 = vstv %s2722
        %v2724 = vmul.f32 %v2703, %v2723
        %v2725 = vmul.f32 %v2704, %v2723
        %v2726 = vmul.f32 %v2705, %v2723
        %v2727 = vmul.f32 %v2706, %v2723
        %v2728 = vmul.f32 %v2707, %v2723
        %v2729 = vmul.f32 %v2708, %v2723
        %2736 = vrot.lane.b32.xlu0 %v2724, 127
        %v2737 = vpop.permute.xlu0 %2736
        %2738 = vrot.lane.b32.xlu0 %v2725, 127
        %v2739 = vpop.permute.xlu0 %2738
        %2740 = vrot.lane.b32.xlu0 %v2726, 127
        %v2741 = vpop.permute.xlu0 %2740
        %2742 = vrot.lane.b32.xlu0 %v2727, 127
        %v2743 = vpop.permute.xlu0 %2742
        %2744 = vrot.lane.b32.xlu0 %v2728, 127
        %v2745 = vpop.permute.xlu0 %2744
        %2746 = vrot.lane.b32.xlu0 %v2729, 127
        %v2747 = vpop.permute.xlu0 %2746
        %vm2748 = vcmask 1039360
        %v2749 = vsel %vm2748, %v2737, %v2739
        %v2750 = vsel %vm2748, %v2739, %v2741
        %v2751 = vsel %vm2748, %v2743, %v2745
        %v2752 = vsel %vm2748, %v2745, %v2747
        %v2759 = vadd.f32 %v2716, %v2749
        %v2760 = vadd.f32 %v2717, %v2750
        %v2761 = vadd.f32 %v2718, %v2741
        %v2762 = vadd.f32 %v2719, %v2751
        %v2763 = vadd.f32 %v2720, %v2752
        %v2764 = vadd.f32 %v2721, %v2747
        %s2765 = sld [smem:[#allocation3 + $0x2]]
        %v2766 = vstv %s2765
        %v2767 = vmul.f32 %v2703, %v2766
        %v2768 = vmul.f32 %v2704, %v2766
        %v2769 = vmul.f32 %v2705, %v2766
        %v2770 = vmul.f32 %v2706, %v2766
        %v2771 = vmul.f32 %v2707, %v2766
        %v2772 = vmul.f32 %v2708, %v2766
        %2779 = vrot.lane.b32.xlu0 %v2767, 126
        %v2780 = vpop.permute.xlu0 %2779
        %2781 = vrot.lane.b32.xlu0 %v2768, 126
        %v2782 = vpop.permute.xlu0 %2781
        %2783 = vrot.lane.b32.xlu0 %v2769, 126
        %v2784 = vpop.permute.xlu0 %2783
        %2785 = vrot.lane.b32.xlu0 %v2770, 126
        %v2786 = vpop.permute.xlu0 %2785
        %2787 = vrot.lane.b32.xlu0 %v2771, 126
        %v2788 = vpop.permute.xlu0 %2787
        %2789 = vrot.lane.b32.xlu0 %v2772, 126
        %v2790 = vpop.permute.xlu0 %2789
        %vm2791 = vcmask 1031168
        %v2792 = vsel %vm2791, %v2780, %v2782
        %v2793 = vsel %vm2791, %v2782, %v2784
        %v2794 = vsel %vm2791, %v2786, %v2788
        %v2795 = vsel %vm2791, %v2788, %v2790
        %v2802 = vadd.f32 %v2759, %v2792
        %v2803 = vadd.f32 %v2760, %v2793
        %v2804 = vadd.f32 %v2761, %v2784
        %v2805 = vadd.f32 %v2762, %v2794
        %v2806 = vadd.f32 %v2763, %v2795
        %v2807 = vadd.f32 %v2764, %v2790
        %s2808 = sld [smem:[#allocation5]]
        %v2809 = vstv %s2808
        %v2810 = vadd.f32 %v2802, %v2809
        %v2811 = vadd.f32 %v2803, %v2809
        %v2812 = vadd.f32 %v2804, %v2809
        %v2813 = vadd.f32 %v2805, %v2809
        %v2814 = vadd.f32 %v2806, %v2809
        %v2815 = vadd.f32 %v2807, %v2809
        %v2816 = vmax.f32 %v2810, 0.0
        %v2817 = vmax.f32 %v2811, 0.0
        %v2818 = vmax.f32 %v2812, 0.0
        %v2819 = vmax.f32 %v2813, 0.0
        %v2820 = vmax.f32 %v2814, 0.0
        %v2821 = vmax.f32 %v2815, 0.0
        %vm2822 = vcmask 343040
        %v2823 = vsel %vm2822, %v2818, -inf
        %v2824 = vmax.f32 %v2816, %v2823
        %v2825 = vmax.f32 %v2824, %v2817
        %2826 = vmax.xlane.f32.xlu0 %v2825
        %v2827 = vpop.xlane.xlu0 %2826
        %v2828 = vsel %vm2822, %v2821, -inf
        %v2829 = vmax.f32 %v2819, %v2828
        %v2830 = vmax.f32 %v2829, %v2820
        %2831 = vmax.xlane.f32.xlu0 %v2830
        %v2832 = vpop.xlane.xlu0 %2831
        %v2833 = vld [vmem:[%s10] sm:$0x1]
        %v2834 = vperm.slane %v2833, 0
        %v2835 = vmul.f32 %v2827, %v2834
        %v2836 = vmul.f32 %v2832, %v2834
        %v2837 = vadd.f32 %v2713, %v2835
        %v2838 = vadd.f32 %v2713, %v2836
        %s2839 = sld [smem:[#allocation3 + $0x80]]
        %v2840 = vstv %s2839
        %v2841 = vmul.f32 %v2703, %v2840
        %v2842 = vmul.f32 %v2704, %v2840
        %v2843 = vmul.f32 %v2705, %v2840
        %v2844 = vmul.f32 %v2706, %v2840
        %v2845 = vmul.f32 %v2707, %v2840
        %v2846 = vmul.f32 %v2708, %v2840
        %s2847 = sld [smem:[#allocation3 + $0x81]]
        %v2848 = vstv %s2847
        %v2849 = vmul.f32 %v2703, %v2848
        %v2850 = vmul.f32 %v2704, %v2848
        %v2851 = vmul.f32 %v2705, %v2848
        %v2852 = vmul.f32 %v2706, %v2848
        %v2853 = vmul.f32 %v2707, %v2848
        %v2854 = vmul.f32 %v2708, %v2848
        %2861 = vrot.lane.b32.xlu0 %v2849, 127
        %v2862 = vpop.permute.xlu0 %2861
        %2863 = vrot.lane.b32.xlu0 %v2850, 127
        %v2864 = vpop.permute.xlu0 %2863
        %2865 = vrot.lane.b32.xlu0 %v2851, 127
        %v2866 = vpop.permute.xlu0 %2865
        %2867 = vrot.lane.b32.xlu0 %v2852, 127
        %v2868 = vpop.permute.xlu0 %2867
        %2869 = vrot.lane.b32.xlu0 %v2853, 127
        %v2870 = vpop.permute.xlu0 %2869
        %2871 = vrot.lane.b32.xlu0 %v2854, 127
        %v2872 = vpop.permute.xlu0 %2871
        %v2873 = vsel %vm2748, %v2862, %v2864
        %v2874 = vsel %vm2748, %v2864, %v2866
        %v2875 = vsel %vm2748, %v2868, %v2870
        %v2876 = vsel %vm2748, %v2870, %v2872
        %v2883 = vadd.f32 %v2841, %v2873
        %v2884 = vadd.f32 %v2842, %v2874
        %v2885 = vadd.f32 %v2843, %v2866
        %v2886 = vadd.f32 %v2844, %v2875
        %v2887 = vadd.f32 %v2845, %v2876
        %v2888 = vadd.f32 %v2846, %v2872
        %s2889 = sld [smem:[#allocation3 + $0x82]]
        %v2890 = vstv %s2889
        %v2891 = vmul.f32 %v2703, %v2890
        %v2892 = vmul.f32 %v2704, %v2890
        %v2893 = vmul.f32 %v2705, %v2890
        %v2894 = vmul.f32 %v2706, %v2890
        %v2895 = vmul.f32 %v2707, %v2890
        %v2896 = vmul.f32 %v2708, %v2890
        %2903 = vrot.lane.b32.xlu0 %v2891, 126
        %v2904 = vpop.permute.xlu0 %2903
        %2905 = vrot.lane.b32.xlu0 %v2892, 126
        %v2906 = vpop.permute.xlu0 %2905
        %2907 = vrot.lane.b32.xlu0 %v2893, 126
        %v2908 = vpop.permute.xlu0 %2907
        %2909 = vrot.lane.b32.xlu0 %v2894, 126
        %v2910 = vpop.permute.xlu0 %2909
        %2911 = vrot.lane.b32.xlu0 %v2895, 126
        %v2912 = vpop.permute.xlu0 %2911
        %2913 = vrot.lane.b32.xlu0 %v2896, 126
        %v2914 = vpop.permute.xlu0 %2913
        %v2915 = vsel %vm2791, %v2904, %v2906
        %v2916 = vsel %vm2791, %v2906, %v2908
        %v2917 = vsel %vm2791, %v2910, %v2912
        %v2918 = vsel %vm2791, %v2912, %v2914
        %v2925 = vadd.f32 %v2883, %v2915
        %v2926 = vadd.f32 %v2884, %v2916
        %v2927 = vadd.f32 %v2885, %v2908
        %v2928 = vadd.f32 %v2886, %v2917
        %v2929 = vadd.f32 %v2887, %v2918
        %v2930 = vadd.f32 %v2888, %v2914
        %s2931 = sld [smem:[#allocation5 + $0x1]]
        %v2932 = vstv %s2931
        %v2933 = vadd.f32 %v2925, %v2932
        %v2934 = vadd.f32 %v2926, %v2932
        %v2935 = vadd.f32 %v2927, %v2932
        %v2936 = vadd.f32 %v2928, %v2932
        %v2937 = vadd.f32 %v2929, %v2932
        %v2938 = vadd.f32 %v2930, %v2932
        %v2939 = vmax.f32 %v2933, 0.0
        %v2940 = vmax.f32 %v2934, 0.0
        %v2941 = vmax.f32 %v2935, 0.0
        %v2942 = vmax.f32 %v2936, 0.0
        %v2943 = vmax.f32 %v2937, 0.0
        %v2944 = vmax.f32 %v2938, 0.0
        %v2945 = vsel %vm2822, %v2941, -inf
        %v2946 = vmax.f32 %v2939, %v2945
        %v2947 = vmax.f32 %v2946, %v2940
        %2948 = vmax.xlane.f32.xlu0 %v2947
        %v2949 = vpop.xlane.xlu0 %2948
        %v2950 = vsel %vm2822, %v2944, -inf
        %v2951 = vmax.f32 %v2942, %v2950
        %v2952 = vmax.f32 %v2951, %v2943
        %2953 = vmax.xlane.f32.xlu0 %v2952
        %v2954 = vpop.xlane.xlu0 %2953
        %v2955 = vld [vmem:[%s10 + $0x1] sm:$0x1]
        %v2956 = vperm.slane %v2955, 0
        %v2957 = vmul.f32 %v2949, %v2956
        %v2958 = vmul.f32 %v2954, %v2956
        %v2959 = vadd.f32 %v2837, %v2957
        %v2960 = vadd.f32 %v2838, %v2958
        %s2961 = sld [smem:[#allocation3 + $0x100]]
        %v2962 = vstv %s2961
        %v2963 = vmul.f32 %v2703, %v2962
        %v2964 = vmul.f32 %v2704, %v2962
        %v2965 = vmul.f32 %v2705, %v2962
        %v2966 = vmul.f32 %v2706, %v2962
        %v2967 = vmul.f32 %v2707, %v2962
        %v2968 = vmul.f32 %v2708, %v2962
        %s2969 = sld [smem:[#allocation3 + $0x101]]
        %v2970 = vstv %s2969
        %v2971 = vmul.f32 %v2703, %v2970
        %v2972 = vmul.f32 %v2704, %v2970
        %v2973 = vmul.f32 %v2705, %v2970
        %v2974 = vmul.f32 %v2706, %v2970
        %v2975 = vmul.f32 %v2707, %v2970
        %v2976 = vmul.f32 %v2708, %v2970
        %2983 = vrot.lane.b32.xlu0 %v2971, 127
        %v2984 = vpop.permute.xlu0 %2983
        %2985 = vrot.lane.b32.xlu0 %v2972, 127
        %v2986 = vpop.permute.xlu0 %2985
        %2987 = vrot.lane.b32.xlu0 %v2973, 127
        %v2988 = vpop.permute.xlu0 %2987
        %2989 = vrot.lane.b32.xlu0 %v2974, 127
        %v2990 = vpop.permute.xlu0 %2989
        %2991 = vrot.lane.b32.xlu0 %v2975, 127
        %v2992 = vpop.permute.xlu0 %2991
        %2993 = vrot.lane.b32.xlu0 %v2976, 127
        %v2994 = vpop.permute.xlu0 %2993
        %v2995 = vsel %vm2748, %v2984, %v2986
        %v2996 = vsel %vm2748, %v2986, %v2988
        %v2997 = vsel %vm2748, %v2990, %v2992
        %v2998 = vsel %vm2748, %v2992, %v2994
        %v3005 = vadd.f32 %v2963, %v2995
        %v3006 = vadd.f32 %v2964, %v2996
        %v3007 = vadd.f32 %v2965, %v2988
        %v3008 = vadd.f32 %v2966, %v2997
        %v3009 = vadd.f32 %v2967, %v2998
        %v3010 = vadd.f32 %v2968, %v2994
        %s3011 = sld [smem:[#allocation3 + $0x102]]
        %v3012 = vstv %s3011
        %v3013 = vmul.f32 %v2703, %v3012
        %v3014 = vmul.f32 %v2704, %v3012
        %v3015 = vmul.f32 %v2705, %v3012
        %v3016 = vmul.f32 %v2706, %v3012
        %v3017 = vmul.f32 %v2707, %v3012
        %v3018 = vmul.f32 %v2708, %v3012
        %3025 = vrot.lane.b32.xlu0 %v3013, 126
        %v3026 = vpop.permute.xlu0 %3025
        %3027 = vrot.lane.b32.xlu0 %v3014, 126
        %v3028 = vpop.permute.xlu0 %3027
        %3029 = vrot.lane.b32.xlu0 %v3015, 126
        %v3030 = vpop.permute.xlu0 %3029
        %3031 = vrot.lane.b32.xlu0 %v3016, 126
        %v3032 = vpop.permute.xlu0 %3031
        %3033 = vrot.lane.b32.xlu0 %v3017, 126
        %v3034 = vpop.permute.xlu0 %3033
        %3035 = vrot.lane.b32.xlu0 %v3018, 126
        %v3036 = vpop.permute.xlu0 %3035
        %v3037 = vsel %vm2791, %v3026, %v3028
        %v3038 = vsel %vm2791, %v3028, %v3030
        %v3039 = vsel %vm2791, %v3032, %v3034
        %v3040 = vsel %vm2791, %v3034, %v3036
        %v3047 = vadd.f32 %v3005, %v3037
        %v3048 = vadd.f32 %v3006, %v3038
        %v3049 = vadd.f32 %v3007, %v3030
        %v3050 = vadd.f32 %v3008, %v3039
        %v3051 = vadd.f32 %v3009, %v3040
        %v3052 = vadd.f32 %v3010, %v3036
        %s3053 = sld [smem:[#allocation5 + $0x2]]
        %v3054 = vstv %s3053
        %v3055 = vadd.f32 %v3047, %v3054
        %v3056 = vadd.f32 %v3048, %v3054
        %v3057 = vadd.f32 %v3049, %v3054
        %v3058 = vadd.f32 %v3050, %v3054
        %v3059 = vadd.f32 %v3051, %v3054
        %v3060 = vadd.f32 %v3052, %v3054
        %v3061 = vmax.f32 %v3055, 0.0
        %v3062 = vmax.f32 %v3056, 0.0
        %v3063 = vmax.f32 %v3057, 0.0
        %v3064 = vmax.f32 %v3058, 0.0
        %v3065 = vmax.f32 %v3059, 0.0
        %v3066 = vmax.f32 %v3060, 0.0
        %v3067 = vsel %vm2822, %v3063, -inf
        %v3068 = vmax.f32 %v3061, %v3067
        %v3069 = vmax.f32 %v3068, %v3062
        %3070 = vmax.xlane.f32.xlu0 %v3069
        %v3071 = vpop.xlane.xlu0 %3070
        %v3072 = vsel %vm2822, %v3066, -inf
        %v3073 = vmax.f32 %v3064, %v3072
        %v3074 = vmax.f32 %v3073, %v3065
        %3075 = vmax.xlane.f32.xlu0 %v3074
        %v3076 = vpop.xlane.xlu0 %3075
        %v3077 = vld [vmem:[%s10 + $0x2] sm:$0x1]
        %v3078 = vperm.slane %v3077, 0
        %v3079 = vmul.f32 %v3071, %v3078
        %v3080 = vmul.f32 %v3076, %v3078
        %v3081 = vadd.f32 %v2959, %v3079
        %v3082 = vadd.f32 %v2960, %v3080
        %s3083 = sld [smem:[#allocation3 + $0x180]]
        %v3084 = vstv %s3083
        %v3085 = vmul.f32 %v2703, %v3084
        %v3086 = vmul.f32 %v2704, %v3084
        %v3087 = vmul.f32 %v2705, %v3084
        %v3088 = vmul.f32 %v2706, %v3084
        %v3089 = vmul.f32 %v2707, %v3084
        %v3090 = vmul.f32 %v2708, %v3084
        %s3091 = sld [smem:[#allocation3 + $0x181]]
        %v3092 = vstv %s3091
        %v3093 = vmul.f32 %v2703, %v3092
        %v3094 = vmul.f32 %v2704, %v3092
        %v3095 = vmul.f32 %v2705, %v3092
        %v3096 = vmul.f32 %v2706, %v3092
        %v3097 = vmul.f32 %v2707, %v3092
        %v3098 = vmul.f32 %v2708, %v3092
        %3105 = vrot.lane.b32.xlu0 %v3093, 127
        %v3106 = vpop.permute.xlu0 %3105
        %3107 = vrot.lane.b32.xlu0 %v3094, 127
        %v3108 = vpop.permute.xlu0 %3107
        %3109 = vrot.lane.b32.xlu0 %v3095, 127
        %v3110 = vpop.permute.xlu0 %3109
        %3111 = vrot.lane.b32.xlu0 %v3096, 127
        %v3112 = vpop.permute.xlu0 %3111
        %3113 = vrot.lane.b32.xlu0 %v3097, 127
        %v3114 = vpop.permute.xlu0 %3113
        %3115 = vrot.lane.b32.xlu0 %v3098, 127
        %v3116 = vpop.permute.xlu0 %3115
        %v3117 = vsel %vm2748, %v3106, %v3108
        %v3118 = vsel %vm2748, %v3108, %v3110
        %v3119 = vsel %vm2748, %v3112, %v3114
        %v3120 = vsel %vm2748, %v3114, %v3116
        %v3127 = vadd.f32 %v3085, %v3117
        %v3128 = vadd.f32 %v3086, %v3118
        %v3129 = vadd.f32 %v3087, %v3110
        %v3130 = vadd.f32 %v3088, %v3119
        %v3131 = vadd.f32 %v3089, %v3120
        %v3132 = vadd.f32 %v3090, %v3116
        %s3133 = sld [smem:[#allocation3 + $0x182]]
        %v3134 = vstv %s3133
        %v3135 = vmul.f32 %v2703, %v3134
        %v3136 = vmul.f32 %v2704, %v3134
        %v3137 = vmul.f32 %v2705, %v3134
        %v3138 = vmul.f32 %v2706, %v3134
        %v3139 = vmul.f32 %v2707, %v3134
        %v3140 = vmul.f32 %v2708, %v3134
        %3147 = vrot.lane.b32.xlu0 %v3135, 126
        %v3148 = vpop.permute.xlu0 %3147
        %3149 = vrot.lane.b32.xlu0 %v3136, 126
        %v3150 = vpop.permute.xlu0 %3149
        %3151 = vrot.lane.b32.xlu0 %v3137, 126
        %v3152 = vpop.permute.xlu0 %3151
        %3153 = vrot.lane.b32.xlu0 %v3138, 126
        %v3154 = vpop.permute.xlu0 %3153
        %3155 = vrot.lane.b32.xlu0 %v3139, 126
        %v3156 = vpop.permute.xlu0 %3155
        %3157 = vrot.lane.b32.xlu0 %v3140, 126
        %v3158 = vpop.permute.xlu0 %3157
        %v3159 = vsel %vm2791, %v3148, %v3150
        %v3160 = vsel %vm2791, %v3150, %v3152
        %v3161 = vsel %vm2791, %v3154, %v3156
        %v3162 = vsel %vm2791, %v3156, %v3158
        %v3169 = vadd.f32 %v3127, %v3159
        %v3170 = vadd.f32 %v3128, %v3160
        %v3171 = vadd.f32 %v3129, %v3152
        %v3172 = vadd.f32 %v3130, %v3161
        %v3173 = vadd.f32 %v3131, %v3162
        %v3174 = vadd.f32 %v3132, %v3158
        %s3175 = sld [smem:[#allocation5 + $0x3]]
        %v3176 = vstv %s3175
        %v3177 = vadd.f32 %v3169, %v3176
        %v3178 = vadd.f32 %v3170, %v3176
        %v3179 = vadd.f32 %v3171, %v3176
        %v3180 = vadd.f32 %v3172, %v3176
        %v3181 = vadd.f32 %v3173, %v3176
        %v3182 = vadd.f32 %v3174, %v3176
        %v3183 = vmax.f32 %v3177, 0.0
        %v3184 = vmax.f32 %v3178, 0.0
        %v3185 = vmax.f32 %v3179, 0.0
        %v3186 = vmax.f32 %v3180, 0.0
        %v3187 = vmax.f32 %v3181, 0.0
        %v3188 = vmax.f32 %v3182, 0.0
        %v3189 = vsel %vm2822, %v3185, -inf
        %v3190 = vmax.f32 %v3183, %v3189
        %v3191 = vmax.f32 %v3190, %v3184
        %3192 = vmax.xlane.f32.xlu0 %v3191
        %v3193 = vpop.xlane.xlu0 %3192
        %v3194 = vsel %vm2822, %v3188, -inf
        %v3195 = vmax.f32 %v3186, %v3194
        %v3196 = vmax.f32 %v3195, %v3187
        %3197 = vmax.xlane.f32.xlu0 %v3196
        %v3198 = vpop.xlane.xlu0 %3197
        %v3199 = vld [vmem:[%s10 + $0x3] sm:$0x1]
        %v3200 = vperm.slane %v3199, 0
        %v3201 = vmul.f32 %v3193, %v3200
        %v3202 = vmul.f32 %v3198, %v3200
        %v3203 = vadd.f32 %v3081, %v3201
        %v3204 = vadd.f32 %v3082, %v3202
        %s3205 = sld [smem:[#allocation3 + $0x200]]
        %v3206 = vstv %s3205
        %v3207 = vmul.f32 %v2703, %v3206
        %v3208 = vmul.f32 %v2704, %v3206
        %v3209 = vmul.f32 %v2705, %v3206
        %v3210 = vmul.f32 %v2706, %v3206
        %v3211 = vmul.f32 %v2707, %v3206
        %v3212 = vmul.f32 %v2708, %v3206
        %s3213 = sld [smem:[#allocation3 + $0x201]]
        %v3214 = vstv %s3213
        %v3215 = vmul.f32 %v2703, %v3214
        %v3216 = vmul.f32 %v2704, %v3214
        %v3217 = vmul.f32 %v2705, %v3214
        %v3218 = vmul.f32 %v2706, %v3214
        %v3219 = vmul.f32 %v2707, %v3214
        %v3220 = vmul.f32 %v2708, %v3214
        %3227 = vrot.lane.b32.xlu0 %v3215, 127
        %v3228 = vpop.permute.xlu0 %3227
        %3229 = vrot.lane.b32.xlu0 %v3216, 127
        %v3230 = vpop.permute.xlu0 %3229
        %3231 = vrot.lane.b32.xlu0 %v3217, 127
        %v3232 = vpop.permute.xlu0 %3231
        %3233 = vrot.lane.b32.xlu0 %v3218, 127
        %v3234 = vpop.permute.xlu0 %3233
        %3235 = vrot.lane.b32.xlu0 %v3219, 127
        %v3236 = vpop.permute.xlu0 %3235
        %3237 = vrot.lane.b32.xlu0 %v3220, 127
        %v3238 = vpop.permute.xlu0 %3237
        %v3239 = vsel %vm2748, %v3228, %v3230
        %v3240 = vsel %vm2748, %v3230, %v3232
        %v3241 = vsel %vm2748, %v3234, %v3236
        %v3242 = vsel %vm2748, %v3236, %v3238
        %v3249 = vadd.f32 %v3207, %v3239
        %v3250 = vadd.f32 %v3208, %v3240
        %v3251 = vadd.f32 %v3209, %v3232
        %v3252 = vadd.f32 %v3210, %v3241
        %v3253 = vadd.f32 %v3211, %v3242
        %v3254 = vadd.f32 %v3212, %v3238
        %s3255 = sld [smem:[#allocation3 + $0x202]]
        %v3256 = vstv %s3255
        %v3257 = vmul.f32 %v2703, %v3256
        %v3258 = vmul.f32 %v2704, %v3256
        %v3259 = vmul.f32 %v2705, %v3256
        %v3260 = vmul.f32 %v2706, %v3256
        %v3261 = vmul.f32 %v2707, %v3256
        %v3262 = vmul.f32 %v2708, %v3256
        %3269 = vrot.lane.b32.xlu0 %v3257, 126
        %v3270 = vpop.permute.xlu0 %3269
        %3271 = vrot.lane.b32.xlu0 %v3258, 126
        %v3272 = vpop.permute.xlu0 %3271
        %3273 = vrot.lane.b32.xlu0 %v3259, 126
        %v3274 = vpop.permute.xlu0 %3273
        %3275 = vrot.lane.b32.xlu0 %v3260, 126
        %v3276 = vpop.permute.xlu0 %3275
        %3277 = vrot.lane.b32.xlu0 %v3261, 126
        %v3278 = vpop.permute.xlu0 %3277
        %3279 = vrot.lane.b32.xlu0 %v3262, 126
        %v3280 = vpop.permute.xlu0 %3279
        %v3281 = vsel %vm2791, %v3270, %v3272
        %v3282 = vsel %vm2791, %v3272, %v3274
        %v3283 = vsel %vm2791, %v3276, %v3278
        %v3284 = vsel %vm2791, %v3278, %v3280
        %v3291 = vadd.f32 %v3249, %v3281
        %v3292 = vadd.f32 %v3250, %v3282
        %v3293 = vadd.f32 %v3251, %v3274
        %v3294 = vadd.f32 %v3252, %v3283
        %v3295 = vadd.f32 %v3253, %v3284
        %v3296 = vadd.f32 %v3254, %v3280
        %s3297 = sld [smem:[#allocation5 + $0x4]]
        %v3298 = vstv %s3297
        %v3299 = vadd.f32 %v3291, %v3298
        %v3300 = vadd.f32 %v3292, %v3298
        %v3301 = vadd.f32 %v3293, %v3298
        %v3302 = vadd.f32 %v3294, %v3298
        %v3303 = vadd.f32 %v3295, %v3298
        %v3304 = vadd.f32 %v3296, %v3298
        %v3305 = vmax.f32 %v3299, 0.0
        %v3306 = vmax.f32 %v3300, 0.0
        %v3307 = vmax.f32 %v3301, 0.0
        %v3308 = vmax.f32 %v3302, 0.0
        %v3309 = vmax.f32 %v3303, 0.0
        %v3310 = vmax.f32 %v3304, 0.0
        %v3311 = vsel %vm2822, %v3307, -inf
        %v3312 = vmax.f32 %v3305, %v3311
        %v3313 = vmax.f32 %v3312, %v3306
        %3314 = vmax.xlane.f32.xlu0 %v3313
        %v3315 = vpop.xlane.xlu0 %3314
        %v3316 = vsel %vm2822, %v3310, -inf
        %v3317 = vmax.f32 %v3308, %v3316
        %v3318 = vmax.f32 %v3317, %v3309
        %3319 = vmax.xlane.f32.xlu0 %v3318
        %v3320 = vpop.xlane.xlu0 %3319
        %v3321 = vld [vmem:[%s10 + $0x4] sm:$0x1]
        %v3322 = vperm.slane %v3321, 0
        %v3323 = vmul.f32 %v3315, %v3322
        %v3324 = vmul.f32 %v3320, %v3322
        %v3325 = vadd.f32 %v3203, %v3323
        %v3326 = vadd.f32 %v3204, %v3324
        %s3327 = sld [smem:[#allocation3 + $0x280]]
        %v3328 = vstv %s3327
        %v3329 = vmul.f32 %v2703, %v3328
        %v3330 = vmul.f32 %v2704, %v3328
        %v3331 = vmul.f32 %v2705, %v3328
        %v3332 = vmul.f32 %v2706, %v3328
        %v3333 = vmul.f32 %v2707, %v3328
        %v3334 = vmul.f32 %v2708, %v3328
        %s3335 = sld [smem:[#allocation3 + $0x281]]
        %v3336 = vstv %s3335
        %v3337 = vmul.f32 %v2703, %v3336
        %v3338 = vmul.f32 %v2704, %v3336
        %v3339 = vmul.f32 %v2705, %v3336
        %v3340 = vmul.f32 %v2706, %v3336
        %v3341 = vmul.f32 %v2707, %v3336
        %v3342 = vmul.f32 %v2708, %v3336
        %3349 = vrot.lane.b32.xlu0 %v3337, 127
        %v3350 = vpop.permute.xlu0 %3349
        %3351 = vrot.lane.b32.xlu0 %v3338, 127
        %v3352 = vpop.permute.xlu0 %3351
        %3353 = vrot.lane.b32.xlu0 %v3339, 127
        %v3354 = vpop.permute.xlu0 %3353
        %3355 = vrot.lane.b32.xlu0 %v3340, 127
        %v3356 = vpop.permute.xlu0 %3355
        %3357 = vrot.lane.b32.xlu0 %v3341, 127
        %v3358 = vpop.permute.xlu0 %3357
        %3359 = vrot.lane.b32.xlu0 %v3342, 127
        %v3360 = vpop.permute.xlu0 %3359
        %v3361 = vsel %vm2748, %v3350, %v3352
        %v3362 = vsel %vm2748, %v3352, %v3354
        %v3363 = vsel %vm2748, %v3356, %v3358
        %v3364 = vsel %vm2748, %v3358, %v3360
        %v3371 = vadd.f32 %v3329, %v3361
        %v3372 = vadd.f32 %v3330, %v3362
        %v3373 = vadd.f32 %v3331, %v3354
        %v3374 = vadd.f32 %v3332, %v3363
        %v3375 = vadd.f32 %v3333, %v3364
        %v3376 = vadd.f32 %v3334, %v3360
        %s3377 = sld [smem:[#allocation3 + $0x282]]
        %v3378 = vstv %s3377
        %v3379 = vmul.f32 %v2703, %v3378
        %v3380 = vmul.f32 %v2704, %v3378
        %v3381 = vmul.f32 %v2705, %v3378
        %v3382 = vmul.f32 %v2706, %v3378
        %v3383 = vmul.f32 %v2707, %v3378
        %v3384 = vmul.f32 %v2708, %v3378
        %3391 = vrot.lane.b32.xlu0 %v3379, 126
        %v3392 = vpop.permute.xlu0 %3391
        %3393 = vrot.lane.b32.xlu0 %v3380, 126
        %v3394 = vpop.permute.xlu0 %3393
        %3395 = vrot.lane.b32.xlu0 %v3381, 126
        %v3396 = vpop.permute.xlu0 %3395
        %3397 = vrot.lane.b32.xlu0 %v3382, 126
        %v3398 = vpop.permute.xlu0 %3397
        %3399 = vrot.lane.b32.xlu0 %v3383, 126
        %v3400 = vpop.permute.xlu0 %3399
        %3401 = vrot.lane.b32.xlu0 %v3384, 126
        %v3402 = vpop.permute.xlu0 %3401
        %v3403 = vsel %vm2791, %v3392, %v3394
        %v3404 = vsel %vm2791, %v3394, %v3396
        %v3405 = vsel %vm2791, %v3398, %v3400
        %v3406 = vsel %vm2791, %v3400, %v3402
        %v3413 = vadd.f32 %v3371, %v3403
        %v3414 = vadd.f32 %v3372, %v3404
        %v3415 = vadd.f32 %v3373, %v3396
        %v3416 = vadd.f32 %v3374, %v3405
        %v3417 = vadd.f32 %v3375, %v3406
        %v3418 = vadd.f32 %v3376, %v3402
        %s3419 = sld [smem:[#allocation5 + $0x5]]
        %v3420 = vstv %s3419
        %v3421 = vadd.f32 %v3413, %v3420
        %v3422 = vadd.f32 %v3414, %v3420
        %v3423 = vadd.f32 %v3415, %v3420
        %v3424 = vadd.f32 %v3416, %v3420
        %v3425 = vadd.f32 %v3417, %v3420
        %v3426 = vadd.f32 %v3418, %v3420
        %v3427 = vmax.f32 %v3421, 0.0
        %v3428 = vmax.f32 %v3422, 0.0
        %v3429 = vmax.f32 %v3423, 0.0
        %v3430 = vmax.f32 %v3424, 0.0
        %v3431 = vmax.f32 %v3425, 0.0
        %v3432 = vmax.f32 %v3426, 0.0
        %v3433 = vsel %vm2822, %v3429, -inf
        %v3434 = vmax.f32 %v3427, %v3433
        %v3435 = vmax.f32 %v3434, %v3428
        %3436 = vmax.xlane.f32.xlu0 %v3435
        %v3437 = vpop.xlane.xlu0 %3436
        %v3438 = vsel %vm2822, %v3432, -inf
        %v3439 = vmax.f32 %v3430, %v3438
        %v3440 = vmax.f32 %v3439, %v3431
        %3441 = vmax.xlane.f32.xlu0 %v3440
        %v3442 = vpop.xlane.xlu0 %3441
        %v3443 = vld [vmem:[%s10 + $0x5] sm:$0x1]
        %v3444 = vperm.slane %v3443, 0
        %v3445 = vmul.f32 %v3437, %v3444
        %v3446 = vmul.f32 %v3442, %v3444
        %v3447 = vadd.f32 %v3325, %v3445
        %v3448 = vadd.f32 %v3326, %v3446
        %s3449 = sld [smem:[#allocation3 + $0x300]]
        %v3450 = vstv %s3449
        %v3451 = vmul.f32 %v2703, %v3450
        %v3452 = vmul.f32 %v2704, %v3450
        %v3453 = vmul.f32 %v2705, %v3450
        %v3454 = vmul.f32 %v2706, %v3450
        %v3455 = vmul.f32 %v2707, %v3450
        %v3456 = vmul.f32 %v2708, %v3450
        %s3457 = sld [smem:[#allocation3 + $0x301]]
        %v3458 = vstv %s3457
        %v3459 = vmul.f32 %v2703, %v3458
        %v3460 = vmul.f32 %v2704, %v3458
        %v3461 = vmul.f32 %v2705, %v3458
        %v3462 = vmul.f32 %v2706, %v3458
        %v3463 = vmul.f32 %v2707, %v3458
        %v3464 = vmul.f32 %v2708, %v3458
        %3471 = vrot.lane.b32.xlu0 %v3459, 127
        %v3472 = vpop.permute.xlu0 %3471
        %3473 = vrot.lane.b32.xlu0 %v3460, 127
        %v3474 = vpop.permute.xlu0 %3473
        %3475 = vrot.lane.b32.xlu0 %v3461, 127
        %v3476 = vpop.permute.xlu0 %3475
        %3477 = vrot.lane.b32.xlu0 %v3462, 127
        %v3478 = vpop.permute.xlu0 %3477
        %3479 = vrot.lane.b32.xlu0 %v3463, 127
        %v3480 = vpop.permute.xlu0 %3479
        %3481 = vrot.lane.b32.xlu0 %v3464, 127
        %v3482 = vpop.permute.xlu0 %3481
        %v3483 = vsel %vm2748, %v3472, %v3474
        %v3484 = vsel %vm2748, %v3474, %v3476
        %v3485 = vsel %vm2748, %v3478, %v3480
        %v3486 = vsel %vm2748, %v3480, %v3482
        %v3493 = vadd.f32 %v3451, %v3483
        %v3494 = vadd.f32 %v3452, %v3484
        %v3495 = vadd.f32 %v3453, %v3476
        %v3496 = vadd.f32 %v3454, %v3485
        %v3497 = vadd.f32 %v3455, %v3486
        %v3498 = vadd.f32 %v3456, %v3482
        %s3499 = sld [smem:[#allocation3 + $0x302]]
        %v3500 = vstv %s3499
        %v3501 = vmul.f32 %v2703, %v3500
        %v3502 = vmul.f32 %v2704, %v3500
        %v3503 = vmul.f32 %v2705, %v3500
        %v3504 = vmul.f32 %v2706, %v3500
        %v3505 = vmul.f32 %v2707, %v3500
        %v3506 = vmul.f32 %v2708, %v3500
        %3513 = vrot.lane.b32.xlu0 %v3501, 126
        %v3514 = vpop.permute.xlu0 %3513
        %3515 = vrot.lane.b32.xlu0 %v3502, 126
        %v3516 = vpop.permute.xlu0 %3515
        %3517 = vrot.lane.b32.xlu0 %v3503, 126
        %v3518 = vpop.permute.xlu0 %3517
        %3519 = vrot.lane.b32.xlu0 %v3504, 126
        %v3520 = vpop.permute.xlu0 %3519
        %3521 = vrot.lane.b32.xlu0 %v3505, 126
        %v3522 = vpop.permute.xlu0 %3521
        %3523 = vrot.lane.b32.xlu0 %v3506, 126
        %v3524 = vpop.permute.xlu0 %3523
        %v3525 = vsel %vm2791, %v3514, %v3516
        %v3526 = vsel %vm2791, %v3516, %v3518
        %v3527 = vsel %vm2791, %v3520, %v3522
        %v3528 = vsel %vm2791, %v3522, %v3524
        %v3535 = vadd.f32 %v3493, %v3525
        %v3536 = vadd.f32 %v3494, %v3526
        %v3537 = vadd.f32 %v3495, %v3518
        %v3538 = vadd.f32 %v3496, %v3527
        %v3539 = vadd.f32 %v3497, %v3528
        %v3540 = vadd.f32 %v3498, %v3524
        %s3541 = sld [smem:[#allocation5 + $0x6]]
        %v3542 = vstv %s3541
        %v3543 = vadd.f32 %v3535, %v3542
        %v3544 = vadd.f32 %v3536, %v3542
        %v3545 = vadd.f32 %v3537, %v3542
        %v3546 = vadd.f32 %v3538, %v3542
        %v3547 = vadd.f32 %v3539, %v3542
        %v3548 = vadd.f32 %v3540, %v3542
        %v3549 = vmax.f32 %v3543, 0.0
        %v3550 = vmax.f32 %v3544, 0.0
        %v3551 = vmax.f32 %v3545, 0.0
        %v3552 = vmax.f32 %v3546, 0.0
        %v3553 = vmax.f32 %v3547, 0.0
        %v3554 = vmax.f32 %v3548, 0.0
        %v3555 = vsel %vm2822, %v3551, -inf
        %v3556 = vmax.f32 %v3549, %v3555
        %v3557 = vmax.f32 %v3556, %v3550
        %3558 = vmax.xlane.f32.xlu0 %v3557
        %v3559 = vpop.xlane.xlu0 %3558
        %v3560 = vsel %vm2822, %v3554, -inf
        %v3561 = vmax.f32 %v3552, %v3560
        %v3562 = vmax.f32 %v3561, %v3553
        %3563 = vmax.xlane.f32.xlu0 %v3562
        %v3564 = vpop.xlane.xlu0 %3563
        %v3565 = vld [vmem:[%s10 + $0x6] sm:$0x1]
        %v3566 = vperm.slane %v3565, 0
        %v3567 = vmul.f32 %v3559, %v3566
        %v3568 = vmul.f32 %v3564, %v3566
        %v3569 = vadd.f32 %v3447, %v3567
        %v3570 = vadd.f32 %v3448, %v3568
        %s3571 = sld [smem:[#allocation3 + $0x380]]
        %v3572 = vstv %s3571
        %v3573 = vmul.f32 %v2703, %v3572
        %v3574 = vmul.f32 %v2704, %v3572
        %v3575 = vmul.f32 %v2705, %v3572
        %v3576 = vmul.f32 %v2706, %v3572
        %v3577 = vmul.f32 %v2707, %v3572
        %v3578 = vmul.f32 %v2708, %v3572
        %s3579 = sld [smem:[#allocation3 + $0x381]]
        %v3580 = vstv %s3579
        %v3581 = vmul.f32 %v2703, %v3580
        %v3582 = vmul.f32 %v2704, %v3580
        %v3583 = vmul.f32 %v2705, %v3580
        %v3584 = vmul.f32 %v2706, %v3580
        %v3585 = vmul.f32 %v2707, %v3580
        %v3586 = vmul.f32 %v2708, %v3580
        %3593 = vrot.lane.b32.xlu0 %v3581, 127
        %v3594 = vpop.permute.xlu0 %3593
        %3595 = vrot.lane.b32.xlu0 %v3582, 127
        %v3596 = vpop.permute.xlu0 %3595
        %3597 = vrot.lane.b32.xlu0 %v3583, 127
        %v3598 = vpop.permute.xlu0 %3597
        %3599 = vrot.lane.b32.xlu0 %v3584, 127
        %v3600 = vpop.permute.xlu0 %3599
        %3601 = vrot.lane.b32.xlu0 %v3585, 127
        %v3602 = vpop.permute.xlu0 %3601
        %3603 = vrot.lane.b32.xlu0 %v3586, 127
        %v3604 = vpop.permute.xlu0 %3603
        %v3605 = vsel %vm2748, %v3594, %v3596
        %v3606 = vsel %vm2748, %v3596, %v3598
        %v3607 = vsel %vm2748, %v3600, %v3602
        %v3608 = vsel %vm2748, %v3602, %v3604
        %v3615 = vadd.f32 %v3573, %v3605
        %v3616 = vadd.f32 %v3574, %v3606
        %v3617 = vadd.f32 %v3575, %v3598
        %v3618 = vadd.f32 %v3576, %v3607
        %v3619 = vadd.f32 %v3577, %v3608
        %v3620 = vadd.f32 %v3578, %v3604
        %s3621 = sld [smem:[#allocation3 + $0x382]]
        %v3622 = vstv %s3621
        %v3623 = vmul.f32 %v2703, %v3622
        %v3624 = vmul.f32 %v2704, %v3622
        %v3625 = vmul.f32 %v2705, %v3622
        %v3626 = vmul.f32 %v2706, %v3622
        %v3627 = vmul.f32 %v2707, %v3622
        %v3628 = vmul.f32 %v2708, %v3622
        %3635 = vrot.lane.b32.xlu0 %v3623, 126
        %v3636 = vpop.permute.xlu0 %3635
        %3637 = vrot.lane.b32.xlu0 %v3624, 126
        %v3638 = vpop.permute.xlu0 %3637
        %3639 = vrot.lane.b32.xlu0 %v3625, 126
        %v3640 = vpop.permute.xlu0 %3639
        %3641 = vrot.lane.b32.xlu0 %v3626, 126
        %v3642 = vpop.permute.xlu0 %3641
        %3643 = vrot.lane.b32.xlu0 %v3627, 126
        %v3644 = vpop.permute.xlu0 %3643
        %3645 = vrot.lane.b32.xlu0 %v3628, 126
        %v3646 = vpop.permute.xlu0 %3645
        %v3647 = vsel %vm2791, %v3636, %v3638
        %v3648 = vsel %vm2791, %v3638, %v3640
        %v3649 = vsel %vm2791, %v3642, %v3644
        %v3650 = vsel %vm2791, %v3644, %v3646
        %v3657 = vadd.f32 %v3615, %v3647
        %v3658 = vadd.f32 %v3616, %v3648
        %v3659 = vadd.f32 %v3617, %v3640
        %v3660 = vadd.f32 %v3618, %v3649
        %v3661 = vadd.f32 %v3619, %v3650
        %v3662 = vadd.f32 %v3620, %v3646
        %s3663 = sld [smem:[#allocation5 + $0x7]]
        %v3664 = vstv %s3663
        %v3665 = vadd.f32 %v3657, %v3664
        %v3666 = vadd.f32 %v3658, %v3664
        %v3667 = vadd.f32 %v3659, %v3664
        %v3668 = vadd.f32 %v3660, %v3664
        %v3669 = vadd.f32 %v3661, %v3664
        %v3670 = vadd.f32 %v3662, %v3664
        %v3671 = vmax.f32 %v3665, 0.0
        %v3672 = vmax.f32 %v3666, 0.0
        %v3673 = vmax.f32 %v3667, 0.0
        %v3674 = vmax.f32 %v3668, 0.0
        %v3675 = vmax.f32 %v3669, 0.0
        %v3676 = vmax.f32 %v3670, 0.0
        %v3677 = vsel %vm2822, %v3673, -inf
        %v3678 = vmax.f32 %v3671, %v3677
        %v3679 = vmax.f32 %v3678, %v3672
        %3680 = vmax.xlane.f32.xlu0 %v3679
        %v3681 = vpop.xlane.xlu0 %3680
        %v3682 = vsel %vm2822, %v3676, -inf
        %v3683 = vmax.f32 %v3674, %v3682
        %v3684 = vmax.f32 %v3683, %v3675
        %3685 = vmax.xlane.f32.xlu0 %v3684
        %v3686 = vpop.xlane.xlu0 %3685
        %v3687 = vld [vmem:[%s10 + $0x7] sm:$0x1]
        %v3688 = vperm.slane %v3687, 0
        %v3689 = vmul.f32 %v3681, %v3688
        %v3690 = vmul.f32 %v3686, %v3688
        %v3691 = vadd.f32 %v3569, %v3689
        %v3692 = vadd.f32 %v3570, %v3690
        %v3693 = vld [vmem:[%s799] sm:$0xff]
        %v3694 = vld [vmem:[%s799 + $0x8] sm:$0xff]
        %v3695 = vld [vmem:[%s799 + $0x10] sm:$0xff]
        %v3696 = vld [vmem:[%s799 + $0x18] sm:$0xff]
        %v3697 = vld [vmem:[%s799 + $0x20] sm:$0xff]
        %v3698 = vld [vmem:[%s799 + $0x28] sm:$0xff]
        %v3699 = vpack.c.bf16 %v3696, %v3693
        %v3700 = vpack.c.bf16 %v3697, %v3694
        %v3701 = vpack.c.bf16 %v3698, %v3695
        %v3702 = vld [vmem:[%s12] sm:$0xf]
        %v3703 = vld [vmem:[%s12 + $0x4] sm:$0xf]
        %v3704 = vld [vmem:[%s12 + $0x8] sm:$0xf]
        %v3705 = vld [vmem:[%s12 + $0xc] sm:$0xf]
        %v3706 = vld [vmem:[%s12 + $0x10] sm:$0xf]
        %v3707 = vld [vmem:[%s12 + $0x14] sm:$0xf]
        %v3708 = vld [vmem:[%s12 + $0x18] sm:$0xf]
        %v3709 = vld [vmem:[%s12 + $0x1c] sm:$0xf]
        %v3710 = vld [vmem:[%s12 + $0x20] sm:$0xf]
        %v3711 = vld [vmem:[%s12 + $0x24] sm:$0xf]
        %v3712 = vld [vmem:[%s12 + $0x28] sm:$0xf]
        %v3713 = vld [vmem:[%s12 + $0x2c] sm:$0xf]
        %v3714 = vld [vmem:[%s12 + $0x30] sm:$0xf]
        %v3715 = vld [vmem:[%s12 + $0x34] sm:$0xf]
        %v3716 = vld [vmem:[%s12 + $0x38] sm:$0xf]
        %v3717 = vld [vmem:[%s12 + $0x3c] sm:$0xf]
        %v3718 = vld [vmem:[%s12 + $0x40] sm:$0xf]
        %v3719 = vld [vmem:[%s12 + $0x44] sm:$0xf]
        %v3720 = vld [vmem:[%s12 + $0x48] sm:$0xf]
        %v3721 = vld [vmem:[%s12 + $0x4c] sm:$0xf]
        %v3722 = vld [vmem:[%s12 + $0x50] sm:$0xf]
        %v3723 = vld [vmem:[%s12 + $0x54] sm:$0xf]
        %v3724 = vld [vmem:[%s12 + $0x58] sm:$0xf]
        %v3725 = vld [vmem:[%s12 + $0x5c] sm:$0xf]
        %v3726 = vld [vmem:[%s12 + $0x60] sm:$0xf]
        %v3727 = vld [vmem:[%s12 + $0x64] sm:$0xf]
        %v3728 = vld [vmem:[%s12 + $0x68] sm:$0xf]
        %v3729 = vld [vmem:[%s12 + $0x6c] sm:$0xf]
        %v3730 = vld [vmem:[%s12 + $0x70] sm:$0xf]
        %v3731 = vld [vmem:[%s12 + $0x74] sm:$0xf]
        %v3732 = vld [vmem:[%s12 + $0x78] sm:$0xf]
        %v3733 = vld [vmem:[%s12 + $0x7c] sm:$0xf]
        %v3734 = vld [vmem:[%s12 + $0x80] sm:$0xf]
        %v3735 = vld [vmem:[%s12 + $0x84] sm:$0xf]
        %v3736 = vld [vmem:[%s12 + $0x88] sm:$0xf]
        %v3737 = vld [vmem:[%s12 + $0x8c] sm:$0xf]
        %v3738 = vld [vmem:[%s12 + $0x90] sm:$0xf]
        %v3739 = vld [vmem:[%s12 + $0x94] sm:$0x3]
        %v3740 = vld [vmem:[%s13] sm:$0x1]
        %v3742 = vperm.slane %v3740, 0
        %v3782 = vunpack.c.l.b16 %v3702
        %v3783 = vunpack.c.l.b16 %v3703
        %v3784 = vunpack.c.l.b16 %v3704
        %v3785 = vunpack.c.l.b16 %v3705
        %v3786 = vunpack.c.l.b16 %v3706
        %v3787 = vunpack.c.l.b16 %v3707
        %v3788 = vunpack.c.l.b16 %v3708
        %v3789 = vunpack.c.l.b16 %v3709
        %v3790 = vunpack.c.l.b16 %v3710
        %v3791 = vunpack.c.l.b16 %v3711
        %v3792 = vunpack.c.l.b16 %v3712
        %v3793 = vunpack.c.l.b16 %v3713
        %v3794 = vunpack.c.l.b16 %v3714
        %v3795 = vunpack.c.l.b16 %v3715
        %v3796 = vunpack.c.l.b16 %v3716
        %v3797 = vunpack.c.l.b16 %v3717
        %v3798 = vunpack.c.l.b16 %v3718
        %v3799 = vunpack.c.l.b16 %v3719
        %v3800 = vunpack.c.l.b16 %v3720
        %v3801 = vunpack.c.l.b16 %v3721
        %v3802 = vunpack.c.l.b16 %v3722
        %v3803 = vunpack.c.l.b16 %v3723
        %v3804 = vunpack.c.l.b16 %v3724
        %v3805 = vunpack.c.l.b16 %v3725
        %v3806 = vunpack.c.l.b16 %v3726
        %v3807 = vunpack.c.l.b16 %v3727
        %v3808 = vunpack.c.l.b16 %v3728
        %v3809 = vunpack.c.l.b16 %v3729
        %v3810 = vunpack.c.l.b16 %v3730
        %v3811 = vunpack.c.l.b16 %v3731
        %v3812 = vunpack.c.l.b16 %v3732
        %v3813 = vunpack.c.l.b16 %v3733
        %v3814 = vunpack.c.l.b16 %v3734
        %v3815 = vunpack.c.l.b16 %v3735
        %v3816 = vunpack.c.l.b16 %v3736
        %v3817 = vunpack.c.l.b16 %v3737
        %v3818 = vunpack.c.l.b16 %v3738
        %v3819 = vunpack.c.l.b16 %v3739
        %v3820 = vpack.c.b16 %v3783, %v3782
        %v3821 = vpack.c.b16 %v3785, %v3784
        %v3822 = vpack.c.b16 %v3787, %v3786
        %v3823 = vpack.c.b16 %v3789, %v3788
        %v3824 = vpack.c.b16 %v3791, %v3790
        %v3825 = vpack.c.b16 %v3793, %v3792
        %v3826 = vpack.c.b16 %v3795, %v3794
        %v3827 = vpack.c.b16 %v3797, %v3796
        %v3828 = vpack.c.b16 %v3799, %v3798
        %v3829 = vpack.c.b16 %v3801, %v3800
        %v3830 = vpack.c.b16 %v3803, %v3802
        %v3831 = vpack.c.b16 %v3805, %v3804
        %v3832 = vpack.c.b16 %v3807, %v3806
        %v3833 = vpack.c.b16 %v3809, %v3808
        %v3834 = vpack.c.b16 %v3811, %v3810
        %v3835 = vpack.c.b16 %v3813, %v3812
        %v3836 = vpack.c.b16 %v3815, %v3814
        %v3837 = vpack.c.b16 %v3817, %v3816
        %v3838 = vpack.c.b16 %v3819, %v3818
        %v3858 = vsel %vm825, %v3701, 0
        %v3861 = vsel %vm1618, %v3838, 0
        %3863 = vmatpush.bf16.msra.mxu0 %v3827
        %3864 = vmatpush.bf16.msra.mxu0 %v3826
        %3865 = vmatpush.bf16.msra.mxu0 %v3825
        %3866 = vmatpush.bf16.msra.mxu0 %v3824
        %3867 = vmatpush.bf16.msra.mxu0 %v3823
        %3868 = vmatpush.bf16.msra.mxu0 %v3822
        %3869 = vmatpush.bf16.msra.mxu0 %v3821
        %3870 = vmatpush.bf16.msra.mxu0 %v3820
        %3871 = vmatmul.bf16.gmra.mxu0 %v3699
        %v3872 = vpop.f32.mrf.mxu0
        %v3873 = vadd.f32 %v3742, %v3872
        %v3874 = vpop.f32.mrf.mxu0
        %v3875 = vadd.f32 %v3742, %v3874
        %3876 = vdwg.mxu0
        %3877 = vmatpush.bf16.msra.mxu0 %v3835
        %3878 = vmatpush.bf16.msra.mxu0 %v3834
        %3879 = vmatpush.bf16.msra.mxu0 %v3833
        %3880 = vmatpush.bf16.msra.mxu0 %v3832
        %3881 = vmatpush.bf16.msra.mxu0 %v3831
        %3882 = vmatpush.bf16.msra.mxu0 %v3830
        %3883 = vmatpush.bf16.msra.mxu0 %v3829
        %3884 = vmatpush.bf16.msra.mxu0 %v3828
        %3885 = vmatmul.bf16.gmra.mxu0 %v3700
        %v3886 = vpop.f32.mrf.mxu0
        %v3887 = vadd.f32 %v3873, %v3886
        %v3888 = vpop.f32.mrf.mxu0
        %v3889 = vadd.f32 %v3875, %v3888
        %3890 = vdwg.mxu0
        %3891 = vmatpush.bf16.msra.mxu0 0
        %3892 = vmatpush.bf16.msra.mxu0 0
        %3893 = vmatpush.bf16.msra.mxu0 0
        %3894 = vmatpush.bf16.msra.mxu0 0
        %3895 = vmatpush.bf16.msra.mxu0 0
        %3896 = vmatpush.bf16.msra.mxu0 %v3861
        %3897 = vmatpush.bf16.msra.mxu0 %v3837
        %3898 = vmatpush.bf16.msra.mxu0 %v3836
        %3899 = vmatmul.bf16.gmra.mxu0 %v3858
        %v3900 = vpop.f32.mrf.mxu0
        %v3901 = vadd.f32 %v3887, %v3900
        %v3902 = vpop.f32.mrf.mxu0
        %v3903 = vadd.f32 %v3889, %v3902
        %3904 = vdwg.mxu0
        %v3905 = vmax.f32 %v3901, 0.0
        %v3906 = vmax.f32 %v3903, 0.0
        %v3907 = vpack.c.bf16 %v3906, %v3905
        %v3908 = vld [vmem:[%s14] sm:$0xf]
        %v3909 = vld [vmem:[%s14 + $0x4] sm:$0xf]
        %v3910 = vld [vmem:[%s14 + $0x8] sm:$0xf]
        %v3911 = vld [vmem:[%s14 + $0xc] sm:$0xf]
        %v3912 = vld [vmem:[%s14 + $0x10] sm:$0xf]
        %v3913 = vld [vmem:[%s14 + $0x14] sm:$0xf]
        %v3914 = vld [vmem:[%s14 + $0x18] sm:$0xf]
        %v3915 = vld [vmem:[%s14 + $0x1c] sm:$0xf]
        %v3916 = vld [vmem:[%s15] sm:$0x1]
        %v3918 = vperm.slane %v3916, 0
        %v3928 = vunpack.c.l.b16 %v3908
        %v3929 = vunpack.c.l.b16 %v3909
        %v3930 = vunpack.c.l.b16 %v3910
        %v3931 = vunpack.c.l.b16 %v3911
        %v3932 = vunpack.c.l.b16 %v3912
        %v3933 = vunpack.c.l.b16 %v3913
        %v3934 = vunpack.c.l.b16 %v3914
        %v3935 = vunpack.c.l.b16 %v3915
        %v3936 = vpack.c.b16 %v3929, %v3928
        %v3937 = vpack.c.b16 %v3931, %v3930
        %v3938 = vpack.c.b16 %v3933, %v3932
        %v3939 = vpack.c.b16 %v3935, %v3934
        %vm3944 = vcmask 523264
        %v3946 = vsel %vm3944, %v3907, 0
        %3948 = vmatpush.bf16.msra.mxu0 0
        %3949 = vmatpush.bf16.msra.mxu0 0
        %3950 = vmatpush.bf16.msra.mxu0 0
        %3951 = vmatpush.bf16.msra.mxu0 0
        %3952 = vmatpush.bf16.msra.mxu0 %v3939
        %3953 = vmatpush.bf16.msra.mxu0 %v3938
        %3954 = vmatpush.bf16.msra.mxu0 %v3937
        %3955 = vmatpush.bf16.msra.mxu0 %v3936
        %3956 = vmatmul.bf16.gmra.mxu0 %v3946
        %v3957 = vpop.f32.mrf.mxu0
        %v3958 = vadd.f32 %v3918, %v3957
        %v3959 = vpop.f32.mrf.mxu0
        %v3960 = vadd.f32 %v3918, %v3959
        %3961 = vdwg.mxu0
        %v3962 = vmax.f32 %v3958, 0.0
        %v3963 = vmax.f32 %v3960, 0.0
        %v3964 = vpack.c.bf16 %v3963, %v3962
        %v3965 = vld [vmem:[%s16] sm:$0xf]
        %v3966 = vld [vmem:[%s16 + $0x4] sm:$0xf]
        %v3967 = vld [vmem:[%s16 + $0x8] sm:$0xf]
        %v3968 = vld [vmem:[%s16 + $0xc] sm:$0xf]
        %v3969 = vld [vmem:[%s16 + $0x10] sm:$0xf]
        %v3970 = vld [vmem:[%s16 + $0x14] sm:$0xf]
        %v3971 = vld [vmem:[%s17] sm:$0x1]
        %v3973 = vperm.slane %v3971, 0
        %v3981 = vunpack.c.l.b16 %v3965
        %v3982 = vunpack.c.l.b16 %v3966
        %v3983 = vunpack.c.l.b16 %v3967
        %v3984 = vunpack.c.l.b16 %v3968
        %v3985 = vunpack.c.l.b16 %v3969
        %v3986 = vunpack.c.l.b16 %v3970
        %v3987 = vpack.c.b16 %v3982, %v3981
        %v3988 = vpack.c.b16 %v3984, %v3983
        %v3989 = vpack.c.b16 %v3986, %v3985
        %vm3993 = vcmask 392192
        %v3995 = vsel %vm3993, %v3964, 0
        %3997 = vmatpush.bf16.msra.mxu0 0
        %3998 = vmatpush.bf16.msra.mxu0 0
        %3999 = vmatpush.bf16.msra.mxu0 0
        %4000 = vmatpush.bf16.msra.mxu0 0
        %4001 = vmatpush.bf16.msra.mxu0 0
        %4002 = vmatpush.bf16.msra.mxu0 %v3989
        %4003 = vmatpush.bf16.msra.mxu0 %v3988
        %4004 = vmatpush.bf16.msra.mxu0 %v3987
        %4005 = vmatmul.bf16.gmra.mxu0 %v3995
        %v4006 = vpop.f32.mrf.mxu0
        %v4007 = vadd.f32 %v3973, %v4006
        %v4008 = vpop.f32.mrf.mxu0
        %v4009 = vadd.f32 %v3973, %v4008
        %4010 = vdwg.mxu0
        %v4011 = vxor.u32 %v4007, 2147483648
        %v4012 = vxor.u32 %v4009, 2147483648
        %v4013 = vmul.f32 %v4011, 1.442695
        %v4014 = vpow.pop %v4013
        %v4015 = vmul.f32 %v4012, 1.442695
        %v4016 = vpow.pop %v4015
        %v4017 = vadd.f32 %v4014, 1.0
        %v4018 = vadd.f32 %v4016, 1.0
        %v4019 = vrcp.pop %v4017
        %v4020 = vmul.f32 %v4017, %v4019
        %v4021 = vsub.f32 1.0, %v4020
        %v4022 = vmul.f32 %v4019, %v4021
        %v4023 = vadd.f32 %v4019, %v4022
        %vm4024 = vweird.f32 %v4017
        %vm4025 = vweird.f32 %v4019
        %vm4026 = vmor %vm4024, %vm4025
        %v4027 = vsel %vm4026, %v4019, %v4023
        %v4028 = vand.u32 2147483647, %v4017
        %vm4029 = vcmp.eq.f32.partialorder %v4028, 8.507059e+37
        %v4030 = vand.u32 %v4017, 2147483648
        %v4031 = vor.u32 1.1754944e-38, %v4030
        %v4032 = vsel %vm4029, %v4031, %v4027
        %v4033 = vmul.f32 1.0, %v4032
        %v4034 = vrcp.pop %v4018
        %v4035 = vmul.f32 %v4018, %v4034
        %v4036 = vsub.f32 1.0, %v4035
        %v4037 = vmul.f32 %v4034, %v4036
        %v4038 = vadd.f32 %v4034, %v4037
        %vm4039 = vweird.f32 %v4018
        %vm4040 = vweird.f32 %v4034
        %vm4041 = vmor %vm4039, %vm4040
        %v4042 = vsel %vm4041, %v4034, %v4038
        %v4043 = vand.u32 2147483647, %v4018
        %vm4044 = vcmp.eq.f32.partialorder %v4043, 8.507059e+37
        %v4045 = vand.u32 %v4018, 2147483648
        %v4046 = vor.u32 1.1754944e-38, %v4045
        %v4047 = vsel %vm4044, %v4046, %v4042
        %v4048 = vmul.f32 1.0, %v4047
        %v4049 = vsub.f32 %v4033, %v3691
        %v4050 = vsub.f32 %v4048, %v3692
        %v4051 = vpack.c.bf16 %v4050, %v4049
        %v4052 = vld [vmem:[%s18] sm:$0xf]
        %v4053 = vld [vmem:[%s18 + $0x4] sm:$0xf]
        %v4054 = vld [vmem:[%s18 + $0x8] sm:$0xf]
        %v4055 = vld [vmem:[%s18 + $0xc] sm:$0xf]
        %v4056 = vld [vmem:[%s19] sm:$0x1]
        %v4058 = vperm.slane %v4056, 0
        %v4064 = vunpack.c.l.b16 %v4052
        %v4065 = vunpack.c.l.b16 %v4053
        %v4066 = vunpack.c.l.b16 %v4054
        %v4067 = vunpack.c.l.b16 %v4055
        %v4068 = vpack.c.b16 %v4065, %v4064
        %v4069 = vpack.c.b16 %v4067, %v4066
        %vm4072 = vcmask 261120
        %v4074 = vsel %vm4072, %v4051, 0
        %4076 = vmatpush.bf16.msra.mxu0 0
        %4077 = vmatpush.bf16.msra.mxu0 0
        %4078 = vmatpush.bf16.msra.mxu0 0
        %4079 = vmatpush.bf16.msra.mxu0 0
        %4080 = vmatpush.bf16.msra.mxu0 0
        %4081 = vmatpush.bf16.msra.mxu0 0
        %4082 = vmatpush.bf16.msra.mxu0 %v4069
        %4083 = vmatpush.bf16.msra.mxu0 %v4068
        %4084 = vmatmul.bf16.gmra.mxu0 %v4074
        %v4085 = vpop.f32.mrf.mxu0
        %v4086 = vadd.f32 %v4058, %v4085
        %v4087 = vpop.f32.mrf.mxu0
        %v4088 = vadd.f32 %v4058, %v4087
        %4089 = vdwg.mxu0
        %v4090 = vmax.f32 %v4086, 0.0
        %v4091 = vmax.f32 %v4088, 0.0
        %v4092 = vld [vmem:[%s20] sm:$0x1]
        %s4093 = sld [smem:[#allocation2]]
        %v4094 = vstv %s4093
        %v4096 = vsel %vm917, %v4092, 0
        %v4099 = vsel %vm917, %v4090, 0
        %v4102 = vsel %vm917, %v4091, 0
        %4104 = vmatpush.xpose.msra.mxu0 0.0
        %4105 = vmatpush.xpose.msra.mxu0 0.0
        %4106 = vmatpush.xpose.msra.mxu0 0.0
        %4107 = vmatpush.xpose.msra.mxu0 0.0
        %4108 = vmatpush.xpose.msra.mxu0 0.0
        %4109 = vmatpush.xpose.msra.mxu0 0.0
        %4110 = vmatpush.xpose.msra.mxu0 0.0
        %4111 = vmatpush.xpose.msra.mxu0 0.0
        %4112 = vmatpush.xpose.msra.mxu0 0.0
        %4113 = vmatpush.xpose.msra.mxu0 0.0
        %4114 = vmatpush.xpose.msra.mxu0 0.0
        %4115 = vmatpush.xpose.msra.mxu0 0.0
        %4116 = vmatpush.xpose.msra.mxu0 0.0
        %4117 = vmatpush.xpose.msra.mxu0 0.0
        %4118 = vmatpush.xpose.msra.mxu0 %v4102
        %4119 = vmatpush.xpose.msra.mxu0 %v4099
        %4120 = vmatmul.f32.gmra.mxu0 %v4096
        %v4121 = vpop.f32.mrf.mxu0
        %v4122 = vadd.f32 %v4094, %v4121
        %4123 = vdwg.mxu0
        %v4124 = vxor.u32 %v4122, 2147483648
        %v4125 = vmul.f32 %v4124, 1.442695
        %v4126 = vpow.pop %v4125
        %v4127 = vadd.f32 %v4126, 1.0
        %v4128 = vrcp.pop %v4127
        %v4129 = vmul.f32 %v4127, %v4128
        %v4130 = vsub.f32 1.0, %v4129
        %v4131 = vmul.f32 %v4128, %v4130
        %v4132 = vadd.f32 %v4128, %v4131
        %vm4133 = vweird.f32 %v4127
        %vm4134 = vweird.f32 %v4128
        %vm4135 = vmor %vm4133, %vm4134
        %v4136 = vsel %vm4135, %v4128, %v4132
        %v4137 = vand.u32 2147483647, %v4127
        %vm4138 = vcmp.eq.f32.partialorder %v4137, 8.507059e+37
        %v4139 = vand.u32 %v4127, 2147483648
        %v4140 = vor.u32 1.1754944e-38, %v4139
        %v4141 = vsel %vm4138, %v4140, %v4136
        %v4142 = vmul.f32 1.0, %v4141
        %vm4143 = vcmask 122880
        %4144 = vst.msk [vmem:[%s815] sm:$0x1] %vm4143, %v4142
        %p4145 = scmp.lt.s32.totalorder %s38, 1
        %s4146 = scalar_select %p4145, %s38, 1
        %s4147 = scalar_lea.vmem %s24, %s4146
        // Predicated region
        $region125: #{pytorch_cnn_forward.1} parent=115 // pred_check
          %p4148 = pneg %p580
        $region126: #{pytorch_cnn_forward.1} parent=115 // pred_check_branch
          %4150 = sbr.rel (%p4148) target = $region128
        $region127: #{pytorch_cnn_forward.1} parent=115 // pred_region
          _
        $region128: #{pytorch_cnn_forward.1} parent=115 // pred_fallthru
          _
      $region116: #{pytorch_cnn_forward.1} parent=5 // pred_fallthru
        _
      %p4151 = scmp.le.s32.totalorder 2, %s33
      // Predicated region
      $region129: #{pytorch_cnn_forward.1} parent=5 // pred_check
        %p4152 = pneg %p4151
      $region130: #{pytorch_cnn_forward.1} parent=5 // pred_check_branch
        %4154 = sbr.rel (%p4152) target = $region132
      $region131: #{pytorch_cnn_forward.1} parent=5 // pred_region
        %s4155 = ssub.s32 %s33, 2
        // Predicated region
        $region133: #{pytorch_cnn_forward.1} parent=131 // pred_check
          %p4156 = pneg %p586
        $region134: #{pytorch_cnn_forward.1} parent=131 // pred_check_branch
          %4158 = sbr.rel (%p4156) target = $region136
        $region135: #{pytorch_cnn_forward.1} parent=131 // pred_region
          %p4159 = scmp.lt.s32.totalorder %s39, 1
          %s4160 = scalar_select %p4159, %s39, 1
          %s4161 = scalar_lea.vmem %s24, %s4160
        $region136: #{pytorch_cnn_forward.1} parent=131 // pred_fallthru
          _
      $region132: #{pytorch_cnn_forward.1} parent=5 // pred_fallthru
        _
    $region6: #{pytorch_cnn_forward.1} parent=1 // loop_footer
      %s37 = sadd.s32 1, %s33
    $region7: #{pytorch_cnn_forward.1} parent=1 // loop_footer_branch
      %32 = sbr.rel target = $region3
    $region8: #{pytorch_cnn_forward.1} parent=1 // loop_exit
      _
    %4162 = vsyncpa [#allocation4], 1
    %s4163 = scalar_lea.sflag [#allocation4], 1
    %4164 = vsyncpa %s4163, 1
    %4165 = vsyncpa [#allocation6], 1

</llo_original>
